<compile_context>
chip_gen: v6e
topology: v6e:2x2x1
jax: 0.10.0
libtpu: 0.0.40
codegen_flags: <defaults>
</compile_context>

<pallas_src>
import functools

import jax
import jax.numpy as jnp
from jax.experimental import pallas as pl
from jax.experimental.pallas import tpu as pltpu


def _attention_kernel(x_ref, mask_ref, wq_ref, wk_ref, wv_ref, wo_ref, bo_ref,
                      o_ref, q_s, k_s, v_s, *, num_heads, block_q, block_k):
    """Grid: (batch, query-tile).

    x_ref    : (1, N, C)   full (padded) sequence for the current batch element
    mask_ref : (1, 1, N)   key padding mask (> 0 -> masked key position)
    wq_ref   : (H, C, D)   per-head Q weight (softmax scale pre-folded)
    wk_ref   : (H, C, D)   per-head K weight
    wv_ref   : (H, C, D)   per-head V weight
    wo_ref   : (H, D, C)   per-head output-projection weight
    bo_ref   : (1, C)      output-projection bias (f32)
    o_ref    : (1, tq, C)  output tile
    q_s      : (H, tq, D)  scratch: current query tile   (compute dtype)
    k_s, v_s : (H, N, D)   scratch: whole-sequence K / V (compute dtype)
    """
    qi = pl.program_id(1)
    n = x_ref.shape[1]
    c = x_ref.shape[2]
    d = c // num_heads
    num_kb = n // block_k
    cdt = k_s.dtype
    f32 = jnp.float32

    # ---- once per batch element: project K and V into head-major scratch.
    # Full-slab stores at a static head index (no D-wide lane-slice stores).
    @pl.when(qi == 0)
    def _():
        x_all = x_ref[0]                                              # (N, C)
        for h in range(num_heads):
            k_s[h] = jnp.dot(x_all, wk_ref[h],
                             preferred_element_type=f32).astype(cdt)
            v_s[h] = jnp.dot(x_all, wv_ref[h],
                             preferred_element_type=f32).astype(cdt)

    # ---- project the current query tile from a row (sublane) slice of x.
    # W_q already carries the softmax scale.
    if block_q == n:
        x_q = x_ref[0]                                                # (tq, C)
    else:
        q_start = pl.multiple_of(qi * block_q, block_q)
        x_q = x_ref[0, pl.ds(q_start, block_q), :]
    for h in range(num_heads):
        q_s[h] = jnp.dot(x_q, wq_ref[h],
                         preferred_element_type=f32).astype(cdt)
    q_t = q_s[...]                                                    # (H, tq, D)

    # ---- additive key-mask bias: one compare+select over (1, 1, N).
    # (Matches torch.where(padding_mask > 0, -1e7, att) except in the
    #  degenerate all-keys-masked row, where both give ~uniform weights.)
    bias = jnp.where(mask_ref[...] > 0, f32(-10000000.0), f32(0.0))   # (1,1,N)

    # ---- online softmax over key blocks (all softmax math in f32).
    m_i = jnp.full((num_heads, block_q, 1), -1e30, f32)
    l_i = jnp.zeros((num_heads, block_q, 1), f32)
    acc = jnp.zeros((num_heads, block_q, d), f32)
    for kb in range(num_kb):                    # static: N / block_k are compile-time
        if num_kb == 1:
            k_blk, v_blk, b_blk = k_s[...], v_s[...], bias
        else:
            ks = kb * block_k
            k_blk = k_s[:, ks:ks + block_k, :]                        # (H, bk, D)
            v_blk = v_s[:, ks:ks + block_k, :]
            b_blk = bias[:, :, ks:ks + block_k]
        s = jnp.einsum('hqd,hkd->hqk', q_t, k_blk,
                       preferred_element_type=f32)                    # (H, tq, bk)
        s = s + b_blk
        m_new = jnp.maximum(m_i, jnp.max(s, axis=-1, keepdims=True))
        alpha = jnp.exp(m_i - m_new)
        e = jnp.exp(s - m_new)                                        # un-normalized probs
        l_i = alpha * l_i + jnp.sum(e, axis=-1, keepdims=True)
        acc = alpha * acc + jnp.einsum('hqk,hkd->hqd', e.astype(cdt), v_blk,
                                       preferred_element_type=f32)
        m_i = m_new

    # ---- deferred softmax normalization: exact divide on the small context.
    ctx = acc / l_i                                                   # (H, tq, D) f32

    # ---- output projection: per-head accumulated matmul (no merge slab).
    y = jnp.zeros((block_q, c), f32)
    for h in range(num_heads):
        y = y + jnp.dot(ctx[h].astype(cdt), wo_ref[h],
                        preferred_element_type=f32)
    y = y + bo_ref[...]
    o_ref[0] = y.astype(o_ref.dtype)


def attention_forward(x, padding_mask, w_qkv, wo, bo, *, num_heads,
                      block_q=None, block_k=None, compute_dtype=None,
                      single_buffer_weights=True):
    """Forward pass of the m3ae Attention module.

    x            : (B, N, C)
    padding_mask : (B, N) or None; values > 0 mask key positions
    w_qkv        : (C, 3C) fused QKV weight, columns [q | k | v] (head-major
                   inside each C slice) = qkv_linear.weight.T
    wo           : (C, C) output projection weight (= fc.weight.T)
    bo           : (1, C) output projection bias
    compute_dtype: dtype of MXU operands / K-V scratch (pass jnp.bfloat16 for
                   the fast path on v5e/v6e/v7x); accumulation is always f32.
    """
    b, n, c = x.shape
    assert c % num_heads == 0
    d = c // num_heads
    scale = float(d) ** (-0.5)
    orig_dtype = x.dtype

    if compute_dtype is None:
        compute_dtype = (jnp.bfloat16
                         if x.dtype in (jnp.dtype(jnp.bfloat16),
                                        jnp.dtype(jnp.float16))
                         else x.dtype)
    cdt = jnp.dtype(compute_dtype)

    def _rup(v, m):
        return -(-v // m) * m

    # ---- tile sizes / padding (keeps (8,128)-aligned tiles for any N) ------
    if block_q is None:
        block_q = 256                       # fills the 256-wide MXU on v6e/v7x
    block_q = min(block_q, _rup(n, 8))
    n_pad = _rup(n, block_q)
    if block_k is None:
        block_k = 512
    block_k = min(block_k, n_pad)
    if n_pad % block_k:
        block_k = block_q                   # block_q always divides n_pad
    num_q = n_pad // block_q

    if padding_mask is None:
        padding_mask = jnp.zeros((b, n), jnp.float32)
    mask = padding_mask.astype(jnp.float32)
    x_c = x.astype(cdt)
    if n_pad != n:
        x_c = jnp.pad(x_c, ((0, 0), (0, n_pad - n), (0, 0)))
        mask = jnp.pad(mask, ((0, 0), (0, n_pad - n)), constant_values=1.0)
    mask3 = mask[:, None, :]                                          # (B, 1, N_pad)

    # ---- host-side weight prep: per-head layout, scale folded into W_q -----
    # (In a real model these would be pre-transformed once at load time.)
    wq = w_qkv[:, :c] * scale
    wk = w_qkv[:, c:2 * c]
    wv = w_qkv[:, 2 * c:]

    def to_heads(w):                        # (C, C) -> (H, C, D)
        return jnp.transpose(w.reshape(c, num_heads, d), (1, 0, 2)).astype(cdt)

    wq_h = to_heads(wq)
    wk_h = to_heads(wk)
    wv_h = to_heads(wv)
    wo_h = wo.reshape(num_heads, d, c).astype(cdt)                    # (H, D, C)
    bo_f = bo.reshape(1, c).astype(jnp.float32)

    kernel = functools.partial(_attention_kernel, num_heads=num_heads,
                               block_q=block_q, block_k=block_k)

    # ---- advisory cost estimate so XLA schedules around the call sensibly --
    flops = b * (2 * n_pad * c * (3 * c)                  # Q/K/V projections
                 + 4 * num_heads * n_pad * n_pad * d      # QK^T + PV
                 + 2 * n_pad * c * c)                     # output projection
    bytes_accessed = int(
        cdt.itemsize * (x_c.size + wq_h.size + wk_h.size + wv_h.size + wo_h.size)
        + 4 * (mask3.size + bo_f.size)
        + jnp.dtype(orig_dtype).itemsize * b * n_pad * c)
    cost = pl.CostEstimate(flops=int(flops),
                           transcendentals=int(2 * b * num_heads * n_pad * n_pad),
                           bytes_accessed=bytes_accessed)

    # ---- VMEM budget (lane padding of the (., D) head slabs included) ------
    lane = lambda v: _rup(v, 128)
    sub = lambda v: _rup(max(v, 1), 8)
    cb = cdt.itemsize
    ob = jnp.dtype(orig_dtype).itemsize
    wbuf = 1 if single_buffer_weights else 2
    vmem_est = (
        cb * 2 * sub(n_pad) * lane(c)                                    # x block (x2 buffers)
        + 4 * 2 * sub(1) * lane(n_pad)                                   # mask block
        + cb * wbuf * num_heads * (3 * sub(c) * lane(d) + sub(d) * lane(c))  # W_q/k/v/o
        + 4 * wbuf * sub(1) * lane(c)                                    # bias
        + ob * 2 * sub(block_q) * lane(c)                                # out tile (x2 buffers)
        + cb * num_heads * (2 * sub(n_pad) + sub(block_q)) * lane(d)     # K/V/Q scratch
        + 4 * num_heads * sub(block_q) * (3 * lane(block_k) + 2 * lane(d))  # f32 temporaries
    )
    try:
        vmem_cap = int(pltpu.get_tpu_info().vmem_capacity_bytes)
    except Exception:                       # conservative default (v7x: 64 MiB)
        vmem_cap = 64 * 1024 * 1024
    vmem_limit = int(min(int(vmem_cap * 0.85),
                         max(32 * 1024 * 1024, 2 * vmem_est)))

    out_shape = jax.ShapeDtypeStruct((b, n_pad, c), orig_dtype)

    def _build(single_buffer):
        def _wspec(shape):
            ndim = len(shape)
            index_map = lambda bi, qi: (0,) * ndim
            if single_buffer:
                # constant-index operands: no point double-buffering them.
                return pl.BlockSpec(shape, index_map,
                                    pipeline_mode=pl.Buffered(1))
            return pl.BlockSpec(shape, index_map)

        grid_spec = pltpu.PrefetchScalarGridSpec(
            num_scalar_prefetch=0,
            grid=(b, num_q),
            in_specs=[
                pl.BlockSpec((1, n_pad, c), lambda bi, qi: (bi, 0, 0)),  # x
                pl.BlockSpec((1, 1, n_pad), lambda bi, qi: (bi, 0, 0)),  # padding mask
                _wspec((num_heads, c, d)),                               # W_q (scaled)
                _wspec((num_heads, c, d)),                               # W_k
                _wspec((num_heads, c, d)),                               # W_v
                _wspec((num_heads, d, c)),                               # W_o
                _wspec((1, c)),                                          # b_o
            ],
            out_specs=pl.BlockSpec((1, block_q, c), lambda bi, qi: (bi, qi, 0)),
            scratch_shapes=[
                pltpu.VMEM((num_heads, block_q, d), cdt),   # current Q tile
                pltpu.VMEM((num_heads, n_pad, d), cdt),     # K (whole sequence)
                pltpu.VMEM((num_heads, n_pad, d), cdt),     # V (whole sequence)
            ],
        )
        return pl.pallas_call(
            kernel,
            out_shape=out_shape,
            grid_spec=grid_spec,
            compiler_params=pltpu.CompilerParams(
                dimension_semantics=("parallel", "arbitrary"),
                vmem_limit_bytes=vmem_limit,
            ),
            cost_estimate=cost,
        )

    args = (x_c, mask3, wq_h, wk_h, wv_h, wo_h, bo_f)
    if single_buffer_weights:
        try:
            out = _build(True)(*args)
        except Exception:
            # pl.Buffered(1) not supported by this JAX/Mosaic build; fall back
            # to the default double-buffered pipeline (same numerics).
            out = _build(False)(*args)
    else:
        out = _build(False)(*args)
    return out[:, :n, :]


def reference_forward(x, padding_mask, w_qkv, wo, bo, *, num_heads):
    """Pure-JAX reference mirroring the PyTorch forward (deterministic, drop=0)."""
    b, n, c = x.shape
    d = c // num_heads
    scale = d ** (-0.5)
    qkv = x @ w_qkv                                            # (B, N, 3C)
    qkv = qkv.reshape(b, n, 3, num_heads, d).transpose(2, 0, 3, 1, 4)
    q, k, v = qkv[0], qkv[1], qkv[2]                           # (B, H, N, D)
    att = jnp.einsum("bhqd,bhkd->bhqk", q, k) * scale
    pm = padding_mask[:, None, None, :]
    att = jnp.where(pm > 0, -10000000.0, att)
    att = jax.nn.softmax(att, axis=-1)
    ctx = jnp.einsum("bhqk,bhkd->bhqd", att, v)
    ctx = ctx.transpose(0, 2, 1, 3).reshape(b, n, c)
    return ctx @ wo + bo


def xavier_uniform(key, shape, dtype=jnp.float32):
    fan_in, fan_out = shape[0], shape[1]
    limit = (6.0 / (fan_in + fan_out)) ** 0.5
    return jax.random.uniform(key, shape, dtype, minval=-limit, maxval=limit)


if __name__ == "__main__":
    # Small shapes consistent with the module: batch=2, seq=8, dim=32, heads=4.
    B, N, C, H = 2, 8, 32, 4

    key = jax.random.PRNGKey(0)
    kx, kqkv, kfc, kb_, km = jax.random.split(key, 5)

    x = jax.random.normal(kx, (B, N, C), dtype=jnp.float32)

    # qkv_linear: nn.Linear(dim, 3*dim, bias=False); stored fused as (C, 3C)
    # with columns [q | k | v] so qkv.view(b, n, 3, H, D) semantics match.
    w_qkv = xavier_uniform(kqkv, (C, 3 * C))

    # fc: nn.Linear(dim, dim) with bias.
    wo = xavier_uniform(kfc, (C, C))
    bo = jax.random.normal(kb_, (1, C), dtype=jnp.float32) * 0.02

    # Padding mask: values > 0 indicate masked key positions (as in the module).
    padding_mask = (jax.random.uniform(km, (B, N)) > 0.75).astype(jnp.float32)

    ref = reference_forward(x, padding_mask, w_qkv, wo, bo, num_heads=H)

    # Exact-parity path (f32 MXU operands).
    out = attention_forward(x, padding_mask, w_qkv, wo, bo, num_heads=H,
                            compute_dtype=jnp.float32)
    out = jax.block_until_ready(out)
    assert out.shape == (B, N, C)
    assert jnp.allclose(out, ref, atol=1e-4, rtol=1e-4), "f32 mismatch vs reference"

    # bf16 fast path (per perf review: bf16 MXU operands, f32 accumulation).
    out_bf16 = attention_forward(x, padding_mask, w_qkv, wo, bo, num_heads=H,
                                 compute_dtype=jnp.bfloat16)
    out_bf16 = jax.block_until_ready(out_bf16)
    assert jnp.allclose(out_bf16, ref, atol=5e-2, rtol=5e-2), "bf16 mismatch vs reference"

    print("KERNEL_OK")
</pallas_src>

<mosaic_0001>
module attributes {stable_mosaic.version = 11 : i64} {
  func.func @_attention_kernel(%arg0: i32, %arg1: i32, %arg2: memref<1x8x32xf32, #tpu.memory_space<vmem>>, %arg3: memref<1x1x8xf32, #tpu.memory_space<vmem>>, %arg4: memref<4x32x8xf32, #tpu.memory_space<vmem>>, %arg5: memref<4x32x8xf32, #tpu.memory_space<vmem>>, %arg6: memref<4x32x8xf32, #tpu.memory_space<vmem>>, %arg7: memref<4x8x32xf32, #tpu.memory_space<vmem>>, %arg8: memref<1x32xf32, #tpu.memory_space<vmem>>, %arg9: memref<1x8x32xf32, #tpu.memory_space<vmem>>, %arg10: memref<4x8x8xf32, #tpu.memory_space<vmem>>, %arg11: memref<4x8x8xf32, #tpu.memory_space<vmem>>, %arg12: memref<4x8x8xf32, #tpu.memory_space<vmem>>) attributes {dimension_semantics = [#tpu.dimension_semantics<parallel>, #tpu.dimension_semantics<arbitrary>], iteration_bounds = array<i64: 2, 1>, scalar_prefetch = 0 : i64, scratch_operands = 3 : i64, tpu.core_type = #tpu.core_type<tc>, window_params = [{transform_indices = @transform_0, window_bounds = array<i64: 1, 8, 32>}, {transform_indices = @transform_1, window_bounds = array<i64: 1, 1, 8>}, {pipeline_mode = #tpu.pipeline_mode<synchronous>, transform_indices = @transform_2, window_bounds = array<i64: 4, 32, 8>}, {pipeline_mode = #tpu.pipeline_mode<synchronous>, transform_indices = @transform_3, window_bounds = array<i64: 4, 32, 8>}, {pipeline_mode = #tpu.pipeline_mode<synchronous>, transform_indices = @transform_4, window_bounds = array<i64: 4, 32, 8>}, {pipeline_mode = #tpu.pipeline_mode<synchronous>, transform_indices = @transform_5, window_bounds = array<i64: 4, 8, 32>}, {pipeline_mode = #tpu.pipeline_mode<synchronous>, transform_indices = @transform_6, window_bounds = array<i64: 1, 32>}, {transform_indices = @transform_7, window_bounds = array<i64: 1, 8, 32>}]} {
    %c0_i32 = arith.constant 0 : i32
    %0 = arith.cmpi eq, %arg1, %c0_i32 : i32
    %1 = arith.extui %0 : i1 to i32
    %c0_i32_0 = arith.constant 0 : i32
    %2 = arith.cmpi ne, %1, %c0_i32_0 : i32
    scf.if %2 {
      %c0_71 = arith.constant 0 : index
      %c0_72 = arith.constant 0 : index
      %c0_73 = arith.constant 0 : index
      %93 = vector.load %arg2[%c0_71, %c0_72, %c0_73] : memref<1x8x32xf32, #tpu.memory_space<vmem>>, vector<1x8x32xf32>
      %94 = vector.shape_cast %93 : vector<1x8x32xf32> to vector<8x32xf32>
      %c0_74 = arith.constant 0 : index
      %c0_75 = arith.constant 0 : index
      %c0_76 = arith.constant 0 : index
      %95 = vector.load %arg5[%c0_74, %c0_75, %c0_76] : memref<4x32x8xf32, #tpu.memory_space<vmem>>, vector<1x32x8xf32>
      %96 = vector.shape_cast %95 : vector<1x32x8xf32> to vector<32x8xf32>
      %cst_77 = arith.constant dense<0.000000e+00> : vector<8x8xf32>
      %97 = tpu.matmul %94, %96, %cst_77 {dimension_numbers = #tpu.dot_dimension_numbers<[1], [0], [0], [1], [0, 0, 1, 1], [], []>} : vector<8x32xf32>, vector<32x8xf32>, vector<8x8xf32> -> vector<8x8xf32>
      %c0_78 = arith.constant 0 : index
      %c0_79 = arith.constant 0 : index
      %c0_80 = arith.constant 0 : index
      %98 = vector.load %arg11[%c0_78, %c0_79, %c0_80] : memref<4x8x8xf32, #tpu.memory_space<vmem>>, vector<1x8x8xf32>
      %99 = vector.shape_cast %98 : vector<1x8x8xf32> to vector<8x8xf32>
      %100 = vector.shape_cast %97 : vector<8x8xf32> to vector<1x8x8xf32>
      tpu.vector_store %arg11[%c0_78, %c0_79, %c0_80], %100 {strides = array<i32>} : memref<4x8x8xf32, #tpu.memory_space<vmem>>, vector<1x8x8xf32>,
      %c0_81 = arith.constant 0 : index
      %c0_82 = arith.constant 0 : index
      %c0_83 = arith.constant 0 : index
      %101 = vector.load %arg6[%c0_81, %c0_82, %c0_83] : memref<4x32x8xf32, #tpu.memory_space<vmem>>, vector<1x32x8xf32>
      %102 = vector.shape_cast %101 : vector<1x32x8xf32> to vector<32x8xf32>
      %cst_84 = arith.constant dense<0.000000e+00> : vector<8x8xf32>
      %103 = tpu.matmul %94, %102, %cst_84 {dimension_numbers = #tpu.dot_dimension_numbers<[1], [0], [0], [1], [0, 0, 1, 1], [], []>} : vector<8x32xf32>, vector<32x8xf32>, vector<8x8xf32> -> vector<8x8xf32>
      %c0_85 = arith.constant 0 : index
      %c0_86 = arith.constant 0 : index
      %c0_87 = arith.constant 0 : index
      %104 = vector.load %arg12[%c0_85, %c0_86, %c0_87] : memref<4x8x8xf32, #tpu.memory_space<vmem>>, vector<1x8x8xf32>
      %105 = vector.shape_cast %104 : vector<1x8x8xf32> to vector<8x8xf32>
      %106 = vector.shape_cast %103 : vector<8x8xf32> to vector<1x8x8xf32>
      tpu.vector_store %arg12[%c0_85, %c0_86, %c0_87], %106 {strides = array<i32>} : memref<4x8x8xf32, #tpu.memory_space<vmem>>, vector<1x8x8xf32>,
      %c1_88 = arith.constant 1 : index
      %c0_89 = arith.constant 0 : index
      %c0_90 = arith.constant 0 : index
      %107 = vector.load %arg5[%c1_88, %c0_89, %c0_90] : memref<4x32x8xf32, #tpu.memory_space<vmem>>, vector<1x32x8xf32>
      %108 = vector.shape_cast %107 : vector<1x32x8xf32> to vector<32x8xf32>
      %cst_91 = arith.constant dense<0.000000e+00> : vector<8x8xf32>
      %109 = tpu.matmul %94, %108, %cst_91 {dimension_numbers = #tpu.dot_dimension_numbers<[1], [0], [0], [1], [0, 0, 1, 1], [], []>} : vector<8x32xf32>, vector<32x8xf32>, vector<8x8xf32> -> vector<8x8xf32>
      %c1_92 = arith.constant 1 : index
      %c0_93 = arith.constant 0 : index
      %c0_94 = arith.constant 0 : index
      %110 = vector.load %arg11[%c1_92, %c0_93, %c0_94] : memref<4x8x8xf32, #tpu.memory_space<vmem>>, vector<1x8x8xf32>
      %111 = vector.shape_cast %110 : vector<1x8x8xf32> to vector<8x8xf32>
      %112 = vector.shape_cast %109 : vector<8x8xf32> to vector<1x8x8xf32>
      tpu.vector_store %arg11[%c1_92, %c0_93, %c0_94], %112 {strides = array<i32>} : memref<4x8x8xf32, #tpu.memory_space<vmem>>, vector<1x8x8xf32>,
      %c1_95 = arith.constant 1 : index
      %c0_96 = arith.constant 0 : index
      %c0_97 = arith.constant 0 : index
      %113 = vector.load %arg6[%c1_95, %c0_96, %c0_97] : memref<4x32x8xf32, #tpu.memory_space<vmem>>, vector<1x32x8xf32>
      %114 = vector.shape_cast %113 : vector<1x32x8xf32> to vector<32x8xf32>
      %cst_98 = arith.constant dense<0.000000e+00> : vector<8x8xf32>
      %115 = tpu.matmul %94, %114, %cst_98 {dimension_numbers = #tpu.dot_dimension_numbers<[1], [0], [0], [1], [0, 0, 1, 1], [], []>} : vector<8x32xf32>, vector<32x8xf32>, vector<8x8xf32> -> vector<8x8xf32>
      %c1_99 = arith.constant 1 : index
      %c0_100 = arith.constant 0 : index
      %c0_101 = arith.constant 0 : index
      %116 = vector.load %arg12[%c1_99, %c0_100, %c0_101] : memref<4x8x8xf32, #tpu.memory_space<vmem>>, vector<1x8x8xf32>
      %117 = vector.shape_cast %116 : vector<1x8x8xf32> to vector<8x8xf32>
      %118 = vector.shape_cast %115 : vector<8x8xf32> to vector<1x8x8xf32>
      tpu.vector_store %arg12[%c1_99, %c0_100, %c0_101], %118 {strides = array<i32>} : memref<4x8x8xf32, #tpu.memory_space<vmem>>, vector<1x8x8xf32>,
      %c2_102 = arith.constant 2 : index
      %c0_103 = arith.constant 0 : index
      %c0_104 = arith.constant 0 : index
      %119 = vector.load %arg5[%c2_102, %c0_103, %c0_104] : memref<4x32x8xf32, #tpu.memory_space<vmem>>, vector<1x32x8xf32>
      %120 = vector.shape_cast %119 : vector<1x32x8xf32> to vector<32x8xf32>
      %cst_105 = arith.constant dense<0.000000e+00> : vector<8x8xf32>
      %121 = tpu.matmul %94, %120, %cst_105 {dimension_numbers = #tpu.dot_dimension_numbers<[1], [0], [0], [1], [0, 0, 1, 1], [], []>} : vector<8x32xf32>, vector<32x8xf32>, vector<8x8xf32> -> vector<8x8xf32>
      %c2_106 = arith.constant 2 : index
      %c0_107 = arith.constant 0 : index
      %c0_108 = arith.constant 0 : index
      %122 = vector.load %arg11[%c2_106, %c0_107, %c0_108] : memref<4x8x8xf32, #tpu.memory_space<vmem>>, vector<1x8x8xf32>
      %123 = vector.shape_cast %122 : vector<1x8x8xf32> to vector<8x8xf32>
      %124 = vector.shape_cast %121 : vector<8x8xf32> to vector<1x8x8xf32>
      tpu.vector_store %arg11[%c2_106, %c0_107, %c0_108], %124 {strides = array<i32>} : memref<4x8x8xf32, #tpu.memory_space<vmem>>, vector<1x8x8xf32>,
      %c2_109 = arith.constant 2 : index
      %c0_110 = arith.constant 0 : index
      %c0_111 = arith.constant 0 : index
      %125 = vector.load %arg6[%c2_109, %c0_110, %c0_111] : memref<4x32x8xf32, #tpu.memory_space<vmem>>, vector<1x32x8xf32>
      %126 = vector.shape_cast %125 : vector<1x32x8xf32> to vector<32x8xf32>
      %cst_112 = arith.constant dense<0.000000e+00> : vector<8x8xf32>
      %127 = tpu.matmul %94, %126, %cst_112 {dimension_numbers = #tpu.dot_dimension_numbers<[1], [0], [0], [1], [0, 0, 1, 1], [], []>} : vector<8x32xf32>, vector<32x8xf32>, vector<8x8xf32> -> vector<8x8xf32>
      %c2_113 = arith.constant 2 : index
      %c0_114 = arith.constant 0 : index
      %c0_115 = arith.constant 0 : index
      %128 = vector.load %arg12[%c2_113, %c0_114, %c0_115] : memref<4x8x8xf32, #tpu.memory_space<vmem>>, vector<1x8x8xf32>
      %129 = vector.shape_cast %128 : vector<1x8x8xf32> to vector<8x8xf32>
      %130 = vector.shape_cast %127 : vector<8x8xf32> to vector<1x8x8xf32>
      tpu.vector_store %arg12[%c2_113, %c0_114, %c0_115], %130 {strides = array<i32>} : memref<4x8x8xf32, #tpu.memory_space<vmem>>, vector<1x8x8xf32>,
      %c3_116 = arith.constant 3 : index
      %c0_117 = arith.constant 0 : index
      %c0_118 = arith.constant 0 : index
      %131 = vector.load %arg5[%c3_116, %c0_117, %c0_118] : memref<4x32x8xf32, #tpu.memory_space<vmem>>, vector<1x32x8xf32>
      %132 = vector.shape_cast %131 : vector<1x32x8xf32> to vector<32x8xf32>
      %cst_119 = arith.constant dense<0.000000e+00> : vector<8x8xf32>
      %133 = tpu.matmul %94, %132, %cst_119 {dimension_numbers = #tpu.dot_dimension_numbers<[1], [0], [0], [1], [0, 0, 1, 1], [], []>} : vector<8x32xf32>, vector<32x8xf32>, vector<8x8xf32> -> vector<8x8xf32>
      %c3_120 = arith.constant 3 : index
      %c0_121 = arith.constant 0 : index
      %c0_122 = arith.constant 0 : index
      %134 = vector.load %arg11[%c3_120, %c0_121, %c0_122] : memref<4x8x8xf32, #tpu.memory_space<vmem>>, vector<1x8x8xf32>
      %135 = vector.shape_cast %134 : vector<1x8x8xf32> to vector<8x8xf32>
      %136 = vector.shape_cast %133 : vector<8x8xf32> to vector<1x8x8xf32>
      tpu.vector_store %arg11[%c3_120, %c0_121, %c0_122], %136 {strides = array<i32>} : memref<4x8x8xf32, #tpu.memory_space<vmem>>, vector<1x8x8xf32>,
      %c3_123 = arith.constant 3 : index
      %c0_124 = arith.constant 0 : index
      %c0_125 = arith.constant 0 : index
      %137 = vector.load %arg6[%c3_123, %c0_124, %c0_125] : memref<4x32x8xf32, #tpu.memory_space<vmem>>, vector<1x32x8xf32>
      %138 = vector.shape_cast %137 : vector<1x32x8xf32> to vector<32x8xf32>
      %cst_126 = arith.constant dense<0.000000e+00> : vector<8x8xf32>
      %139 = tpu.matmul %94, %138, %cst_126 {dimension_numbers = #tpu.dot_dimension_numbers<[1], [0], [0], [1], [0, 0, 1, 1], [], []>} : vector<8x32xf32>, vector<32x8xf32>, vector<8x8xf32> -> vector<8x8xf32>
      %c3_127 = arith.constant 3 : index
      %c0_128 = arith.constant 0 : index
      %c0_129 = arith.constant 0 : index
      %140 = vector.load %arg12[%c3_127, %c0_128, %c0_129] : memref<4x8x8xf32, #tpu.memory_space<vmem>>, vector<1x8x8xf32>
      %141 = vector.shape_cast %140 : vector<1x8x8xf32> to vector<8x8xf32>
      %142 = vector.shape_cast %139 : vector<8x8xf32> to vector<1x8x8xf32>
      tpu.vector_store %arg12[%c3_127, %c0_128, %c0_129], %142 {strides = array<i32>} : memref<4x8x8xf32, #tpu.memory_space<vmem>>, vector<1x8x8xf32>,
    } else {
    }
    %c0 = arith.constant 0 : index
    %c0_1 = arith.constant 0 : index
    %c0_2 = arith.constant 0 : index
    %3 = vector.load %arg2[%c0, %c0_1, %c0_2] : memref<1x8x32xf32, #tpu.memory_space<vmem>>, vector<1x8x32xf32>
    %4 = vector.shape_cast %3 : vector<1x8x32xf32> to vector<8x32xf32>
    %c0_3 = arith.constant 0 : index
    %c0_4 = arith.constant 0 : index
    %c0_5 = arith.constant 0 : index
    %5 = vector.load %arg4[%c0_3, %c0_4, %c0_5] : memref<4x32x8xf32, #tpu.memory_space<vmem>>, vector<1x32x8xf32>
    %6 = vector.shape_cast %5 : vector<1x32x8xf32> to vector<32x8xf32>
    %cst = arith.constant dense<0.000000e+00> : vector<8x8xf32>
    %7 = tpu.matmul %4, %6, %cst {dimension_numbers = #tpu.dot_dimension_numbers<[1], [0], [0], [1], [0, 0, 1, 1], [], []>} : vector<8x32xf32>, vector<32x8xf32>, vector<8x8xf32> -> vector<8x8xf32>
    %c0_6 = arith.constant 0 : index
    %c0_7 = arith.constant 0 : index
    %c0_8 = arith.constant 0 : index
    %8 = vector.load %arg10[%c0_6, %c0_7, %c0_8] : memref<4x8x8xf32, #tpu.memory_space<vmem>>, vector<1x8x8xf32>
    %9 = vector.shape_cast %8 : vector<1x8x8xf32> to vector<8x8xf32>
    %10 = vector.shape_cast %7 : vector<8x8xf32> to vector<1x8x8xf32>
    tpu.vector_store %arg10[%c0_6, %c0_7, %c0_8], %10 {strides = array<i32>} : memref<4x8x8xf32, #tpu.memory_space<vmem>>, vector<1x8x8xf32>,
    %c1 = arith.constant 1 : index
    %c0_9 = arith.constant 0 : index
    %c0_10 = arith.constant 0 : index
    %11 = vector.load %arg4[%c1, %c0_9, %c0_10] : memref<4x32x8xf32, #tpu.memory_space<vmem>>, vector<1x32x8xf32>
    %12 = vector.shape_cast %11 : vector<1x32x8xf32> to vector<32x8xf32>
    %cst_11 = arith.constant dense<0.000000e+00> : vector<8x8xf32>
    %13 = tpu.matmul %4, %12, %cst_11 {dimension_numbers = #tpu.dot_dimension_numbers<[1], [0], [0], [1], [0, 0, 1, 1], [], []>} : vector<8x32xf32>, vector<32x8xf32>, vector<8x8xf32> -> vector<8x8xf32>
    %c1_12 = arith.constant 1 : index
    %c0_13 = arith.constant 0 : index
    %c0_14 = arith.constant 0 : index
    %14 = vector.load %arg10[%c1_12, %c0_13, %c0_14] : memref<4x8x8xf32, #tpu.memory_space<vmem>>, vector<1x8x8xf32>
    %15 = vector.shape_cast %14 : vector<1x8x8xf32> to vector<8x8xf32>
    %16 = vector.shape_cast %13 : vector<8x8xf32> to vector<1x8x8xf32>
    tpu.vector_store %arg10[%c1_12, %c0_13, %c0_14], %16 {strides = array<i32>} : memref<4x8x8xf32, #tpu.memory_space<vmem>>, vector<1x8x8xf32>,
    %c2 = arith.constant 2 : index
    %c0_15 = arith.constant 0 : index
    %c0_16 = arith.constant 0 : index
    %17 = vector.load %arg4[%c2, %c0_15, %c0_16] : memref<4x32x8xf32, #tpu.memory_space<vmem>>, vector<1x32x8xf32>
    %18 = vector.shape_cast %17 : vector<1x32x8xf32> to vector<32x8xf32>
    %cst_17 = arith.constant dense<0.000000e+00> : vector<8x8xf32>
    %19 = tpu.matmul %4, %18, %cst_17 {dimension_numbers = #tpu.dot_dimension_numbers<[1], [0], [0], [1], [0, 0, 1, 1], [], []>} : vector<8x32xf32>, vector<32x8xf32>, vector<8x8xf32> -> vector<8x8xf32>
    %c2_18 = arith.constant 2 : index
    %c0_19 = arith.constant 0 : index
    %c0_20 = arith.constant 0 : index
    %20 = vector.load %arg10[%c2_18, %c0_19, %c0_20] : memref<4x8x8xf32, #tpu.memory_space<vmem>>, vector<1x8x8xf32>
    %21 = vector.shape_cast %20 : vector<1x8x8xf32> to vector<8x8xf32>
    %22 = vector.shape_cast %19 : vector<8x8xf32> to vector<1x8x8xf32>
    tpu.vector_store %arg10[%c2_18, %c0_19, %c0_20], %22 {strides = array<i32>} : memref<4x8x8xf32, #tpu.memory_space<vmem>>, vector<1x8x8xf32>,
    %c3 = arith.constant 3 : index
    %c0_21 = arith.constant 0 : index
    %c0_22 = arith.constant 0 : index
    %23 = vector.load %arg4[%c3, %c0_21, %c0_22] : memref<4x32x8xf32, #tpu.memory_space<vmem>>, vector<1x32x8xf32>
    %24 = vector.shape_cast %23 : vector<1x32x8xf32> to vector<32x8xf32>
    %cst_23 = arith.constant dense<0.000000e+00> : vector<8x8xf32>
    %25 = tpu.matmul %4, %24, %cst_23 {dimension_numbers = #tpu.dot_dimension_numbers<[1], [0], [0], [1], [0, 0, 1, 1], [], []>} : vector<8x32xf32>, vector<32x8xf32>, vector<8x8xf32> -> vector<8x8xf32>
    %c3_24 = arith.constant 3 : index
    %c0_25 = arith.constant 0 : index
    %c0_26 = arith.constant 0 : index
    %26 = vector.load %arg10[%c3_24, %c0_25, %c0_26] : memref<4x8x8xf32, #tpu.memory_space<vmem>>, vector<1x8x8xf32>
    %27 = vector.shape_cast %26 : vector<1x8x8xf32> to vector<8x8xf32>
    %28 = vector.shape_cast %25 : vector<8x8xf32> to vector<1x8x8xf32>
    tpu.vector_store %arg10[%c3_24, %c0_25, %c0_26], %28 {strides = array<i32>} : memref<4x8x8xf32, #tpu.memory_space<vmem>>, vector<1x8x8xf32>,
    %c0_27 = arith.constant 0 : index
    %c0_28 = arith.constant 0 : index
    %c0_29 = arith.constant 0 : index
    %29 = vector.load %arg10[%c0_27, %c0_28, %c0_29] : memref<4x8x8xf32, #tpu.memory_space<vmem>>, vector<4x8x8xf32>
    %c0_30 = arith.constant 0 : index
    %c0_31 = arith.constant 0 : index
    %c0_32 = arith.constant 0 : index
    %30 = vector.load %arg3[%c0_30, %c0_31, %c0_32] : memref<1x1x8xf32, #tpu.memory_space<vmem>>, vector<1x1x8xf32>
    %cst_33 = arith.constant 0.000000e+00 : f32
    %31 = vector.broadcast %cst_33 : f32 to vector<1x1x8xf32>
    %32 = arith.cmpf ogt, %30, %31 : vector<1x1x8xf32>
    %cst_34 = arith.constant -1.000000e+07 : f32
    %cst_35 = arith.constant 0.000000e+00 : f32
    %33 = vector.broadcast %cst_34 : f32 to vector<1x1x8xf32>
    %34 = vector.broadcast %cst_35 : f32 to vector<1x1x8xf32>
    %35 = arith.select %32, %33, %34 : vector<1x1x8xi1>, vector<1x1x8xf32>
    %cst_36 = arith.constant -1.000000e+30 : f32
    %36 = vector.broadcast %cst_36 : f32 to vector<4x8x1xf32>
    %cst_37 = arith.constant 0.000000e+00 : f32
    %37 = vector.broadcast %cst_37 : f32 to vector<4x8x1xf32>
    %cst_38 = arith.constant 0.000000e+00 : f32
    %38 = vector.broadcast %cst_38 : f32 to vector<4x8x8xf32>
    %c0_39 = arith.constant 0 : index
    %c0_40 = arith.constant 0 : index
    %c0_41 = arith.constant 0 : index
    %39 = vector.load %arg11[%c0_39, %c0_40, %c0_41] : memref<4x8x8xf32, #tpu.memory_space<vmem>>, vector<4x8x8xf32>
    %c0_42 = arith.constant 0 : index
    %c0_43 = arith.constant 0 : index
    %c0_44 = arith.constant 0 : index
    %40 = vector.load %arg12[%c0_42, %c0_43, %c0_44] : memref<4x8x8xf32, #tpu.memory_space<vmem>>, vector<4x8x8xf32>
    "tpu.trace_start"() <{level = 10 : i32, message = "hqd,hkd->hqk"}> : () -> ()
    %cst_45 = arith.constant dense<0.000000e+00> : vector<4x8x8xf32>
    %41 = tpu.matmul %29, %39, %cst_45 {dimension_numbers = #tpu.dot_dimension_numbers<[2], [2], [1], [1], [0, 0, 0, 1, 1, 1], [0], [0]>} : vector<4x8x8xf32>, vector<4x8x8xf32>, vector<4x8x8xf32> -> vector<4x8x8xf32>
    "tpu.trace_stop"() : () -> ()
    %42 = vector.broadcast %35 : vector<1x1x8xf32> to vector<4x8x8xf32>
    %43 = arith.addf %41, %42 : vector<4x8x8xf32>
    %cst_46 = arith.constant dense<0xFF800000> : vector<4x8xf32>
    %44 = vector.multi_reduction <maximumf>, %43, %cst_46 [2] : vector<4x8x8xf32> to vector<4x8xf32>
    %45 = vector.shape_cast %44 : vector<4x8xf32> to vector<4x8x1xf32>
    %46 = arith.maximumf %36, %45 : vector<4x8x1xf32>
    %47 = arith.subf %36, %46 : vector<4x8x1xf32>
    %48 = math.exp %47 : vector<4x8x1xf32>
    %49 = vector.broadcast %46 : vector<4x8x1xf32> to vector<4x8x8xf32>
    %50 = arith.subf %43, %49 : vector<4x8x8xf32>
    %51 = math.exp %50 : vector<4x8x8xf32>
    %52 = arith.mulf %48, %37 : vector<4x8x1xf32>
    %cst_47 = arith.constant dense<0.000000e+00> : vector<4x8xf32>
    %53 = vector.multi_reduction <add>, %51, %cst_47 [2] : vector<4x8x8xf32> to vector<4x8xf32>
    %54 = vector.shape_cast %53 : vector<4x8xf32> to vector<4x8x1xf32>
    %55 = arith.addf %52, %54 : vector<4x8x1xf32>
    %56 = vector.broadcast %48 : vector<4x8x1xf32> to vector<4x8x8xf32>
    %57 = arith.mulf %56, %38 : vector<4x8x8xf32>
    "tpu.trace_start"() <{level = 10 : i32, message = "hqk,hkd->hqd"}> : () -> ()
    %cst_48 = arith.constant dense<0.000000e+00> : vector<4x8x8xf32>
    %58 = tpu.matmul %51, %40, %cst_48 {dimension_numbers = #tpu.dot_dimension_numbers<[2], [1], [1], [2], [0, 0, 0, 1, 1, 2], [0], [0]>} : vector<4x8x8xf32>, vector<4x8x8xf32>, vector<4x8x8xf32> -> vector<4x8x8xf32>
    "tpu.trace_stop"() : () -> ()
    %59 = arith.addf %57, %58 : vector<4x8x8xf32>
    %60 = vector.broadcast %55 : vector<4x8x1xf32> to vector<4x8x8xf32>
    %61 = arith.divf %59, %60 : vector<4x8x8xf32>
    %cst_49 = arith.constant 0.000000e+00 : f32
    %62 = vector.broadcast %cst_49 : f32 to vector<8x32xf32>
    %63 = vector.extract_strided_slice %61 {offsets = [0, 0, 0], sizes = [1, 8, 8], strides = [1, 1, 1]} : vector<4x8x8xf32> to vector<1x8x8xf32>
    %64 = vector.shape_cast %63 : vector<1x8x8xf32> to vector<8x8xf32>
    %c0_50 = arith.constant 0 : index
    %c0_51 = arith.constant 0 : index
    %c0_52 = arith.constant 0 : index
    %65 = vector.load %arg7[%c0_50, %c0_51, %c0_52] : memref<4x8x32xf32, #tpu.memory_space<vmem>>, vector<1x8x32xf32>
    %66 = vector.shape_cast %65 : vector<1x8x32xf32> to vector<8x32xf32>
    %cst_53 = arith.constant dense<0.000000e+00> : vector<8x32xf32>
    %67 = tpu.matmul %64, %66, %cst_53 {dimension_numbers = #tpu.dot_dimension_numbers<[1], [0], [0], [1], [0, 0, 1, 1], [], []>} : vector<8x8xf32>, vector<8x32xf32>, vector<8x32xf32> -> vector<8x32xf32>
    %68 = arith.addf %62, %67 : vector<8x32xf32>
    %69 = vector.extract_strided_slice %61 {offsets = [1, 0, 0], sizes = [1, 8, 8], strides = [1, 1, 1]} : vector<4x8x8xf32> to vector<1x8x8xf32>
    %70 = vector.shape_cast %69 : vector<1x8x8xf32> to vector<8x8xf32>
    %c1_54 = arith.constant 1 : index
    %c0_55 = arith.constant 0 : index
    %c0_56 = arith.constant 0 : index
    %71 = vector.load %arg7[%c1_54, %c0_55, %c0_56] : memref<4x8x32xf32, #tpu.memory_space<vmem>>, vector<1x8x32xf32>
    %72 = vector.shape_cast %71 : vector<1x8x32xf32> to vector<8x32xf32>
    %cst_57 = arith.constant dense<0.000000e+00> : vector<8x32xf32>
    %73 = tpu.matmul %70, %72, %cst_57 {dimension_numbers = #tpu.dot_dimension_numbers<[1], [0], [0], [1], [0, 0, 1, 1], [], []>} : vector<8x8xf32>, vector<8x32xf32>, vector<8x32xf32> -> vector<8x32xf32>
    %74 = arith.addf %68, %73 : vector<8x32xf32>
    %75 = vector.extract_strided_slice %61 {offsets = [2, 0, 0], sizes = [1, 8, 8], strides = [1, 1, 1]} : vector<4x8x8xf32> to vector<1x8x8xf32>
    %76 = vector.shape_cast %75 : vector<1x8x8xf32> to vector<8x8xf32>
    %c2_58 = arith.constant 2 : index
    %c0_59 = arith.constant 0 : index
    %c0_60 = arith.constant 0 : index
    %77 = vector.load %arg7[%c2_58, %c0_59, %c0_60] : memref<4x8x32xf32, #tpu.memory_space<vmem>>, vector<1x8x32xf32>
    %78 = vector.shape_cast %77 : vector<1x8x32xf32> to vector<8x32xf32>
    %cst_61 = arith.constant dense<0.000000e+00> : vector<8x32xf32>
    %79 = tpu.matmul %76, %78, %cst_61 {dimension_numbers = #tpu.dot_dimension_numbers<[1], [0], [0], [1], [0, 0, 1, 1], [], []>} : vector<8x8xf32>, vector<8x32xf32>, vector<8x32xf32> -> vector<8x32xf32>
    %80 = arith.addf %74, %79 : vector<8x32xf32>
    %81 = vector.extract_strided_slice %61 {offsets = [3, 0, 0], sizes = [1, 8, 8], strides = [1, 1, 1]} : vector<4x8x8xf32> to vector<1x8x8xf32>
    %82 = vector.shape_cast %81 : vector<1x8x8xf32> to vector<8x8xf32>
    %c3_62 = arith.constant 3 : index
    %c0_63 = arith.constant 0 : index
    %c0_64 = arith.constant 0 : index
    %83 = vector.load %arg7[%c3_62, %c0_63, %c0_64] : memref<4x8x32xf32, #tpu.memory_space<vmem>>, vector<1x8x32xf32>
    %84 = vector.shape_cast %83 : vector<1x8x32xf32> to vector<8x32xf32>
    %cst_65 = arith.constant dense<0.000000e+00> : vector<8x32xf32>
    %85 = tpu.matmul %82, %84, %cst_65 {dimension_numbers = #tpu.dot_dimension_numbers<[1], [0], [0], [1], [0, 0, 1, 1], [], []>} : vector<8x8xf32>, vector<8x32xf32>, vector<8x32xf32> -> vector<8x32xf32>
    %86 = arith.addf %80, %85 : vector<8x32xf32>
    %c0_66 = arith.constant 0 : index
    %c0_67 = arith.constant 0 : index
    %87 = vector.load %arg8[%c0_66, %c0_67] : memref<1x32xf32, #tpu.memory_space<vmem>>, vector<1x32xf32>
    %88 = vector.broadcast %87 : vector<1x32xf32> to vector<8x32xf32>
    %89 = arith.addf %86, %88 : vector<8x32xf32>
    %c0_68 = arith.constant 0 : index
    %c0_69 = arith.constant 0 : index
    %c0_70 = arith.constant 0 : index
    %90 = vector.load %arg9[%c0_68, %c0_69, %c0_70] : memref<1x8x32xf32, #tpu.memory_space<vmem>>, vector<1x8x32xf32>
    %91 = vector.shape_cast %90 : vector<1x8x32xf32> to vector<8x32xf32>
    %92 = vector.shape_cast %89 : vector<8x32xf32> to vector<1x8x32xf32>
    tpu.vector_store %arg9[%c0_68, %c0_69, %c0_70], %92 {strides = array<i32>} : memref<1x8x32xf32, #tpu.memory_space<vmem>>, vector<1x8x32xf32>,
    return
  }
  func.func @transform_0(%arg0: i32, %arg1: i32) -> (i32, i32, i32) {
    %c0_i32 = arith.constant 0 : i32
    %c0_i32_0 = arith.constant 0 : i32
    %c0_i32_1 = arith.constant 0 : i32
    return %arg0, %c0_i32, %c0_i32_0 : i32, i32, i32
  }
  func.func @transform_1(%arg0: i32, %arg1: i32) -> (i32, i32, i32) {
    %c0_i32 = arith.constant 0 : i32
    %c0_i32_0 = arith.constant 0 : i32
    %c0_i32_1 = arith.constant 0 : i32
    return %arg0, %c0_i32, %c0_i32_0 : i32, i32, i32
  }
  func.func @transform_2(%arg0: i32, %arg1: i32) -> (i32, i32, i32) {
    %c0_i32 = arith.constant 0 : i32
    %c0_i32_0 = arith.constant 0 : i32
    %c0_i32_1 = arith.constant 0 : i32
    %c0_i32_2 = arith.constant 0 : i32
    return %c0_i32, %c0_i32_0, %c0_i32_1 : i32, i32, i32
  }
  func.func @transform_3(%arg0: i32, %arg1: i32) -> (i32, i32, i32) {
    %c0_i32 = arith.constant 0 : i32
    %c0_i32_0 = arith.constant 0 : i32
    %c0_i32_1 = arith.constant 0 : i32
    %c0_i32_2 = arith.constant 0 : i32
    return %c0_i32, %c0_i32_0, %c0_i32_1 : i32, i32, i32
  }
  func.func @transform_4(%arg0: i32, %arg1: i32) -> (i32, i32, i32) {
    %c0_i32 = arith.constant 0 : i32
    %c0_i32_0 = arith.constant 0 : i32
    %c0_i32_1 = arith.constant 0 : i32
    %c0_i32_2 = arith.constant 0 : i32
    return %c0_i32, %c0_i32_0, %c0_i32_1 : i32, i32, i32
  }
  func.func @transform_5(%arg0: i32, %arg1: i32) -> (i32, i32, i32) {
    %c0_i32 = arith.constant 0 : i32
    %c0_i32_0 = arith.constant 0 : i32
    %c0_i32_1 = arith.constant 0 : i32
    %c0_i32_2 = arith.constant 0 : i32
    return %c0_i32, %c0_i32_0, %c0_i32_1 : i32, i32, i32
  }
  func.func @transform_6(%arg0: i32, %arg1: i32) -> (i32, i32) {
    %c0_i32 = arith.constant 0 : i32
    %c0_i32_0 = arith.constant 0 : i32
    %c0_i32_1 = arith.constant 0 : i32
    return %c0_i32, %c0_i32_0 : i32, i32
  }
  func.func @transform_7(%arg0: i32, %arg1: i32) -> (i32, i32, i32) {
    %c0_i32 = arith.constant 0 : i32
    %c0_i32_0 = arith.constant 0 : i32
    return %arg0, %arg1, %c0_i32 : i32, i32, i32
  }
}

module attributes {stable_mosaic.version = 11 : i64} {
  func.func @_attention_kernel(%arg0: i32, %arg1: i32, %arg2: memref<1x8x32xf32, #tpu.memory_space<vmem>>, %arg3: memref<1x1x8xf32, #tpu.memory_space<vmem>>, %arg4: memref<4x32x8xf32, #tpu.memory_space<vmem>>, %arg5: memref<4x32x8xf32, #tpu.memory_space<vmem>>, %arg6: memref<4x32x8xf32, #tpu.memory_space<vmem>>, %arg7: memref<4x8x32xf32, #tpu.memory_space<vmem>>, %arg8: memref<1x32xf32, #tpu.memory_space<vmem>>, %arg9: memref<1x8x32xf32, #tpu.memory_space<vmem>>, %arg10: memref<4x8x8xf32, #tpu.memory_space<vmem>>, %arg11: memref<4x8x8xf32, #tpu.memory_space<vmem>>, %arg12: memref<4x8x8xf32, #tpu.memory_space<vmem>>) attributes {dimension_semantics = [#tpu.dimension_semantics<parallel>, #tpu.dimension_semantics<arbitrary>], iteration_bounds = array<i64: 2, 1>, scalar_prefetch = 0 : i64, scratch_operands = 3 : i64, tpu.core_type = #tpu.core_type<tc>, window_params = [{transform_indices = @transform_0, window_bounds = array<i64: 1, 8, 32>}, {transform_indices = @transform_1, window_bounds = array<i64: 1, 1, 8>}, {pipeline_mode = #tpu.pipeline_mode<synchronous>, transform_indices = @transform_2, window_bounds = array<i64: 4, 32, 8>}, {pipeline_mode = #tpu.pipeline_mode<synchronous>, transform_indices = @transform_3, window_bounds = array<i64: 4, 32, 8>}, {pipeline_mode = #tpu.pipeline_mode<synchronous>, transform_indices = @transform_4, window_bounds = array<i64: 4, 32, 8>}, {pipeline_mode = #tpu.pipeline_mode<synchronous>, transform_indices = @transform_5, window_bounds = array<i64: 4, 8, 32>}, {pipeline_mode = #tpu.pipeline_mode<synchronous>, transform_indices = @transform_6, window_bounds = array<i64: 1, 32>}, {transform_indices = @transform_7, window_bounds = array<i64: 1, 8, 32>}]} {
    %c0_i32 = arith.constant 0 : i32
    %0 = arith.cmpi eq, %arg1, %c0_i32 : i32
    %1 = arith.extui %0 : i1 to i32
    %c0_i32_0 = arith.constant 0 : i32
    %2 = arith.cmpi ne, %1, %c0_i32_0 : i32
    scf.if %2 {
      %c0_71 = arith.constant 0 : index
      %c0_72 = arith.constant 0 : index
      %c0_73 = arith.constant 0 : index
      %93 = vector.load %arg2[%c0_71, %c0_72, %c0_73] : memref<1x8x32xf32, #tpu.memory_space<vmem>>, vector<1x8x32xf32>
      %94 = vector.shape_cast %93 : vector<1x8x32xf32> to vector<8x32xf32>
      %c0_74 = arith.constant 0 : index
      %c0_75 = arith.constant 0 : index
      %c0_76 = arith.constant 0 : index
      %95 = vector.load %arg5[%c0_74, %c0_75, %c0_76] : memref<4x32x8xf32, #tpu.memory_space<vmem>>, vector<1x32x8xf32>
      %96 = vector.shape_cast %95 : vector<1x32x8xf32> to vector<32x8xf32>
      %cst_77 = arith.constant dense<0.000000e+00> : vector<8x8xf32>
      %97 = tpu.matmul %94, %96, %cst_77 {dimension_numbers = #tpu.dot_dimension_numbers<[1], [0], [0], [1], [0, 0, 1, 1], [], []>} : vector<8x32xf32>, vector<32x8xf32>, vector<8x8xf32> -> vector<8x8xf32>
      %c0_78 = arith.constant 0 : index
      %c0_79 = arith.constant 0 : index
      %c0_80 = arith.constant 0 : index
      %98 = vector.load %arg11[%c0_78, %c0_79, %c0_80] : memref<4x8x8xf32, #tpu.memory_space<vmem>>, vector<1x8x8xf32>
      %99 = vector.shape_cast %98 : vector<1x8x8xf32> to vector<8x8xf32>
      %100 = vector.shape_cast %97 : vector<8x8xf32> to vector<1x8x8xf32>
      tpu.vector_store %arg11[%c0_78, %c0_79, %c0_80], %100 {strides = array<i32>} : memref<4x8x8xf32, #tpu.memory_space<vmem>>, vector<1x8x8xf32>,
      %c0_81 = arith.constant 0 : index
      %c0_82 = arith.constant 0 : index
      %c0_83 = arith.constant 0 : index
      %101 = vector.load %arg6[%c0_81, %c0_82, %c0_83] : memref<4x32x8xf32, #tpu.memory_space<vmem>>, vector<1x32x8xf32>
      %102 = vector.shape_cast %101 : vector<1x32x8xf32> to vector<32x8xf32>
      %cst_84 = arith.constant dense<0.000000e+00> : vector<8x8xf32>
      %103 = tpu.matmul %94, %102, %cst_84 {dimension_numbers = #tpu.dot_dimension_numbers<[1], [0], [0], [1], [0, 0, 1, 1], [], []>} : vector<8x32xf32>, vector<32x8xf32>, vector<8x8xf32> -> vector<8x8xf32>
      %c0_85 = arith.constant 0 : index
      %c0_86 = arith.constant 0 : index
      %c0_87 = arith.constant 0 : index
      %104 = vector.load %arg12[%c0_85, %c0_86, %c0_87] : memref<4x8x8xf32, #tpu.memory_space<vmem>>, vector<1x8x8xf32>
      %105 = vector.shape_cast %104 : vector<1x8x8xf32> to vector<8x8xf32>
      %106 = vector.shape_cast %103 : vector<8x8xf32> to vector<1x8x8xf32>
      tpu.vector_store %arg12[%c0_85, %c0_86, %c0_87], %106 {strides = array<i32>} : memref<4x8x8xf32, #tpu.memory_space<vmem>>, vector<1x8x8xf32>,
      %c1_88 = arith.constant 1 : index
      %c0_89 = arith.constant 0 : index
      %c0_90 = arith.constant 0 : index
      %107 = vector.load %arg5[%c1_88, %c0_89, %c0_90] : memref<4x32x8xf32, #tpu.memory_space<vmem>>, vector<1x32x8xf32>
      %108 = vector.shape_cast %107 : vector<1x32x8xf32> to vector<32x8xf32>
      %cst_91 = arith.constant dense<0.000000e+00> : vector<8x8xf32>
      %109 = tpu.matmul %94, %108, %cst_91 {dimension_numbers = #tpu.dot_dimension_numbers<[1], [0], [0], [1], [0, 0, 1, 1], [], []>} : vector<8x32xf32>, vector<32x8xf32>, vector<8x8xf32> -> vector<8x8xf32>
      %c1_92 = arith.constant 1 : index
      %c0_93 = arith.constant 0 : index
      %c0_94 = arith.constant 0 : index
      %110 = vector.load %arg11[%c1_92, %c0_93, %c0_94] : memref<4x8x8xf32, #tpu.memory_space<vmem>>, vector<1x8x8xf32>
      %111 = vector.shape_cast %110 : vector<1x8x8xf32> to vector<8x8xf32>
      %112 = vector.shape_cast %109 : vector<8x8xf32> to vector<1x8x8xf32>
      tpu.vector_store %arg11[%c1_92, %c0_93, %c0_94], %112 {strides = array<i32>} : memref<4x8x8xf32, #tpu.memory_space<vmem>>, vector<1x8x8xf32>,
      %c1_95 = arith.constant 1 : index
      %c0_96 = arith.constant 0 : index
      %c0_97 = arith.constant 0 : index
      %113 = vector.load %arg6[%c1_95, %c0_96, %c0_97] : memref<4x32x8xf32, #tpu.memory_space<vmem>>, vector<1x32x8xf32>
      %114 = vector.shape_cast %113 : vector<1x32x8xf32> to vector<32x8xf32>
      %cst_98 = arith.constant dense<0.000000e+00> : vector<8x8xf32>
      %115 = tpu.matmul %94, %114, %cst_98 {dimension_numbers = #tpu.dot_dimension_numbers<[1], [0], [0], [1], [0, 0, 1, 1], [], []>} : vector<8x32xf32>, vector<32x8xf32>, vector<8x8xf32> -> vector<8x8xf32>
      %c1_99 = arith.constant 1 : index
      %c0_100 = arith.constant 0 : index
      %c0_101 = arith.constant 0 : index
      %116 = vector.load %arg12[%c1_99, %c0_100, %c0_101] : memref<4x8x8xf32, #tpu.memory_space<vmem>>, vector<1x8x8xf32>
      %117 = vector.shape_cast %116 : vector<1x8x8xf32> to vector<8x8xf32>
      %118 = vector.shape_cast %115 : vector<8x8xf32> to vector<1x8x8xf32>
      tpu.vector_store %arg12[%c1_99, %c0_100, %c0_101], %118 {strides = array<i32>} : memref<4x8x8xf32, #tpu.memory_space<vmem>>, vector<1x8x8xf32>,
      %c2_102 = arith.constant 2 : index
      %c0_103 = arith.constant 0 : index
      %c0_104 = arith.constant 0 : index
      %119 = vector.load %arg5[%c2_102, %c0_103, %c0_104] : memref<4x32x8xf32, #tpu.memory_space<vmem>>, vector<1x32x8xf32>
      %120 = vector.shape_cast %119 : vector<1x32x8xf32> to vector<32x8xf32>
      %cst_105 = arith.constant dense<0.000000e+00> : vector<8x8xf32>
      %121 = tpu.matmul %94, %120, %cst_105 {dimension_numbers = #tpu.dot_dimension_numbers<[1], [0], [0], [1], [0, 0, 1, 1], [], []>} : vector<8x32xf32>, vector<32x8xf32>, vector<8x8xf32> -> vector<8x8xf32>
      %c2_106 = arith.constant 2 : index
      %c0_107 = arith.constant 0 : index
      %c0_108 = arith.constant 0 : index
      %122 = vector.load %arg11[%c2_106, %c0_107, %c0_108] : memref<4x8x8xf32, #tpu.memory_space<vmem>>, vector<1x8x8xf32>
      %123 = vector.shape_cast %122 : vector<1x8x8xf32> to vector<8x8xf32>
      %124 = vector.shape_cast %121 : vector<8x8xf32> to vector<1x8x8xf32>
      tpu.vector_store %arg11[%c2_106, %c0_107, %c0_108], %124 {strides = array<i32>} : memref<4x8x8xf32, #tpu.memory_space<vmem>>, vector<1x8x8xf32>,
      %c2_109 = arith.constant 2 : index
      %c0_110 = arith.constant 0 : index
      %c0_111 = arith.constant 0 : index
      %125 = vector.load %arg6[%c2_109, %c0_110, %c0_111] : memref<4x32x8xf32, #tpu.memory_space<vmem>>, vector<1x32x8xf32>
      %126 = vector.shape_cast %125 : vector<1x32x8xf32> to vector<32x8xf32>
      %cst_112 = arith.constant dense<0.000000e+00> : vector<8x8xf32>
      %127 = tpu.matmul %94, %126, %cst_112 {dimension_numbers = #tpu.dot_dimension_numbers<[1], [0], [0], [1], [0, 0, 1, 1], [], []>} : vector<8x32xf32>, vector<32x8xf32>, vector<8x8xf32> -> vector<8x8xf32>
      %c2_113 = arith.constant 2 : index
      %c0_114 = arith.constant 0 : index
      %c0_115 = arith.constant 0 : index
      %128 = vector.load %arg12[%c2_113, %c0_114, %c0_115] : memref<4x8x8xf32, #tpu.memory_space<vmem>>, vector<1x8x8xf32>
      %129 = vector.shape_cast %128 : vector<1x8x8xf32> to vector<8x8xf32>
      %130 = vector.shape_cast %127 : vector<8x8xf32> to vector<1x8x8xf32>
      tpu.vector_store %arg12[%c2_113, %c0_114, %c0_115], %130 {strides = array<i32>} : memref<4x8x8xf32, #tpu.memory_space<vmem>>, vector<1x8x8xf32>,
      %c3_116 = arith.constant 3 : index
      %c0_117 = arith.constant 0 : index
      %c0_118 = arith.constant 0 : index
      %131 = vector.load %arg5[%c3_116, %c0_117, %c0_118] : memref<4x32x8xf32, #tpu.memory_space<vmem>>, vector<1x32x8xf32>
      %132 = vector.shape_cast %131 : vector<1x32x8xf32> to vector<32x8xf32>
      %cst_119 = arith.constant dense<0.000000e+00> : vector<8x8xf32>
      %133 = tpu.matmul %94, %132, %cst_119 {dimension_numbers = #tpu.dot_dimension_numbers<[1], [0], [0], [1], [0, 0, 1, 1], [], []>} : vector<8x32xf32>, vector<32x8xf32>, vector<8x8xf32> -> vector<8x8xf32>
      %c3_120 = arith.constant 3 : index
      %c0_121 = arith.constant 0 : index
      %c0_122 = arith.constant 0 : index
      %134 = vector.load %arg11[%c3_120, %c0_121, %c0_122] : memref<4x8x8xf32, #tpu.memory_space<vmem>>, vector<1x8x8xf32>
      %135 = vector.shape_cast %134 : vector<1x8x8xf32> to vector<8x8xf32>
      %136 = vector.shape_cast %133 : vector<8x8xf32> to vector<1x8x8xf32>
      tpu.vector_store %arg11[%c3_120, %c0_121, %c0_122], %136 {strides = array<i32>} : memref<4x8x8xf32, #tpu.memory_space<vmem>>, vector<1x8x8xf32>,
      %c3_123 = arith.constant 3 : index
      %c0_124 = arith.constant 0 : index
      %c0_125 = arith.constant 0 : index
      %137 = vector.load %arg6[%c3_123, %c0_124, %c0_125] : memref<4x32x8xf32, #tpu.memory_space<vmem>>, vector<1x32x8xf32>
      %138 = vector.shape_cast %137 : vector<1x32x8xf32> to vector<32x8xf32>
      %cst_126 = arith.constant dense<0.000000e+00> : vector<8x8xf32>
      %139 = tpu.matmul %94, %138, %cst_126 {dimension_numbers = #tpu.dot_dimension_numbers<[1], [0], [0], [1], [0, 0, 1, 1], [], []>} : vector<8x32xf32>, vector<32x8xf32>, vector<8x8xf32> -> vector<8x8xf32>
      %c3_127 = arith.constant 3 : index
      %c0_128 = arith.constant 0 : index
      %c0_129 = arith.constant 0 : index
      %140 = vector.load %arg12[%c3_127, %c0_128, %c0_129] : memref<4x8x8xf32, #tpu.memory_space<vmem>>, vector<1x8x8xf32>
      %141 = vector.shape_cast %140 : vector<1x8x8xf32> to vector<8x8xf32>
      %142 = vector.shape_cast %139 : vector<8x8xf32> to vector<1x8x8xf32>
      tpu.vector_store %arg12[%c3_127, %c0_128, %c0_129], %142 {strides = array<i32>} : memref<4x8x8xf32, #tpu.memory_space<vmem>>, vector<1x8x8xf32>,
    } else {
    }
    %c0 = arith.constant 0 : index
    %c0_1 = arith.constant 0 : index
    %c0_2 = arith.constant 0 : index
    %3 = vector.load %arg2[%c0, %c0_1, %c0_2] : memref<1x8x32xf32, #tpu.memory_space<vmem>>, vector<1x8x32xf32>
    %4 = vector.shape_cast %3 : vector<1x8x32xf32> to vector<8x32xf32>
    %c0_3 = arith.constant 0 : index
    %c0_4 = arith.constant 0 : index
    %c0_5 = arith.constant 0 : index
    %5 = vector.load %arg4[%c0_3, %c0_4, %c0_5] : memref<4x32x8xf32, #tpu.memory_space<vmem>>, vector<1x32x8xf32>
    %6 = vector.shape_cast %5 : vector<1x32x8xf32> to vector<32x8xf32>
    %cst = arith.constant dense<0.000000e+00> : vector<8x8xf32>
    %7 = tpu.matmul %4, %6, %cst {dimension_numbers = #tpu.dot_dimension_numbers<[1], [0], [0], [1], [0, 0, 1, 1], [], []>} : vector<8x32xf32>, vector<32x8xf32>, vector<8x8xf32> -> vector<8x8xf32>
    %c0_6 = arith.constant 0 : index
    %c0_7 = arith.constant 0 : index
    %c0_8 = arith.constant 0 : index
    %8 = vector.load %arg10[%c0_6, %c0_7, %c0_8] : memref<4x8x8xf32, #tpu.memory_space<vmem>>, vector<1x8x8xf32>
    %9 = vector.shape_cast %8 : vector<1x8x8xf32> to vector<8x8xf32>
    %10 = vector.shape_cast %7 : vector<8x8xf32> to vector<1x8x8xf32>
    tpu.vector_store %arg10[%c0_6, %c0_7, %c0_8], %10 {strides = array<i32>} : memref<4x8x8xf32, #tpu.memory_space<vmem>>, vector<1x8x8xf32>,
    %c1 = arith.constant 1 : index
    %c0_9 = arith.constant 0 : index
    %c0_10 = arith.constant 0 : index
    %11 = vector.load %arg4[%c1, %c0_9, %c0_10] : memref<4x32x8xf32, #tpu.memory_space<vmem>>, vector<1x32x8xf32>
    %12 = vector.shape_cast %11 : vector<1x32x8xf32> to vector<32x8xf32>
    %cst_11 = arith.constant dense<0.000000e+00> : vector<8x8xf32>
    %13 = tpu.matmul %4, %12, %cst_11 {dimension_numbers = #tpu.dot_dimension_numbers<[1], [0], [0], [1], [0, 0, 1, 1], [], []>} : vector<8x32xf32>, vector<32x8xf32>, vector<8x8xf32> -> vector<8x8xf32>
    %c1_12 = arith.constant 1 : index
    %c0_13 = arith.constant 0 : index
    %c0_14 = arith.constant 0 : index
    %14 = vector.load %arg10[%c1_12, %c0_13, %c0_14] : memref<4x8x8xf32, #tpu.memory_space<vmem>>, vector<1x8x8xf32>
    %15 = vector.shape_cast %14 : vector<1x8x8xf32> to vector<8x8xf32>
    %16 = vector.shape_cast %13 : vector<8x8xf32> to vector<1x8x8xf32>
    tpu.vector_store %arg10[%c1_12, %c0_13, %c0_14], %16 {strides = array<i32>} : memref<4x8x8xf32, #tpu.memory_space<vmem>>, vector<1x8x8xf32>,
    %c2 = arith.constant 2 : index
    %c0_15 = arith.constant 0 : index
    %c0_16 = arith.constant 0 : index
    %17 = vector.load %arg4[%c2, %c0_15, %c0_16] : memref<4x32x8xf32, #tpu.memory_space<vmem>>, vector<1x32x8xf32>
    %18 = vector.shape_cast %17 : vector<1x32x8xf32> to vector<32x8xf32>
    %cst_17 = arith.constant dense<0.000000e+00> : vector<8x8xf32>
    %19 = tpu.matmul %4, %18, %cst_17 {dimension_numbers = #tpu.dot_dimension_numbers<[1], [0], [0], [1], [0, 0, 1, 1], [], []>} : vector<8x32xf32>, vector<32x8xf32>, vector<8x8xf32> -> vector<8x8xf32>
    %c2_18 = arith.constant 2 : index
    %c0_19 = arith.constant 0 : index
    %c0_20 = arith.constant 0 : index
    %20 = vector.load %arg10[%c2_18, %c0_19, %c0_20] : memref<4x8x8xf32, #tpu.memory_space<vmem>>, vector<1x8x8xf32>
    %21 = vector.shape_cast %20 : vector<1x8x8xf32> to vector<8x8xf32>
    %22 = vector.shape_cast %19 : vector<8x8xf32> to vector<1x8x8xf32>
    tpu.vector_store %arg10[%c2_18, %c0_19, %c0_20], %22 {strides = array<i32>} : memref<4x8x8xf32, #tpu.memory_space<vmem>>, vector<1x8x8xf32>,
    %c3 = arith.constant 3 : index
    %c0_21 = arith.constant 0 : index
    %c0_22 = arith.constant 0 : index
    %23 = vector.load %arg4[%c3, %c0_21, %c0_22] : memref<4x32x8xf32, #tpu.memory_space<vmem>>, vector<1x32x8xf32>
    %24 = vector.shape_cast %23 : vector<1x32x8xf32> to vector<32x8xf32>
    %cst_23 = arith.constant dense<0.000000e+00> : vector<8x8xf32>
    %25 = tpu.matmul %4, %24, %cst_23 {dimension_numbers = #tpu.dot_dimension_numbers<[1], [0], [0], [1], [0, 0, 1, 1], [], []>} : vector<8x32xf32>, vector<32x8xf32>, vector<8x8xf32> -> vector<8x8xf32>
    %c3_24 = arith.constant 3 : index
    %c0_25 = arith.constant 0 : index
    %c0_26 = arith.constant 0 : index
    %26 = vector.load %arg10[%c3_24, %c0_25, %c0_26] : memref<4x8x8xf32, #tpu.memory_space<vmem>>, vector<1x8x8xf32>
    %27 = vector.shape_cast %26 : vector<1x8x8xf32> to vector<8x8xf32>
    %28 = vector.shape_cast %25 : vector<8x8xf32> to vector<1x8x8xf32>
    tpu.vector_store %arg10[%c3_24, %c0_25, %c0_26], %28 {strides = array<i32>} : memref<4x8x8xf32, #tpu.memory_space<vmem>>, vector<1x8x8xf32>,
    %c0_27 = arith.constant 0 : index
    %c0_28 = arith.constant 0 : index
    %c0_29 = arith.constant 0 : index
    %29 = vector.load %arg10[%c0_27, %c0_28, %c0_29] : memref<4x8x8xf32, #tpu.memory_space<vmem>>, vector<4x8x8xf32>
    %c0_30 = arith.constant 0 : index
    %c0_31 = arith.constant 0 : index
    %c0_32 = arith.constant 0 : index
    %30 = vector.load %arg3[%c0_30, %c0_31, %c0_32] : memref<1x1x8xf32, #tpu.memory_space<vmem>>, vector<1x1x8xf32>
    %cst_33 = arith.constant 0.000000e+00 : f32
    %31 = vector.broadcast %cst_33 : f32 to vector<1x1x8xf32>
    %32 = arith.cmpf ogt, %30, %31 : vector<1x1x8xf32>
    %cst_34 = arith.constant -1.000000e+07 : f32
    %cst_35 = arith.constant 0.000000e+00 : f32
    %33 = vector.broadcast %cst_34 : f32 to vector<1x1x8xf32>
    %34 = vector.broadcast %cst_35 : f32 to vector<1x1x8xf32>
    %35 = arith.select %32, %33, %34 : vector<1x1x8xi1>, vector<1x1x8xf32>
    %cst_36 = arith.constant -1.000000e+30 : f32
    %36 = vector.broadcast %cst_36 : f32 to vector<4x8x1xf32>
    %cst_37 = arith.constant 0.000000e+00 : f32
    %37 = vector.broadcast %cst_37 : f32 to vector<4x8x1xf32>
    %cst_38 = arith.constant 0.000000e+00 : f32
    %38 = vector.broadcast %cst_38 : f32 to vector<4x8x8xf32>
    %c0_39 = arith.constant 0 : index
    %c0_40 = arith.constant 0 : index
    %c0_41 = arith.constant 0 : index
    %39 = vector.load %arg11[%c0_39, %c0_40, %c0_41] : memref<4x8x8xf32, #tpu.memory_space<vmem>>, vector<4x8x8xf32>
    %c0_42 = arith.constant 0 : index
    %c0_43 = arith.constant 0 : index
    %c0_44 = arith.constant 0 : index
    %40 = vector.load %arg12[%c0_42, %c0_43, %c0_44] : memref<4x8x8xf32, #tpu.memory_space<vmem>>, vector<4x8x8xf32>
    "tpu.trace_start"() <{level = 10 : i32, message = "hqd,hkd->hqk"}> : () -> ()
    %cst_45 = arith.constant dense<0.000000e+00> : vector<4x8x8xf32>
    %41 = tpu.matmul %29, %39, %cst_45 {dimension_numbers = #tpu.dot_dimension_numbers<[2], [2], [1], [1], [0, 0, 0, 1, 1, 1], [0], [0]>} : vector<4x8x8xf32>, vector<4x8x8xf32>, vector<4x8x8xf32> -> vector<4x8x8xf32>
    "tpu.trace_stop"() : () -> ()
    %42 = vector.broadcast %35 : vector<1x1x8xf32> to vector<4x8x8xf32>
    %43 = arith.addf %41, %42 : vector<4x8x8xf32>
    %cst_46 = arith.constant dense<0xFF800000> : vector<4x8xf32>
    %44 = vector.multi_reduction <maximumf>, %43, %cst_46 [2] : vector<4x8x8xf32> to vector<4x8xf32>
    %45 = vector.shape_cast %44 : vector<4x8xf32> to vector<4x8x1xf32>
    %46 = arith.maximumf %36, %45 : vector<4x8x1xf32>
    %47 = arith.subf %36, %46 : vector<4x8x1xf32>
    %48 = math.exp %47 : vector<4x8x1xf32>
    %49 = vector.broadcast %46 : vector<4x8x1xf32> to vector<4x8x8xf32>
    %50 = arith.subf %43, %49 : vector<4x8x8xf32>
    %51 = math.exp %50 : vector<4x8x8xf32>
    %52 = arith.mulf %48, %37 : vector<4x8x1xf32>
    %cst_47 = arith.constant dense<0.000000e+00> : vector<4x8xf32>
    %53 = vector.multi_reduction <add>, %51, %cst_47 [2] : vector<4x8x8xf32> to vector<4x8xf32>
    %54 = vector.shape_cast %53 : vector<4x8xf32> to vector<4x8x1xf32>
    %55 = arith.addf %52, %54 : vector<4x8x1xf32>
    %56 = vector.broadcast %48 : vector<4x8x1xf32> to vector<4x8x8xf32>
    %57 = arith.mulf %56, %38 : vector<4x8x8xf32>
    "tpu.trace_start"() <{level = 10 : i32, message = "hqk,hkd->hqd"}> : () -> ()
    %cst_48 = arith.constant dense<0.000000e+00> : vector<4x8x8xf32>
    %58 = tpu.matmul %51, %40, %cst_48 {dimension_numbers = #tpu.dot_dimension_numbers<[2], [1], [1], [2], [0, 0, 0, 1, 1, 2], [0], [0]>} : vector<4x8x8xf32>, vector<4x8x8xf32>, vector<4x8x8xf32> -> vector<4x8x8xf32>
    "tpu.trace_stop"() : () -> ()
    %59 = arith.addf %57, %58 : vector<4x8x8xf32>
    %60 = vector.broadcast %55 : vector<4x8x1xf32> to vector<4x8x8xf32>
    %61 = arith.divf %59, %60 : vector<4x8x8xf32>
    %cst_49 = arith.constant 0.000000e+00 : f32
    %62 = vector.broadcast %cst_49 : f32 to vector<8x32xf32>
    %63 = vector.extract_strided_slice %61 {offsets = [0, 0, 0], sizes = [1, 8, 8], strides = [1, 1, 1]} : vector<4x8x8xf32> to vector<1x8x8xf32>
    %64 = vector.shape_cast %63 : vector<1x8x8xf32> to vector<8x8xf32>
    %c0_50 = arith.constant 0 : index
    %c0_51 = arith.constant 0 : index
    %c0_52 = arith.constant 0 : index
    %65 = vector.load %arg7[%c0_50, %c0_51, %c0_52] : memref<4x8x32xf32, #tpu.memory_space<vmem>>, vector<1x8x32xf32>
    %66 = vector.shape_cast %65 : vector<1x8x32xf32> to vector<8x32xf32>
    %cst_53 = arith.constant dense<0.000000e+00> : vector<8x32xf32>
    %67 = tpu.matmul %64, %66, %cst_53 {dimension_numbers = #tpu.dot_dimension_numbers<[1], [0], [0], [1], [0, 0, 1, 1], [], []>} : vector<8x8xf32>, vector<8x32xf32>, vector<8x32xf32> -> vector<8x32xf32>
    %68 = arith.addf %62, %67 : vector<8x32xf32>
    %69 = vector.extract_strided_slice %61 {offsets = [1, 0, 0], sizes = [1, 8, 8], strides = [1, 1, 1]} : vector<4x8x8xf32> to vector<1x8x8xf32>
    %70 = vector.shape_cast %69 : vector<1x8x8xf32> to vector<8x8xf32>
    %c1_54 = arith.constant 1 : index
    %c0_55 = arith.constant 0 : index
    %c0_56 = arith.constant 0 : index
    %71 = vector.load %arg7[%c1_54, %c0_55, %c0_56] : memref<4x8x32xf32, #tpu.memory_space<vmem>>, vector<1x8x32xf32>
    %72 = vector.shape_cast %71 : vector<1x8x32xf32> to vector<8x32xf32>
    %cst_57 = arith.constant dense<0.000000e+00> : vector<8x32xf32>
    %73 = tpu.matmul %70, %72, %cst_57 {dimension_numbers = #tpu.dot_dimension_numbers<[1], [0], [0], [1], [0, 0, 1, 1], [], []>} : vector<8x8xf32>, vector<8x32xf32>, vector<8x32xf32> -> vector<8x32xf32>
    %74 = arith.addf %68, %73 : vector<8x32xf32>
    %75 = vector.extract_strided_slice %61 {offsets = [2, 0, 0], sizes = [1, 8, 8], strides = [1, 1, 1]} : vector<4x8x8xf32> to vector<1x8x8xf32>
    %76 = vector.shape_cast %75 : vector<1x8x8xf32> to vector<8x8xf32>
    %c2_58 = arith.constant 2 : index
    %c0_59 = arith.constant 0 : index
    %c0_60 = arith.constant 0 : index
    %77 = vector.load %arg7[%c2_58, %c0_59, %c0_60] : memref<4x8x32xf32, #tpu.memory_space<vmem>>, vector<1x8x32xf32>
    %78 = vector.shape_cast %77 : vector<1x8x32xf32> to vector<8x32xf32>
    %cst_61 = arith.constant dense<0.000000e+00> : vector<8x32xf32>
    %79 = tpu.matmul %76, %78, %cst_61 {dimension_numbers = #tpu.dot_dimension_numbers<[1], [0], [0], [1], [0, 0, 1, 1], [], []>} : vector<8x8xf32>, vector<8x32xf32>, vector<8x32xf32> -> vector<8x32xf32>
    %80 = arith.addf %74, %79 : vector<8x32xf32>
    %81 = vector.extract_strided_slice %61 {offsets = [3, 0, 0], sizes = [1, 8, 8], strides = [1, 1, 1]} : vector<4x8x8xf32> to vector<1x8x8xf32>
    %82 = vector.shape_cast %81 : vector<1x8x8xf32> to vector<8x8xf32>
    %c3_62 = arith.constant 3 : index
    %c0_63 = arith.constant 0 : index
    %c0_64 = arith.constant 0 : index
    %83 = vector.load %arg7[%c3_62, %c0_63, %c0_64] : memref<4x8x32xf32, #tpu.memory_space<vmem>>, vector<1x8x32xf32>
    %84 = vector.shape_cast %83 : vector<1x8x32xf32> to vector<8x32xf32>
    %cst_65 = arith.constant dense<0.000000e+00> : vector<8x32xf32>
    %85 = tpu.matmul %82, %84, %cst_65 {dimension_numbers = #tpu.dot_dimension_numbers<[1], [0], [0], [1], [0, 0, 1, 1], [], []>} : vector<8x8xf32>, vector<8x32xf32>, vector<8x32xf32> -> vector<8x32xf32>
    %86 = arith.addf %80, %85 : vector<8x32xf32>
    %c0_66 = arith.constant 0 : index
    %c0_67 = arith.constant 0 : index
    %87 = vector.load %arg8[%c0_66, %c0_67] : memref<1x32xf32, #tpu.memory_space<vmem>>, vector<1x32xf32>
    %88 = vector.broadcast %87 : vector<1x32xf32> to vector<8x32xf32>
    %89 = arith.addf %86, %88 : vector<8x32xf32>
    %c0_68 = arith.constant 0 : index
    %c0_69 = arith.constant 0 : index
    %c0_70 = arith.constant 0 : index
    %90 = vector.load %arg9[%c0_68, %c0_69, %c0_70] : memref<1x8x32xf32, #tpu.memory_space<vmem>>, vector<1x8x32xf32>
    %91 = vector.shape_cast %90 : vector<1x8x32xf32> to vector<8x32xf32>
    %92 = vector.shape_cast %89 : vector<8x32xf32> to vector<1x8x32xf32>
    tpu.vector_store %arg9[%c0_68, %c0_69, %c0_70], %92 {strides = array<i32>} : memref<1x8x32xf32, #tpu.memory_space<vmem>>, vector<1x8x32xf32>,
    return
  }
  func.func @transform_0(%arg0: i32, %arg1: i32) -> (i32, i32, i32) {
    %c0_i32 = arith.constant 0 : i32
    %c0_i32_0 = arith.constant 0 : i32
    %c0_i32_1 = arith.constant 0 : i32
    return %arg0, %c0_i32, %c0_i32_0 : i32, i32, i32
  }
  func.func @transform_1(%arg0: i32, %arg1: i32) -> (i32, i32, i32) {
    %c0_i32 = arith.constant 0 : i32
    %c0_i32_0 = arith.constant 0 : i32
    %c0_i32_1 = arith.constant 0 : i32
    return %arg0, %c0_i32, %c0_i32_0 : i32, i32, i32
  }
  func.func @transform_2(%arg0: i32, %arg1: i32) -> (i32, i32, i32) {
    %c0_i32 = arith.constant 0 : i32
    %c0_i32_0 = arith.constant 0 : i32
    %c0_i32_1 = arith.constant 0 : i32
    %c0_i32_2 = arith.constant 0 : i32
    return %c0_i32, %c0_i32_0, %c0_i32_1 : i32, i32, i32
  }
  func.func @transform_3(%arg0: i32, %arg1: i32) -> (i32, i32, i32) {
    %c0_i32 = arith.constant 0 : i32
    %c0_i32_0 = arith.constant 0 : i32
    %c0_i32_1 = arith.constant 0 : i32
    %c0_i32_2 = arith.constant 0 : i32
    return %c0_i32, %c0_i32_0, %c0_i32_1 : i32, i32, i32
  }
  func.func @transform_4(%arg0: i32, %arg1: i32) -> (i32, i32, i32) {
    %c0_i32 = arith.constant 0 : i32
    %c0_i32_0 = arith.constant 0 : i32
    %c0_i32_1 = arith.constant 0 : i32
    %c0_i32_2 = arith.constant 0 : i32
    return %c0_i32, %c0_i32_0, %c0_i32_1 : i32, i32, i32
  }
  func.func @transform_5(%arg0: i32, %arg1: i32) -> (i32, i32, i32) {
    %c0_i32 = arith.constant 0 : i32
    %c0_i32_0 = arith.constant 0 : i32
    %c0_i32_1 = arith.constant 0 : i32
    %c0_i32_2 = arith.constant 0 : i32
    return %c0_i32, %c0_i32_0, %c0_i32_1 : i32, i32, i32
  }
  func.func @transform_6(%arg0: i32, %arg1: i32) -> (i32, i32) {
    %c0_i32 = arith.constant 0 : i32
    %c0_i32_0 = arith.constant 0 : i32
    %c0_i32_1 = arith.constant 0 : i32
    return %c0_i32, %c0_i32_0 : i32, i32
  }
  func.func @transform_7(%arg0: i32, %arg1: i32) -> (i32, i32, i32) {
    %c0_i32 = arith.constant 0 : i32
    %c0_i32_0 = arith.constant 0 : i32
    return %arg0, %arg1, %c0_i32 : i32, i32, i32
  }
}

</mosaic_0001>

<llo_original>
// kernel: tpu_custom_call.1
$region0: #{tpu_custom_call.1}
  #allocation0 [shape = 'u32[]', space=smem, size = 0x4, offset = 0x4, fixed_abs, tag = 'smem constant byte address 0x4 - core index']
  #allocation1 [shape = 'u32[144,128]{1,0:T(1,128)}', space=vmem, size = 0x12000, scoped, tag = 'internal scratch']
  #allocation2 [shape = 'f32[4,8,8]{2,1,0:T(8,128)}', space=vmem, size = 0x4000, scoped, tag = 'scratch operand']
  #allocation3 [shape = 'f32[4,8,8]{2,1,0:T(8,128)}', space=vmem, size = 0x4000, scoped, tag = 'scratch operand']
  #allocation4 [shape = 'f32[4,8,8]{2,1,0:T(8,128)}', space=vmem, size = 0x4000, scoped, tag = 'scratch operand']
  %s0 = inlined_call_operand.vmem [shape: f32[2,8,32], index: 0, kind: input, shape index: {}]
  %s1 = inlined_call_operand.vmem [shape: f32[2,1,8], index: 1, kind: input, shape index: {}]
  %s2 = inlined_call_operand.vmem [shape: f32[4,32,8], index: 2, kind: input, shape index: {}]
  %s3 = inlined_call_operand.vmem [shape: f32[4,32,8], index: 3, kind: input, shape index: {}]
  %s4 = inlined_call_operand.vmem [shape: f32[4,32,8], index: 4, kind: input, shape index: {}]
  %s5 = inlined_call_operand.vmem [shape: f32[4,8,32], index: 5, kind: input, shape index: {}]
  %s6 = inlined_call_operand.vmem [shape: f32[1,32], index: 6, kind: input, shape index: {}]
  %s7 = inlined_call_operand.hbm [shape: f32[2,8,32], index: 7, kind: output, shape index: {}]
  %s8 = sld [smem:[#allocation0]]
  $region65: #{tpu_custom_call.1} parent=0
    _
  %s10 = ssub.s32 1, %s8
  %s11 = scalar_select 0, %s10, %s8
  $region1: #{tpu_custom_call.1} parent=0
    #allocation5 [shape = 'u8[8192]{0}', space=vmem, size = 0x2000, scoped, tag = 'output window, operand 0']
    #allocation6 [shape = 's32[2]{0}', space=sflag, size = 0x8, scoped, tag = 'scoped memory for tpu_custom_call.1']
    %12 = vsyncpa [#allocation6], 0
    %s13 = scalar_lea.sflag [#allocation6], 1
    %14 = vsyncpa %s13, 0
    loop: start=0, step=1, limit=4
    $region2: #{tpu_custom_call.1} parent=1 // loop_pre_header
      _
    $region3: #{tpu_custom_call.1} parent=1 // loop_header
      %s16 = sphi 0, %s20
      %p17 = scmp.ge.s32.totalorder %s16, 4
      %s23 = sphi 0, %s35
      %s24 = sphi 0, %s31
      %s25 = sphi 0, %s23
      %s26 = sphi 0, %s24
      %s27 = sphi 0, %s25
      %s28 = sphi 0, %s26
      %s38 = sphi 0, %s40
      %s41 = sphi 0, %s38
      %s42 = sphi 0, %s41
      %s58 = sphi 0, %s42
      %s64 = sphi 0, %s66
      %s67 = sphi 0, %s64
      %s68 = sphi 0, %s67
      %s84 = sphi 0, %s68
      %s88 = sphi 0, %s88
      %s90 = sphi 0, %s88
      %s91 = sphi 0, %s90
      %s105 = sphi 0, %s91
      %s109 = sphi 0, %s109
      %s111 = sphi 0, %s109
      %s112 = sphi 0, %s111
      %s126 = sphi 0, %s112
      %s130 = sphi 0, %s130
      %s132 = sphi 0, %s130
      %s133 = sphi 0, %s132
      %s147 = sphi 0, %s133
      %s151 = sphi 0, %s151
      %s153 = sphi 0, %s151
      %s154 = sphi 0, %s153
      %s168 = sphi 0, %s154
      %s172 = sphi 0, %s172
      %s174 = sphi 0, %s172
      %s175 = sphi 0, %s174
      %s189 = sphi 0, %s175
      %s197 = sphi 0, %s199
      %s200 = sphi 0, %s197
      %s201 = sphi 0, %s200
      %s217 = sphi 0, %s201
    $region4: #{tpu_custom_call.1} parent=1 // loop_header_branch
      %19 = sbr.rel (%p17) target = $region8
    $region5: #{tpu_custom_call.1} parent=1 // loop_body
      %s21 = ssub.s32 %s16, 1
      %s22 = ssub.s32 %s16, 2
      %s29 = sadd.s32 1, %s24
      %p30 = scmp.ge.s32.totalorder %s29, 1
      %s31 = scalar_select %p30, 0, %s29
      %s32 = sadd.s32 1, %s23
      %s33 = scalar_select %p30, %s32, %s23
      %p34 = scmp.ge.s32.totalorder %s33, 2
      %s35 = scalar_select %p34, 0, %s33
      %s36 = ssub.s32 %s23, %s35
      %p37 = scmp.eq.s32.totalorder %s36, 0
      %s39 = sadd.s32 %s38, 1
      %s40 = scalar_select %p37, %s38, %s39
      %p43 = pneg %p37
      %p44 = scmp.eq.s32.totalorder %s16, 1
      %p45 = por %p43, %p44
      %p46 = scmp.ne.s32.totalorder %s38, %s41
      %p47 = scmp.eq.s32.totalorder %s16, 0
      %p48 = por %p46, %p47
      %p49 = scmp.ne.s32.totalorder %s38, %s41
      %p50 = scmp.eq.s32.totalorder %s21, 1
      %p51 = por %p49, %p50
      %p52 = scmp.ne.s32.totalorder %s41, %s42
      %p53 = scmp.eq.s32.totalorder %s21, 0
      %p54 = por %p52, %p53
      %p55 = scmp.ne.s32.totalorder %s41, %s42
      %p56 = scmp.eq.s32.totalorder %s22, 1
      %p57 = por %p55, %p56
      %p59 = scmp.ne.s32.totalorder %s42, %s58
      %p60 = scmp.eq.s32.totalorder %s22, 0
      %p61 = por %p59, %p60
      %s62 = ssub.s32 %s23, %s35
      %p63 = scmp.eq.s32.totalorder %s62, 0
      %s65 = sadd.s32 %s64, 1
      %s66 = scalar_select %p63, %s64, %s65
      %p69 = pneg %p63
      %p70 = scmp.eq.s32.totalorder %s16, 1
      %p71 = por %p69, %p70
      %p72 = scmp.ne.s32.totalorder %s64, %s67
      %p73 = scmp.eq.s32.totalorder %s16, 0
      %p74 = por %p72, %p73
      %p75 = scmp.ne.s32.totalorder %s64, %s67
      %p76 = scmp.eq.s32.totalorder %s21, 1
      %p77 = por %p75, %p76
      %p78 = scmp.ne.s32.totalorder %s67, %s68
      %p79 = scmp.eq.s32.totalorder %s21, 0
      %p80 = por %p78, %p79
      %p81 = scmp.ne.s32.totalorder %s67, %s68
      %p82 = scmp.eq.s32.totalorder %s22, 1
      %p83 = por %p81, %p82
      %p85 = scmp.ne.s32.totalorder %s68, %s84
      %p86 = scmp.eq.s32.totalorder %s22, 0
      %p87 = por %p85, %p86
      %s89 = sadd.s32 %s88, 1
      %p92 = scmp.eq.s32.totalorder %s16, 1
      %p93 = scmp.ne.s32.totalorder %s88, %s90
      %p94 = scmp.eq.s32.totalorder %s16, 0
      %p95 = por %p93, %p94
      %p96 = scmp.ne.s32.totalorder %s88, %s90
      %p97 = scmp.eq.s32.totalorder %s21, 1
      %p98 = por %p96, %p97
      %p99 = scmp.ne.s32.totalorder %s90, %s91
      %p100 = scmp.eq.s32.totalorder %s21, 0
      %p101 = por %p99, %p100
      %p102 = scmp.ne.s32.totalorder %s90, %s91
      %p103 = scmp.eq.s32.totalorder %s22, 1
      %p104 = por %p102, %p103
      %p106 = scmp.ne.s32.totalorder %s91, %s105
      %p107 = scmp.eq.s32.totalorder %s22, 0
      %p108 = por %p106, %p107
      %s110 = sadd.s32 %s109, 1
      %p113 = scmp.eq.s32.totalorder %s16, 1
      %p114 = scmp.ne.s32.totalorder %s109, %s111
      %p115 = scmp.eq.s32.totalorder %s16, 0
      %p116 = por %p114, %p115
      %p117 = scmp.ne.s32.totalorder %s109, %s111
      %p118 = scmp.eq.s32.totalorder %s21, 1
      %p119 = por %p117, %p118
      %p120 = scmp.ne.s32.totalorder %s111, %s112
      %p121 = scmp.eq.s32.totalorder %s21, 0
      %p122 = por %p120, %p121
      %p123 = scmp.ne.s32.totalorder %s111, %s112
      %p124 = scmp.eq.s32.totalorder %s22, 1
      %p125 = por %p123, %p124
      %p127 = scmp.ne.s32.totalorder %s112, %s126
      %p128 = scmp.eq.s32.totalorder %s22, 0
      %p129 = por %p127, %p128
      %s131 = sadd.s32 %s130, 1
      %p134 = scmp.eq.s32.totalorder %s16, 1
      %p135 = scmp.ne.s32.totalorder %s130, %s132
      %p136 = scmp.eq.s32.totalorder %s16, 0
      %p137 = por %p135, %p136
      %p138 = scmp.ne.s32.totalorder %s130, %s132
      %p139 = scmp.eq.s32.totalorder %s21, 1
      %p140 = por %p138, %p139
      %p141 = scmp.ne.s32.totalorder %s132, %s133
      %p142 = scmp.eq.s32.totalorder %s21, 0
      %p143 = por %p141, %p142
      %p144 = scmp.ne.s32.totalorder %s132, %s133
      %p145 = scmp.eq.s32.totalorder %s22, 1
      %p146 = por %p144, %p145
      %p148 = scmp.ne.s32.totalorder %s133, %s147
      %p149 = scmp.eq.s32.totalorder %s22, 0
      %p150 = por %p148, %p149
      %s152 = sadd.s32 %s151, 1
      %p155 = scmp.eq.s32.totalorder %s16, 1
      %p156 = scmp.ne.s32.totalorder %s151, %s153
      %p157 = scmp.eq.s32.totalorder %s16, 0
      %p158 = por %p156, %p157
      %p159 = scmp.ne.s32.totalorder %s151, %s153
      %p160 = scmp.eq.s32.totalorder %s21, 1
      %p161 = por %p159, %p160
      %p162 = scmp.ne.s32.totalorder %s153, %s154
      %p163 = scmp.eq.s32.totalorder %s21, 0
      %p164 = por %p162, %p163
      %p165 = scmp.ne.s32.totalorder %s153, %s154
      %p166 = scmp.eq.s32.totalorder %s22, 1
      %p167 = por %p165, %p166
      %p169 = scmp.ne.s32.totalorder %s154, %s168
      %p170 = scmp.eq.s32.totalorder %s22, 0
      %p171 = por %p169, %p170
      %s173 = sadd.s32 %s172, 1
      %p176 = scmp.eq.s32.totalorder %s16, 1
      %p177 = scmp.ne.s32.totalorder %s172, %s174
      %p178 = scmp.eq.s32.totalorder %s16, 0
      %p179 = por %p177, %p178
      %p180 = scmp.ne.s32.totalorder %s172, %s174
      %p181 = scmp.eq.s32.totalorder %s21, 1
      %p182 = por %p180, %p181
      %p183 = scmp.ne.s32.totalorder %s174, %s175
      %p184 = scmp.eq.s32.totalorder %s21, 0
      %p185 = por %p183, %p184
      %p186 = scmp.ne.s32.totalorder %s174, %s175
      %p187 = scmp.eq.s32.totalorder %s22, 1
      %p188 = por %p186, %p187
      %p190 = scmp.ne.s32.totalorder %s175, %s189
      %p191 = scmp.eq.s32.totalorder %s22, 0
      %p192 = por %p190, %p191
      %s193 = ssub.s32 %s23, %s35
      %s194 = ssub.s32 %s24, %s31
      %s195 = sor.u32 %s193, %s194
      %p196 = scmp.eq.s32.totalorder %s195, 0
      %s198 = sadd.s32 %s197, 1
      %s199 = scalar_select %p196, %s197, %s198
      %p202 = pneg %p196
      %p203 = scmp.eq.s32.totalorder %s16, 1
      %p204 = por %p202, %p203
      %p205 = scmp.ne.s32.totalorder %s197, %s200
      %p206 = scmp.eq.s32.totalorder %s16, 0
      %p207 = por %p205, %p206
      %p208 = scmp.ne.s32.totalorder %s197, %s200
      %p209 = scmp.eq.s32.totalorder %s21, 1
      %p210 = por %p208, %p209
      %p211 = scmp.ne.s32.totalorder %s200, %s201
      %p212 = scmp.eq.s32.totalorder %s21, 0
      %p213 = por %p211, %p212
      %p214 = scmp.ne.s32.totalorder %s200, %s201
      %p215 = scmp.eq.s32.totalorder %s22, 1
      %p216 = por %p214, %p215
      %p218 = scmp.ne.s32.totalorder %s201, %s217
      %p219 = scmp.eq.s32.totalorder %s22, 0
      %p220 = por %p218, %p219
      %p221 = scmp.le.s32.totalorder 1, %s16
      %p222 = scmp.lt.s32.totalorder %s16, 3
      %p223 = pnand %p221, %p222
      %p224 = pneg %p223
      // Predicated region
      $region9: #{tpu_custom_call.1} parent=5 // pred_check
        _
      $region10: #{tpu_custom_call.1} parent=5 // pred_check_branch
        %226 = sbr.rel (%p223) target = $region12
      $region11: #{tpu_custom_call.1} parent=5 // pred_region
        %s227 = ssub.s32 %s16, 1
        // Predicated region
        $region13: #{tpu_custom_call.1} parent=11 // pred_check
          %p228 = pneg %p101
        $region14: #{tpu_custom_call.1} parent=11 // pred_check_branch
          %230 = sbr.rel (%p228) target = $region16
        $region15: #{tpu_custom_call.1} parent=11 // pred_region
          _
        $region16: #{tpu_custom_call.1} parent=11 // pred_fallthru
          _
        // Predicated region
        $region17: #{tpu_custom_call.1} parent=11 // pred_check
          %p231 = pneg %p122
        $region18: #{tpu_custom_call.1} parent=11 // pred_check_branch
          %233 = sbr.rel (%p231) target = $region20
        $region19: #{tpu_custom_call.1} parent=11 // pred_region
          _
        $region20: #{tpu_custom_call.1} parent=11 // pred_fallthru
          _
        // Predicated region
        $region21: #{tpu_custom_call.1} parent=11 // pred_check
          %p234 = pneg %p143
        $region22: #{tpu_custom_call.1} parent=11 // pred_check_branch
          %236 = sbr.rel (%p234) target = $region24
        $region23: #{tpu_custom_call.1} parent=11 // pred_region
          _
        $region24: #{tpu_custom_call.1} parent=11 // pred_fallthru
          _
        // Predicated region
        $region25: #{tpu_custom_call.1} parent=11 // pred_check
          %p237 = pneg %p164
        $region26: #{tpu_custom_call.1} parent=11 // pred_check_branch
          %239 = sbr.rel (%p237) target = $region28
        $region27: #{tpu_custom_call.1} parent=11 // pred_region
          _
        $region28: #{tpu_custom_call.1} parent=11 // pred_fallthru
          _
        // Predicated region
        $region29: #{tpu_custom_call.1} parent=11 // pred_check
          %p240 = pneg %p185
        $region30: #{tpu_custom_call.1} parent=11 // pred_check_branch
          %242 = sbr.rel (%p240) target = $region32
        $region31: #{tpu_custom_call.1} parent=11 // pred_region
          _
        $region32: #{tpu_custom_call.1} parent=11 // pred_fallthru
          _
      $region12: #{tpu_custom_call.1} parent=5 // pred_fallthru
        _
      %p243 = scmp.lt.s32.totalorder %s16, 2
      // Predicated region
      $region33: #{tpu_custom_call.1} parent=5 // pred_check
        %p244 = pneg %p243
      $region34: #{tpu_custom_call.1} parent=5 // pred_check_branch
        %246 = sbr.rel (%p244) target = $region36
      $region35: #{tpu_custom_call.1} parent=5 // pred_region
        // Predicated region
        $region37: #{tpu_custom_call.1} parent=35 // pred_check
          %p247 = pneg %p48
        $region38: #{tpu_custom_call.1} parent=35 // pred_check_branch
          %249 = sbr.rel (%p247) target = $region40
        $region39: #{tpu_custom_call.1} parent=35 // pred_region
          %p250 = scmp.lt.s32.totalorder %s23, 1
          %s251 = scalar_select %p250, %s23, 1
          %s252 = smul.addr %s251, 8
          %s253 = scalar_lea.vmem %s0, %s252
        $region40: #{tpu_custom_call.1} parent=35 // pred_fallthru
          _
        // Predicated region
        $region41: #{tpu_custom_call.1} parent=35 // pred_check
          %p254 = pneg %p74
        $region42: #{tpu_custom_call.1} parent=35 // pred_check_branch
          %256 = sbr.rel (%p254) target = $region44
        $region43: #{tpu_custom_call.1} parent=35 // pred_region
          %p257 = scmp.lt.s32.totalorder %s23, 1
          %s258 = scalar_select %p257, %s23, 1
          %s259 = scalar_lea.vmem %s1, %s258
        $region44: #{tpu_custom_call.1} parent=35 // pred_fallthru
          _
      $region36: #{tpu_custom_call.1} parent=5 // pred_fallthru
        _
      %p260 = scmp.le.s32.totalorder 1, %s16
      %p261 = scmp.lt.s32.totalorder %s16, 3
      %p262 = pnand %p260, %p261
      %p263 = pneg %p262
      // Predicated region
      $region45: #{tpu_custom_call.1} parent=5 // pred_check
        _
      $region46: #{tpu_custom_call.1} parent=5 // pred_check_branch
        %265 = sbr.rel (%p262) target = $region48
      $region47: #{tpu_custom_call.1} parent=5 // pred_region
        %s266 = ssub.s32 %s16, 1
        %p267 = scmp.lt.s32.totalorder %s25, 1
        %s268 = scalar_select %p267, %s25, 1
        %s269 = smul.addr %s268, 8
        %s270 = scalar_lea.vmem %s0, %s269
        %p271 = pneg %p54
        %p272 = pneg %p51
        %p273 = scmp.lt.s32.totalorder %s25, 1
        %s274 = scalar_select %p273, %s25, 1
        %s275 = scalar_lea.vmem %s1, %s274
        %p276 = pneg %p80
        %p277 = pneg %p77
        %p278 = pneg %p101
        %p279 = pneg %p98
        %p280 = pneg %p122
        %p281 = pneg %p119
        %p282 = pneg %p143
        %p283 = pneg %p140
        %p284 = pneg %p164
        %p285 = pneg %p161
        %p286 = pneg %p185
        %p287 = pneg %p182
        %p288 = pneg %p213
        %p289 = pneg %p210
        %s290 = sand.u32 %s200, 1
        %s291 = scalar_lea.sflag [#allocation6], %s290
        %s292 = sand.u32 %s200, 1
        %s293 = smul.addr %s292, 8
        %s294 = scalar_lea.vmem [#allocation5], %s293
        %p295 = scmp.lt.s32.totalorder %s25, 1
        %s296 = scalar_select %p295, %s25, 1
        %s297 = smul.addr %s296, 8
        %s298 = scalar_lea.vmem %s0, %s297
        %p299 = scmp.lt.s32.totalorder %s25, 1
        %s300 = scalar_select %p299, %s25, 1
        %s301 = scalar_lea.vmem %s1, %s300
        %p302 = scmp.eq.s32.totalorder %s26, 0
        // Predicated region
        $region49: #{tpu_custom_call.1} parent=47 // pred_check
          %p303 = pneg %p302
        $region50: #{tpu_custom_call.1} parent=47 // pred_check_branch
          %305 = sbr.rel (%p303) target = $region52
        $region51: #{tpu_custom_call.1} parent=47 // pred_region
          %v306 = vld [vmem:[%s298] sm:$0xff]
          %v307 = vld [vmem:[%s3] sm:$0xff]
          %v308 = vld [vmem:[%s3 + $0x8] sm:$0xff]
          %v309 = vld [vmem:[%s3 + $0x10] sm:$0xff]
          %v310 = vld [vmem:[%s3 + $0x18] sm:$0xff]
          %vm311 = vcmask 261120
          %v313 = vsel %vm311, %v306, 0
          %315 = vmatprep.subr.mxu0 0.0
          %316 = vmatpush1.msra.mxu0 0.0
          %317 = vmatprep.subr.mxu0 0.0
          %318 = vmatpush1.msra.mxu0 0.0
          %319 = vmatprep.subr.mxu0 0.0
          %320 = vmatpush1.msra.mxu0 0.0
          %321 = vmatprep.subr.mxu0 0.0
          %322 = vmatpush1.msra.mxu0 0.0
          %323 = vmatprep.subr.mxu0 0.0
          %324 = vmatpush1.msra.mxu0 0.0
          %325 = vmatprep.subr.mxu0 0.0
          %326 = vmatpush1.msra.mxu0 0.0
          %327 = vmatprep.subr.mxu0 0.0
          %328 = vmatpush1.msra.mxu0 0.0
          %329 = vmatprep.subr.mxu0 0.0
          %330 = vmatpush1.msra.mxu0 0.0
          %331 = vmatprep.subr.mxu0 0.0
          %332 = vmatpush1.msra.mxu0 0.0
          %333 = vmatprep.subr.mxu0 0.0
          %334 = vmatpush1.msra.mxu0 0.0
          %335 = vmatprep.subr.mxu0 0.0
          %336 = vmatpush1.msra.mxu0 0.0
          %337 = vmatprep.subr.mxu0 0.0
          %338 = vmatpush1.msra.mxu0 0.0
          %339 = vmatprep.subr.mxu0 0.0
          %340 = vmatpush1.msra.mxu0 %v310
          %341 = vmatprep.subr.mxu0 0.0
          %342 = vmatpush1.msra.mxu0 %v309
          %343 = vmatprep.subr.mxu0 0.0
          %344 = vmatpush1.msra.mxu0 %v308
          %345 = vmatprep.subr.mxu0 0.0
          %346 = vmatpush1.msra.mxu0 %v307
          %347 = vmatprep.subr.mxu0 0.0
          %348 = vmatpush2.msra.mxu0 0.0
          %349 = vmatprep.subr.mxu0 0.0
          %350 = vmatpush2.msra.mxu0 0.0
          %351 = vmatprep.subr.mxu0 0.0
          %352 = vmatpush2.msra.mxu0 0.0
          %353 = vmatprep.subr.mxu0 0.0
          %354 = vmatpush2.msra.mxu0 0.0
          %355 = vmatprep.subr.mxu0 0.0
          %356 = vmatpush2.msra.mxu0 0.0
          %357 = vmatprep.subr.mxu0 0.0
          %358 = vmatpush2.msra.mxu0 0.0
          %359 = vmatprep.subr.mxu0 0.0
          %360 = vmatpush2.msra.mxu0 0.0
          %361 = vmatprep.subr.mxu0 0.0
          %362 = vmatpush2.msra.mxu0 0.0
          %363 = vmatprep.subr.mxu0 0.0
          %364 = vmatpush2.msra.mxu0 0.0
          %365 = vmatprep.subr.mxu0 0.0
          %366 = vmatpush2.msra.mxu0 0.0
          %367 = vmatprep.subr.mxu0 0.0
          %368 = vmatpush2.msra.mxu0 0.0
          %369 = vmatprep.subr.mxu0 0.0
          %370 = vmatpush2.msra.mxu0 0.0
          %371 = vmatprep.subr.mxu0 0.0
          %372 = vmatpush2.msra.mxu0 0.0
          %373 = vmatprep.subr.mxu0 0.0
          %374 = vmatpush2.msra.mxu0 0.0
          %375 = vmatprep.subr.mxu0 0.0
          %376 = vmatpush2.msra.mxu0 0.0
          %377 = vmatprep.subr.mxu0 0.0
          %378 = vmatpush2.msra.mxu0 0.0
          %379 = vmatprep.mubr.f32.mxu0 0.0
          %380 = vmatmul.mubr.f32.gmra.mxu0 %v313
          %v381 = vpop.f32.mrf.mxu0
          %v382 = vadd.f32 0.0, %v381
          %v383 = vpop.f32.mrf.mxu0
          %384 = vdwg.mxu0
          %vm385 = vcmask 64512
          %386 = vst.msk [vmem:[#allocation3] sm:$0xff] %vm385, %v382
          %v387 = vld [vmem:[%s4] sm:$0xff]
          %v388 = vld [vmem:[%s4 + $0x8] sm:$0xff]
          %v389 = vld [vmem:[%s4 + $0x10] sm:$0xff]
          %v390 = vld [vmem:[%s4 + $0x18] sm:$0xff]
          %391 = vmatprep.subr.mxu0 0.0
          %392 = vmatpush1.msra.mxu0 0.0
          %393 = vmatprep.subr.mxu0 0.0
          %394 = vmatpush1.msra.mxu0 0.0
          %395 = vmatprep.subr.mxu0 0.0
          %396 = vmatpush1.msra.mxu0 0.0
          %397 = vmatprep.subr.mxu0 0.0
          %398 = vmatpush1.msra.mxu0 0.0
          %399 = vmatprep.subr.mxu0 0.0
          %400 = vmatpush1.msra.mxu0 0.0
          %401 = vmatprep.subr.mxu0 0.0
          %402 = vmatpush1.msra.mxu0 0.0
          %403 = vmatprep.subr.mxu0 0.0
          %404 = vmatpush1.msra.mxu0 0.0
          %405 = vmatprep.subr.mxu0 0.0
          %406 = vmatpush1.msra.mxu0 0.0
          %407 = vmatprep.subr.mxu0 0.0
          %408 = vmatpush1.msra.mxu0 0.0
          %409 = vmatprep.subr.mxu0 0.0
          %410 = vmatpush1.msra.mxu0 0.0
          %411 = vmatprep.subr.mxu0 0.0
          %412 = vmatpush1.msra.mxu0 0.0
          %413 = vmatprep.subr.mxu0 0.0
          %414 = vmatpush1.msra.mxu0 0.0
          %415 = vmatprep.subr.mxu0 0.0
          %416 = vmatpush1.msra.mxu0 %v390
          %417 = vmatprep.subr.mxu0 0.0
          %418 = vmatpush1.msra.mxu0 %v389
          %419 = vmatprep.subr.mxu0 0.0
          %420 = vmatpush1.msra.mxu0 %v388
          %421 = vmatprep.subr.mxu0 0.0
          %422 = vmatpush1.msra.mxu0 %v387
          %423 = vmatprep.subr.mxu0 0.0
          %424 = vmatpush2.msra.mxu0 0.0
          %425 = vmatprep.subr.mxu0 0.0
          %426 = vmatpush2.msra.mxu0 0.0
          %427 = vmatprep.subr.mxu0 0.0
          %428 = vmatpush2.msra.mxu0 0.0
          %429 = vmatprep.subr.mxu0 0.0
          %430 = vmatpush2.msra.mxu0 0.0
          %431 = vmatprep.subr.mxu0 0.0
          %432 = vmatpush2.msra.mxu0 0.0
          %433 = vmatprep.subr.mxu0 0.0
          %434 = vmatpush2.msra.mxu0 0.0
          %435 = vmatprep.subr.mxu0 0.0
          %436 = vmatpush2.msra.mxu0 0.0
          %437 = vmatprep.subr.mxu0 0.0
          %438 = vmatpush2.msra.mxu0 0.0
          %439 = vmatprep.subr.mxu0 0.0
          %440 = vmatpush2.msra.mxu0 0.0
          %441 = vmatprep.subr.mxu0 0.0
          %442 = vmatpush2.msra.mxu0 0.0
          %443 = vmatprep.subr.mxu0 0.0
          %444 = vmatpush2.msra.mxu0 0.0
          %445 = vmatprep.subr.mxu0 0.0
          %446 = vmatpush2.msra.mxu0 0.0
          %447 = vmatprep.subr.mxu0 0.0
          %448 = vmatpush2.msra.mxu0 0.0
          %449 = vmatprep.subr.mxu0 0.0
          %450 = vmatpush2.msra.mxu0 0.0
          %451 = vmatprep.subr.mxu0 0.0
          %452 = vmatpush2.msra.mxu0 0.0
          %453 = vmatprep.subr.mxu0 0.0
          %454 = vmatpush2.msra.mxu0 0.0
          %455 = vmatprep.mubr.f32.mxu0 0.0
          %456 = vmatmul.mubr.f32.gmra.mxu0 %v313
          %v457 = vpop.f32.mrf.mxu0
          %v458 = vadd.f32 0.0, %v457
          %v459 = vpop.f32.mrf.mxu0
          %460 = vdwg.mxu0
          %461 = vst.msk [vmem:[#allocation4] sm:$0xff] %vm385, %v458
          %s462 = scalar_lea.vmem %s3, 32
          %v463 = vld [vmem:[%s462] sm:$0xff]
          %v464 = vld [vmem:[%s462 + $0x8] sm:$0xff]
          %v465 = vld [vmem:[%s462 + $0x10] sm:$0xff]
          %v466 = vld [vmem:[%s462 + $0x18] sm:$0xff]
          %467 = vmatprep.subr.mxu0 0.0
          %468 = vmatpush1.msra.mxu0 0.0
          %469 = vmatprep.subr.mxu0 0.0
          %470 = vmatpush1.msra.mxu0 0.0
          %471 = vmatprep.subr.mxu0 0.0
          %472 = vmatpush1.msra.mxu0 0.0
          %473 = vmatprep.subr.mxu0 0.0
          %474 = vmatpush1.msra.mxu0 0.0
          %475 = vmatprep.subr.mxu0 0.0
          %476 = vmatpush1.msra.mxu0 0.0
          %477 = vmatprep.subr.mxu0 0.0
          %478 = vmatpush1.msra.mxu0 0.0
          %479 = vmatprep.subr.mxu0 0.0
          %480 = vmatpush1.msra.mxu0 0.0
          %481 = vmatprep.subr.mxu0 0.0
          %482 = vmatpush1.msra.mxu0 0.0
          %483 = vmatprep.subr.mxu0 0.0
          %484 = vmatpush1.msra.mxu0 0.0
          %485 = vmatprep.subr.mxu0 0.0
          %486 = vmatpush1.msra.mxu0 0.0
          %487 = vmatprep.subr.mxu0 0.0
          %488 = vmatpush1.msra.mxu0 0.0
          %489 = vmatprep.subr.mxu0 0.0
          %490 = vmatpush1.msra.mxu0 0.0
          %491 = vmatprep.subr.mxu0 0.0
          %492 = vmatpush1.msra.mxu0 %v466
          %493 = vmatprep.subr.mxu0 0.0
          %494 = vmatpush1.msra.mxu0 %v465
          %495 = vmatprep.subr.mxu0 0.0
          %496 = vmatpush1.msra.mxu0 %v464
          %497 = vmatprep.subr.mxu0 0.0
          %498 = vmatpush1.msra.mxu0 %v463
          %499 = vmatprep.subr.mxu0 0.0
          %500 = vmatpush2.msra.mxu0 0.0
          %501 = vmatprep.subr.mxu0 0.0
          %502 = vmatpush2.msra.mxu0 0.0
          %503 = vmatprep.subr.mxu0 0.0
          %504 = vmatpush2.msra.mxu0 0.0
          %505 = vmatprep.subr.mxu0 0.0
          %506 = vmatpush2.msra.mxu0 0.0
          %507 = vmatprep.subr.mxu0 0.0
          %508 = vmatpush2.msra.mxu0 0.0
          %509 = vmatprep.subr.mxu0 0.0
          %510 = vmatpush2.msra.mxu0 0.0
          %511 = vmatprep.subr.mxu0 0.0
          %512 = vmatpush2.msra.mxu0 0.0
          %513 = vmatprep.subr.mxu0 0.0
          %514 = vmatpush2.msra.mxu0 0.0
          %515 = vmatprep.subr.mxu0 0.0
          %516 = vmatpush2.msra.mxu0 0.0
          %517 = vmatprep.subr.mxu0 0.0
          %518 = vmatpush2.msra.mxu0 0.0
          %519 = vmatprep.subr.mxu0 0.0
          %520 = vmatpush2.msra.mxu0 0.0
          %521 = vmatprep.subr.mxu0 0.0
          %522 = vmatpush2.msra.mxu0 0.0
          %523 = vmatprep.subr.mxu0 0.0
          %524 = vmatpush2.msra.mxu0 0.0
          %525 = vmatprep.subr.mxu0 0.0
          %526 = vmatpush2.msra.mxu0 0.0
          %527 = vmatprep.subr.mxu0 0.0
          %528 = vmatpush2.msra.mxu0 0.0
          %529 = vmatprep.subr.mxu0 0.0
          %530 = vmatpush2.msra.mxu0 0.0
          %531 = vmatprep.mubr.f32.mxu0 0.0
          %532 = vmatmul.mubr.f32.gmra.mxu0 %v313
          %v533 = vpop.f32.mrf.mxu0
          %v534 = vadd.f32 0.0, %v533
          %v535 = vpop.f32.mrf.mxu0
          %536 = vdwg.mxu0
          %s537 = scalar_lea.vmem [#allocation3], 8
          %538 = vst.msk [vmem:[%s537] sm:$0xff] %vm385, %v534
          %s539 = scalar_lea.vmem %s4, 32
          %v540 = vld [vmem:[%s539] sm:$0xff]
          %v541 = vld [vmem:[%s539 + $0x8] sm:$0xff]
          %v542 = vld [vmem:[%s539 + $0x10] sm:$0xff]
          %v543 = vld [vmem:[%s539 + $0x18] sm:$0xff]
          %544 = vmatprep.subr.mxu0 0.0
          %545 = vmatpush1.msra.mxu0 0.0
          %546 = vmatprep.subr.mxu0 0.0
          %547 = vmatpush1.msra.mxu0 0.0
          %548 = vmatprep.subr.mxu0 0.0
          %549 = vmatpush1.msra.mxu0 0.0
          %550 = vmatprep.subr.mxu0 0.0
          %551 = vmatpush1.msra.mxu0 0.0
          %552 = vmatprep.subr.mxu0 0.0
          %553 = vmatpush1.msra.mxu0 0.0
          %554 = vmatprep.subr.mxu0 0.0
          %555 = vmatpush1.msra.mxu0 0.0
          %556 = vmatprep.subr.mxu0 0.0
          %557 = vmatpush1.msra.mxu0 0.0
          %558 = vmatprep.subr.mxu0 0.0
          %559 = vmatpush1.msra.mxu0 0.0
          %560 = vmatprep.subr.mxu0 0.0
          %561 = vmatpush1.msra.mxu0 0.0
          %562 = vmatprep.subr.mxu0 0.0
          %563 = vmatpush1.msra.mxu0 0.0
          %564 = vmatprep.subr.mxu0 0.0
          %565 = vmatpush1.msra.mxu0 0.0
          %566 = vmatprep.subr.mxu0 0.0
          %567 = vmatpush1.msra.mxu0 0.0
          %568 = vmatprep.subr.mxu0 0.0
          %569 = vmatpush1.msra.mxu0 %v543
          %570 = vmatprep.subr.mxu0 0.0
          %571 = vmatpush1.msra.mxu0 %v542
          %572 = vmatprep.subr.mxu0 0.0
          %573 = vmatpush1.msra.mxu0 %v541
          %574 = vmatprep.subr.mxu0 0.0
          %575 = vmatpush1.msra.mxu0 %v540
          %576 = vmatprep.subr.mxu0 0.0
          %577 = vmatpush2.msra.mxu0 0.0
          %578 = vmatprep.subr.mxu0 0.0
          %579 = vmatpush2.msra.mxu0 0.0
          %580 = vmatprep.subr.mxu0 0.0
          %581 = vmatpush2.msra.mxu0 0.0
          %582 = vmatprep.subr.mxu0 0.0
          %583 = vmatpush2.msra.mxu0 0.0
          %584 = vmatprep.subr.mxu0 0.0
          %585 = vmatpush2.msra.mxu0 0.0
          %586 = vmatprep.subr.mxu0 0.0
          %587 = vmatpush2.msra.mxu0 0.0
          %588 = vmatprep.subr.mxu0 0.0
          %589 = vmatpush2.msra.mxu0 0.0
          %590 = vmatprep.subr.mxu0 0.0
          %591 = vmatpush2.msra.mxu0 0.0
          %592 = vmatprep.subr.mxu0 0.0
          %593 = vmatpush2.msra.mxu0 0.0
          %594 = vmatprep.subr.mxu0 0.0
          %595 = vmatpush2.msra.mxu0 0.0
          %596 = vmatprep.subr.mxu0 0.0
          %597 = vmatpush2.msra.mxu0 0.0
          %598 = vmatprep.subr.mxu0 0.0
          %599 = vmatpush2.msra.mxu0 0.0
          %600 = vmatprep.subr.mxu0 0.0
          %601 = vmatpush2.msra.mxu0 0.0
          %602 = vmatprep.subr.mxu0 0.0
          %603 = vmatpush2.msra.mxu0 0.0
          %604 = vmatprep.subr.mxu0 0.0
          %605 = vmatpush2.msra.mxu0 0.0
          %606 = vmatprep.subr.mxu0 0.0
          %607 = vmatpush2.msra.mxu0 0.0
          %608 = vmatprep.mubr.f32.mxu0 0.0
          %609 = vmatmul.mubr.f32.gmra.mxu0 %v313
          %v610 = vpop.f32.mrf.mxu0
          %v611 = vadd.f32 0.0, %v610
          %v612 = vpop.f32.mrf.mxu0
          %613 = vdwg.mxu0
          %s614 = scalar_lea.vmem [#allocation4], 8
          %615 = vst.msk [vmem:[%s614] sm:$0xff] %vm385, %v611
          %s616 = scalar_lea.vmem %s3, 64
          %v617 = vld [vmem:[%s616] sm:$0xff]
          %v618 = vld [vmem:[%s616 + $0x8] sm:$0xff]
          %v619 = vld [vmem:[%s616 + $0x10] sm:$0xff]
          %v620 = vld [vmem:[%s616 + $0x18] sm:$0xff]
          %621 = vmatprep.subr.mxu0 0.0
          %622 = vmatpush1.msra.mxu0 0.0
          %623 = vmatprep.subr.mxu0 0.0
          %624 = vmatpush1.msra.mxu0 0.0
          %625 = vmatprep.subr.mxu0 0.0
          %626 = vmatpush1.msra.mxu0 0.0
          %627 = vmatprep.subr.mxu0 0.0
          %628 = vmatpush1.msra.mxu0 0.0
          %629 = vmatprep.subr.mxu0 0.0
          %630 = vmatpush1.msra.mxu0 0.0
          %631 = vmatprep.subr.mxu0 0.0
          %632 = vmatpush1.msra.mxu0 0.0
          %633 = vmatprep.subr.mxu0 0.0
          %634 = vmatpush1.msra.mxu0 0.0
          %635 = vmatprep.subr.mxu0 0.0
          %636 = vmatpush1.msra.mxu0 0.0
          %637 = vmatprep.subr.mxu0 0.0
          %638 = vmatpush1.msra.mxu0 0.0
          %639 = vmatprep.subr.mxu0 0.0
          %640 = vmatpush1.msra.mxu0 0.0
          %641 = vmatprep.subr.mxu0 0.0
          %642 = vmatpush1.msra.mxu0 0.0
          %643 = vmatprep.subr.mxu0 0.0
          %644 = vmatpush1.msra.mxu0 0.0
          %645 = vmatprep.subr.mxu0 0.0
          %646 = vmatpush1.msra.mxu0 %v620
          %647 = vmatprep.subr.mxu0 0.0
          %648 = vmatpush1.msra.mxu0 %v619
          %649 = vmatprep.subr.mxu0 0.0
          %650 = vmatpush1.msra.mxu0 %v618
          %651 = vmatprep.subr.mxu0 0.0
          %652 = vmatpush1.msra.mxu0 %v617
          %653 = vmatprep.subr.mxu0 0.0
          %654 = vmatpush2.msra.mxu0 0.0
          %655 = vmatprep.subr.mxu0 0.0
          %656 = vmatpush2.msra.mxu0 0.0
          %657 = vmatprep.subr.mxu0 0.0
          %658 = vmatpush2.msra.mxu0 0.0
          %659 = vmatprep.subr.mxu0 0.0
          %660 = vmatpush2.msra.mxu0 0.0
          %661 = vmatprep.subr.mxu0 0.0
          %662 = vmatpush2.msra.mxu0 0.0
          %663 = vmatprep.subr.mxu0 0.0
          %664 = vmatpush2.msra.mxu0 0.0
          %665 = vmatprep.subr.mxu0 0.0
          %666 = vmatpush2.msra.mxu0 0.0
          %667 = vmatprep.subr.mxu0 0.0
          %668 = vmatpush2.msra.mxu0 0.0
          %669 = vmatprep.subr.mxu0 0.0
          %670 = vmatpush2.msra.mxu0 0.0
          %671 = vmatprep.subr.mxu0 0.0
          %672 = vmatpush2.msra.mxu0 0.0
          %673 = vmatprep.subr.mxu0 0.0
          %674 = vmatpush2.msra.mxu0 0.0
          %675 = vmatprep.subr.mxu0 0.0
          %676 = vmatpush2.msra.mxu0 0.0
          %677 = vmatprep.subr.mxu0 0.0
          %678 = vmatpush2.msra.mxu0 0.0
          %679 = vmatprep.subr.mxu0 0.0
          %680 = vmatpush2.msra.mxu0 0.0
          %681 = vmatprep.subr.mxu0 0.0
          %682 = vmatpush2.msra.mxu0 0.0
          %683 = vmatprep.subr.mxu0 0.0
          %684 = vmatpush2.msra.mxu0 0.0
          %685 = vmatprep.mubr.f32.mxu0 0.0
          %686 = vmatmul.mubr.f32.gmra.mxu0 %v313
          %v687 = vpop.f32.mrf.mxu0
          %v688 = vadd.f32 0.0, %v687
          %v689 = vpop.f32.mrf.mxu0
          %690 = vdwg.mxu0
          %s691 = scalar_lea.vmem [#allocation3], 16
          %692 = vst.msk [vmem:[%s691] sm:$0xff] %vm385, %v688
          %s693 = scalar_lea.vmem %s4, 64
          %v694 = vld [vmem:[%s693] sm:$0xff]
          %v695 = vld [vmem:[%s693 + $0x8] sm:$0xff]
          %v696 = vld [vmem:[%s693 + $0x10] sm:$0xff]
          %v697 = vld [vmem:[%s693 + $0x18] sm:$0xff]
          %698 = vmatprep.subr.mxu0 0.0
          %699 = vmatpush1.msra.mxu0 0.0
          %700 = vmatprep.subr.mxu0 0.0
          %701 = vmatpush1.msra.mxu0 0.0
          %702 = vmatprep.subr.mxu0 0.0
          %703 = vmatpush1.msra.mxu0 0.0
          %704 = vmatprep.subr.mxu0 0.0
          %705 = vmatpush1.msra.mxu0 0.0
          %706 = vmatprep.subr.mxu0 0.0
          %707 = vmatpush1.msra.mxu0 0.0
          %708 = vmatprep.subr.mxu0 0.0
          %709 = vmatpush1.msra.mxu0 0.0
          %710 = vmatprep.subr.mxu0 0.0
          %711 = vmatpush1.msra.mxu0 0.0
          %712 = vmatprep.subr.mxu0 0.0
          %713 = vmatpush1.msra.mxu0 0.0
          %714 = vmatprep.subr.mxu0 0.0
          %715 = vmatpush1.msra.mxu0 0.0
          %716 = vmatprep.subr.mxu0 0.0
          %717 = vmatpush1.msra.mxu0 0.0
          %718 = vmatprep.subr.mxu0 0.0
          %719 = vmatpush1.msra.mxu0 0.0
          %720 = vmatprep.subr.mxu0 0.0
          %721 = vmatpush1.msra.mxu0 0.0
          %722 = vmatprep.subr.mxu0 0.0
          %723 = vmatpush1.msra.mxu0 %v697
          %724 = vmatprep.subr.mxu0 0.0
          %725 = vmatpush1.msra.mxu0 %v696
          %726 = vmatprep.subr.mxu0 0.0
          %727 = vmatpush1.msra.mxu0 %v695
          %728 = vmatprep.subr.mxu0 0.0
          %729 = vmatpush1.msra.mxu0 %v694
          %730 = vmatprep.subr.mxu0 0.0
          %731 = vmatpush2.msra.mxu0 0.0
          %732 = vmatprep.subr.mxu0 0.0
          %733 = vmatpush2.msra.mxu0 0.0
          %734 = vmatprep.subr.mxu0 0.0
          %735 = vmatpush2.msra.mxu0 0.0
          %736 = vmatprep.subr.mxu0 0.0
          %737 = vmatpush2.msra.mxu0 0.0
          %738 = vmatprep.subr.mxu0 0.0
          %739 = vmatpush2.msra.mxu0 0.0
          %740 = vmatprep.subr.mxu0 0.0
          %741 = vmatpush2.msra.mxu0 0.0
          %742 = vmatprep.subr.mxu0 0.0
          %743 = vmatpush2.msra.mxu0 0.0
          %744 = vmatprep.subr.mxu0 0.0
          %745 = vmatpush2.msra.mxu0 0.0
          %746 = vmatprep.subr.mxu0 0.0
          %747 = vmatpush2.msra.mxu0 0.0
          %748 = vmatprep.subr.mxu0 0.0
          %749 = vmatpush2.msra.mxu0 0.0
          %750 = vmatprep.subr.mxu0 0.0
          %751 = vmatpush2.msra.mxu0 0.0
          %752 = vmatprep.subr.mxu0 0.0
          %753 = vmatpush2.msra.mxu0 0.0
          %754 = vmatprep.subr.mxu0 0.0
          %755 = vmatpush2.msra.mxu0 0.0
          %756 = vmatprep.subr.mxu0 0.0
          %757 = vmatpush2.msra.mxu0 0.0
          %758 = vmatprep.subr.mxu0 0.0
          %759 = vmatpush2.msra.mxu0 0.0
          %760 = vmatprep.subr.mxu0 0.0
          %761 = vmatpush2.msra.mxu0 0.0
          %762 = vmatprep.mubr.f32.mxu0 0.0
          %763 = vmatmul.mubr.f32.gmra.mxu0 %v313
          %v764 = vpop.f32.mrf.mxu0
          %v765 = vadd.f32 0.0, %v764
          %v766 = vpop.f32.mrf.mxu0
          %767 = vdwg.mxu0
          %s768 = scalar_lea.vmem [#allocation4], 16
          %769 = vst.msk [vmem:[%s768] sm:$0xff] %vm385, %v765
          %s770 = scalar_lea.vmem %s3, 96
          %v771 = vld [vmem:[%s770] sm:$0xff]
          %v772 = vld [vmem:[%s770 + $0x8] sm:$0xff]
          %v773 = vld [vmem:[%s770 + $0x10] sm:$0xff]
          %v774 = vld [vmem:[%s770 + $0x18] sm:$0xff]
          %775 = vmatprep.subr.mxu0 0.0
          %776 = vmatpush1.msra.mxu0 0.0
          %777 = vmatprep.subr.mxu0 0.0
          %778 = vmatpush1.msra.mxu0 0.0
          %779 = vmatprep.subr.mxu0 0.0
          %780 = vmatpush1.msra.mxu0 0.0
          %781 = vmatprep.subr.mxu0 0.0
          %782 = vmatpush1.msra.mxu0 0.0
          %783 = vmatprep.subr.mxu0 0.0
          %784 = vmatpush1.msra.mxu0 0.0
          %785 = vmatprep.subr.mxu0 0.0
          %786 = vmatpush1.msra.mxu0 0.0
          %787 = vmatprep.subr.mxu0 0.0
          %788 = vmatpush1.msra.mxu0 0.0
          %789 = vmatprep.subr.mxu0 0.0
          %790 = vmatpush1.msra.mxu0 0.0
          %791 = vmatprep.subr.mxu0 0.0
          %792 = vmatpush1.msra.mxu0 0.0
          %793 = vmatprep.subr.mxu0 0.0
          %794 = vmatpush1.msra.mxu0 0.0
          %795 = vmatprep.subr.mxu0 0.0
          %796 = vmatpush1.msra.mxu0 0.0
          %797 = vmatprep.subr.mxu0 0.0
          %798 = vmatpush1.msra.mxu0 0.0
          %799 = vmatprep.subr.mxu0 0.0
          %800 = vmatpush1.msra.mxu0 %v774
          %801 = vmatprep.subr.mxu0 0.0
          %802 = vmatpush1.msra.mxu0 %v773
          %803 = vmatprep.subr.mxu0 0.0
          %804 = vmatpush1.msra.mxu0 %v772
          %805 = vmatprep.subr.mxu0 0.0
          %806 = vmatpush1.msra.mxu0 %v771
          %807 = vmatprep.subr.mxu0 0.0
          %808 = vmatpush2.msra.mxu0 0.0
          %809 = vmatprep.subr.mxu0 0.0
          %810 = vmatpush2.msra.mxu0 0.0
          %811 = vmatprep.subr.mxu0 0.0
          %812 = vmatpush2.msra.mxu0 0.0
          %813 = vmatprep.subr.mxu0 0.0
          %814 = vmatpush2.msra.mxu0 0.0
          %815 = vmatprep.subr.mxu0 0.0
          %816 = vmatpush2.msra.mxu0 0.0
          %817 = vmatprep.subr.mxu0 0.0
          %818 = vmatpush2.msra.mxu0 0.0
          %819 = vmatprep.subr.mxu0 0.0
          %820 = vmatpush2.msra.mxu0 0.0
          %821 = vmatprep.subr.mxu0 0.0
          %822 = vmatpush2.msra.mxu0 0.0
          %823 = vmatprep.subr.mxu0 0.0
          %824 = vmatpush2.msra.mxu0 0.0
          %825 = vmatprep.subr.mxu0 0.0
          %826 = vmatpush2.msra.mxu0 0.0
          %827 = vmatprep.subr.mxu0 0.0
          %828 = vmatpush2.msra.mxu0 0.0
          %829 = vmatprep.subr.mxu0 0.0
          %830 = vmatpush2.msra.mxu0 0.0
          %831 = vmatprep.subr.mxu0 0.0
          %832 = vmatpush2.msra.mxu0 0.0
          %833 = vmatprep.subr.mxu0 0.0
          %834 = vmatpush2.msra.mxu0 0.0
          %835 = vmatprep.subr.mxu0 0.0
          %836 = vmatpush2.msra.mxu0 0.0
          %837 = vmatprep.subr.mxu0 0.0
          %838 = vmatpush2.msra.mxu0 0.0
          %839 = vmatprep.mubr.f32.mxu0 0.0
          %840 = vmatmul.mubr.f32.gmra.mxu0 %v313
          %v841 = vpop.f32.mrf.mxu0
          %v842 = vadd.f32 0.0, %v841
          %v843 = vpop.f32.mrf.mxu0
          %844 = vdwg.mxu0
          %s845 = scalar_lea.vmem [#allocation3], 24
          %846 = vst.msk [vmem:[%s845] sm:$0xff] %vm385, %v842
          %s847 = scalar_lea.vmem %s4, 96
          %v848 = vld [vmem:[%s847] sm:$0xff]
          %v849 = vld [vmem:[%s847 + $0x8] sm:$0xff]
          %v850 = vld [vmem:[%s847 + $0x10] sm:$0xff]
          %v851 = vld [vmem:[%s847 + $0x18] sm:$0xff]
          %852 = vmatprep.subr.mxu0 0.0
          %853 = vmatpush1.msra.mxu0 0.0
          %854 = vmatprep.subr.mxu0 0.0
          %855 = vmatpush1.msra.mxu0 0.0
          %856 = vmatprep.subr.mxu0 0.0
          %857 = vmatpush1.msra.mxu0 0.0
          %858 = vmatprep.subr.mxu0 0.0
          %859 = vmatpush1.msra.mxu0 0.0
          %860 = vmatprep.subr.mxu0 0.0
          %861 = vmatpush1.msra.mxu0 0.0
          %862 = vmatprep.subr.mxu0 0.0
          %863 = vmatpush1.msra.mxu0 0.0
          %864 = vmatprep.subr.mxu0 0.0
          %865 = vmatpush1.msra.mxu0 0.0
          %866 = vmatprep.subr.mxu0 0.0
          %867 = vmatpush1.msra.mxu0 0.0
          %868 = vmatprep.subr.mxu0 0.0
          %869 = vmatpush1.msra.mxu0 0.0
          %870 = vmatprep.subr.mxu0 0.0
          %871 = vmatpush1.msra.mxu0 0.0
          %872 = vmatprep.subr.mxu0 0.0
          %873 = vmatpush1.msra.mxu0 0.0
          %874 = vmatprep.subr.mxu0 0.0
          %875 = vmatpush1.msra.mxu0 0.0
          %876 = vmatprep.subr.mxu0 0.0
          %877 = vmatpush1.msra.mxu0 %v851
          %878 = vmatprep.subr.mxu0 0.0
          %879 = vmatpush1.msra.mxu0 %v850
          %880 = vmatprep.subr.mxu0 0.0
          %881 = vmatpush1.msra.mxu0 %v849
          %882 = vmatprep.subr.mxu0 0.0
          %883 = vmatpush1.msra.mxu0 %v848
          %884 = vmatprep.subr.mxu0 0.0
          %885 = vmatpush2.msra.mxu0 0.0
          %886 = vmatprep.subr.mxu0 0.0
          %887 = vmatpush2.msra.mxu0 0.0
          %888 = vmatprep.subr.mxu0 0.0
          %889 = vmatpush2.msra.mxu0 0.0
          %890 = vmatprep.subr.mxu0 0.0
          %891 = vmatpush2.msra.mxu0 0.0
          %892 = vmatprep.subr.mxu0 0.0
          %893 = vmatpush2.msra.mxu0 0.0
          %894 = vmatprep.subr.mxu0 0.0
          %895 = vmatpush2.msra.mxu0 0.0
          %896 = vmatprep.subr.mxu0 0.0
          %897 = vmatpush2.msra.mxu0 0.0
          %898 = vmatprep.subr.mxu0 0.0
          %899 = vmatpush2.msra.mxu0 0.0
          %900 = vmatprep.subr.mxu0 0.0
          %901 = vmatpush2.msra.mxu0 0.0
          %902 = vmatprep.subr.mxu0 0.0
          %903 = vmatpush2.msra.mxu0 0.0
          %904 = vmatprep.subr.mxu0 0.0
          %905 = vmatpush2.msra.mxu0 0.0
          %906 = vmatprep.subr.mxu0 0.0
          %907 = vmatpush2.msra.mxu0 0.0
          %908 = vmatprep.subr.mxu0 0.0
          %909 = vmatpush2.msra.mxu0 0.0
          %910 = vmatprep.subr.mxu0 0.0
          %911 = vmatpush2.msra.mxu0 0.0
          %912 = vmatprep.subr.mxu0 0.0
          %913 = vmatpush2.msra.mxu0 0.0
          %914 = vmatprep.subr.mxu0 0.0
          %915 = vmatpush2.msra.mxu0 0.0
          %916 = vmatprep.mubr.f32.mxu0 0.0
          %917 = vmatmul.mubr.f32.gmra.mxu0 %v313
          %v918 = vpop.f32.mrf.mxu0
          %v919 = vadd.f32 0.0, %v918
          %v920 = vpop.f32.mrf.mxu0
          %921 = vdwg.mxu0
          %s922 = scalar_lea.vmem [#allocation4], 24
          %923 = vst.msk [vmem:[%s922] sm:$0xff] %vm385, %v919
        $region52: #{tpu_custom_call.1} parent=47 // pred_fallthru
          _
        %v924 = vld [vmem:[%s298] sm:$0xff]
        %v925 = vld [vmem:[%s2] sm:$0xff]
        %v926 = vld [vmem:[%s2 + $0x8] sm:$0xff]
        %v927 = vld [vmem:[%s2 + $0x10] sm:$0xff]
        %v928 = vld [vmem:[%s2 + $0x18] sm:$0xff]
        %vm929 = vcmask 261120
        %v931 = vsel %vm929, %v924, 0
        %933 = vmatprep.subr.mxu0 0.0
        %934 = vmatpush1.msra.mxu0 0.0
        %935 = vmatprep.subr.mxu0 0.0
        %936 = vmatpush1.msra.mxu0 0.0
        %937 = vmatprep.subr.mxu0 0.0
        %938 = vmatpush1.msra.mxu0 0.0
        %939 = vmatprep.subr.mxu0 0.0
        %940 = vmatpush1.msra.mxu0 0.0
        %941 = vmatprep.subr.mxu0 0.0
        %942 = vmatpush1.msra.mxu0 0.0
        %943 = vmatprep.subr.mxu0 0.0
        %944 = vmatpush1.msra.mxu0 0.0
        %945 = vmatprep.subr.mxu0 0.0
        %946 = vmatpush1.msra.mxu0 0.0
        %947 = vmatprep.subr.mxu0 0.0
        %948 = vmatpush1.msra.mxu0 0.0
        %949 = vmatprep.subr.mxu0 0.0
        %950 = vmatpush1.msra.mxu0 0.0
        %951 = vmatprep.subr.mxu0 0.0
        %952 = vmatpush1.msra.mxu0 0.0
        %953 = vmatprep.subr.mxu0 0.0
        %954 = vmatpush1.msra.mxu0 0.0
        %955 = vmatprep.subr.mxu0 0.0
        %956 = vmatpush1.msra.mxu0 0.0
        %957 = vmatprep.subr.mxu0 0.0
        %958 = vmatpush1.msra.mxu0 %v928
        %959 = vmatprep.subr.mxu0 0.0
        %960 = vmatpush1.msra.mxu0 %v927
        %961 = vmatprep.subr.mxu0 0.0
        %962 = vmatpush1.msra.mxu0 %v926
        %963 = vmatprep.subr.mxu0 0.0
        %964 = vmatpush1.msra.mxu0 %v925
        %965 = vmatprep.subr.mxu0 0.0
        %966 = vmatpush2.msra.mxu0 0.0
        %967 = vmatprep.subr.mxu0 0.0
        %968 = vmatpush2.msra.mxu0 0.0
        %969 = vmatprep.subr.mxu0 0.0
        %970 = vmatpush2.msra.mxu0 0.0
        %971 = vmatprep.subr.mxu0 0.0
        %972 = vmatpush2.msra.mxu0 0.0
        %973 = vmatprep.subr.mxu0 0.0
        %974 = vmatpush2.msra.mxu0 0.0
        %975 = vmatprep.subr.mxu0 0.0
        %976 = vmatpush2.msra.mxu0 0.0
        %977 = vmatprep.subr.mxu0 0.0
        %978 = vmatpush2.msra.mxu0 0.0
        %979 = vmatprep.subr.mxu0 0.0
        %980 = vmatpush2.msra.mxu0 0.0
        %981 = vmatprep.subr.mxu0 0.0
        %982 = vmatpush2.msra.mxu0 0.0
        %983 = vmatprep.subr.mxu0 0.0
        %984 = vmatpush2.msra.mxu0 0.0
        %985 = vmatprep.subr.mxu0 0.0
        %986 = vmatpush2.msra.mxu0 0.0
        %987 = vmatprep.subr.mxu0 0.0
        %988 = vmatpush2.msra.mxu0 0.0
        %989 = vmatprep.subr.mxu0 0.0
        %990 = vmatpush2.msra.mxu0 0.0
        %991 = vmatprep.subr.mxu0 0.0
        %992 = vmatpush2.msra.mxu0 0.0
        %993 = vmatprep.subr.mxu0 0.0
        %994 = vmatpush2.msra.mxu0 0.0
        %995 = vmatprep.subr.mxu0 0.0
        %996 = vmatpush2.msra.mxu0 0.0
        %997 = vmatprep.mubr.f32.mxu0 0.0
        %998 = vmatmul.mubr.f32.gmra.mxu0 %v931
        %v999 = vpop.f32.mrf.mxu0
        %v1000 = vadd.f32 0.0, %v999
        %v1001 = vpop.f32.mrf.mxu0
        %1002 = vdwg.mxu0
        %vm1003 = vcmask 64512
        %1004 = vst.msk [vmem:[#allocation2] sm:$0xff] %vm1003, %v1000
        %s1005 = scalar_lea.vmem %s2, 32
        %v1006 = vld [vmem:[%s1005] sm:$0xff]
        %v1007 = vld [vmem:[%s1005 + $0x8] sm:$0xff]
        %v1008 = vld [vmem:[%s1005 + $0x10] sm:$0xff]
        %v1009 = vld [vmem:[%s1005 + $0x18] sm:$0xff]
        %1010 = vmatprep.subr.mxu0 0.0
        %1011 = vmatpush1.msra.mxu0 0.0
        %1012 = vmatprep.subr.mxu0 0.0
        %1013 = vmatpush1.msra.mxu0 0.0
        %1014 = vmatprep.subr.mxu0 0.0
        %1015 = vmatpush1.msra.mxu0 0.0
        %1016 = vmatprep.subr.mxu0 0.0
        %1017 = vmatpush1.msra.mxu0 0.0
        %1018 = vmatprep.subr.mxu0 0.0
        %1019 = vmatpush1.msra.mxu0 0.0
        %1020 = vmatprep.subr.mxu0 0.0
        %1021 = vmatpush1.msra.mxu0 0.0
        %1022 = vmatprep.subr.mxu0 0.0
        %1023 = vmatpush1.msra.mxu0 0.0
        %1024 = vmatprep.subr.mxu0 0.0
        %1025 = vmatpush1.msra.mxu0 0.0
        %1026 = vmatprep.subr.mxu0 0.0
        %1027 = vmatpush1.msra.mxu0 0.0
        %1028 = vmatprep.subr.mxu0 0.0
        %1029 = vmatpush1.msra.mxu0 0.0
        %1030 = vmatprep.subr.mxu0 0.0
        %1031 = vmatpush1.msra.mxu0 0.0
        %1032 = vmatprep.subr.mxu0 0.0
        %1033 = vmatpush1.msra.mxu0 0.0
        %1034 = vmatprep.subr.mxu0 0.0
        %1035 = vmatpush1.msra.mxu0 %v1009
        %1036 = vmatprep.subr.mxu0 0.0
        %1037 = vmatpush1.msra.mxu0 %v1008
        %1038 = vmatprep.subr.mxu0 0.0
        %1039 = vmatpush1.msra.mxu0 %v1007
        %1040 = vmatprep.subr.mxu0 0.0
        %1041 = vmatpush1.msra.mxu0 %v1006
        %1042 = vmatprep.subr.mxu0 0.0
        %1043 = vmatpush2.msra.mxu0 0.0
        %1044 = vmatprep.subr.mxu0 0.0
        %1045 = vmatpush2.msra.mxu0 0.0
        %1046 = vmatprep.subr.mxu0 0.0
        %1047 = vmatpush2.msra.mxu0 0.0
        %1048 = vmatprep.subr.mxu0 0.0
        %1049 = vmatpush2.msra.mxu0 0.0
        %1050 = vmatprep.subr.mxu0 0.0
        %1051 = vmatpush2.msra.mxu0 0.0
        %1052 = vmatprep.subr.mxu0 0.0
        %1053 = vmatpush2.msra.mxu0 0.0
        %1054 = vmatprep.subr.mxu0 0.0
        %1055 = vmatpush2.msra.mxu0 0.0
        %1056 = vmatprep.subr.mxu0 0.0
        %1057 = vmatpush2.msra.mxu0 0.0
        %1058 = vmatprep.subr.mxu0 0.0
        %1059 = vmatpush2.msra.mxu0 0.0
        %1060 = vmatprep.subr.mxu0 0.0
        %1061 = vmatpush2.msra.mxu0 0.0
        %1062 = vmatprep.subr.mxu0 0.0
        %1063 = vmatpush2.msra.mxu0 0.0
        %1064 = vmatprep.subr.mxu0 0.0
        %1065 = vmatpush2.msra.mxu0 0.0
        %1066 = vmatprep.subr.mxu0 0.0
        %1067 = vmatpush2.msra.mxu0 0.0
        %1068 = vmatprep.subr.mxu0 0.0
        %1069 = vmatpush2.msra.mxu0 0.0
        %1070 = vmatprep.subr.mxu0 0.0
        %1071 = vmatpush2.msra.mxu0 0.0
        %1072 = vmatprep.subr.mxu0 0.0
        %1073 = vmatpush2.msra.mxu0 0.0
        %1074 = vmatprep.mubr.f32.mxu0 0.0
        %1075 = vmatmul.mubr.f32.gmra.mxu0 %v931
        %v1076 = vpop.f32.mrf.mxu0
        %v1077 = vadd.f32 0.0, %v1076
        %v1078 = vpop.f32.mrf.mxu0
        %1079 = vdwg.mxu0
        %s1080 = scalar_lea.vmem [#allocation2], 8
        %1081 = vst.msk [vmem:[%s1080] sm:$0xff] %vm1003, %v1077
        %s1082 = scalar_lea.vmem %s2, 64
        %v1083 = vld [vmem:[%s1082] sm:$0xff]
        %v1084 = vld [vmem:[%s1082 + $0x8] sm:$0xff]
        %v1085 = vld [vmem:[%s1082 + $0x10] sm:$0xff]
        %v1086 = vld [vmem:[%s1082 + $0x18] sm:$0xff]
        %1087 = vmatprep.subr.mxu0 0.0
        %1088 = vmatpush1.msra.mxu0 0.0
        %1089 = vmatprep.subr.mxu0 0.0
        %1090 = vmatpush1.msra.mxu0 0.0
        %1091 = vmatprep.subr.mxu0 0.0
        %1092 = vmatpush1.msra.mxu0 0.0
        %1093 = vmatprep.subr.mxu0 0.0
        %1094 = vmatpush1.msra.mxu0 0.0
        %1095 = vmatprep.subr.mxu0 0.0
        %1096 = vmatpush1.msra.mxu0 0.0
        %1097 = vmatprep.subr.mxu0 0.0
        %1098 = vmatpush1.msra.mxu0 0.0
        %1099 = vmatprep.subr.mxu0 0.0
        %1100 = vmatpush1.msra.mxu0 0.0
        %1101 = vmatprep.subr.mxu0 0.0
        %1102 = vmatpush1.msra.mxu0 0.0
        %1103 = vmatprep.subr.mxu0 0.0
        %1104 = vmatpush1.msra.mxu0 0.0
        %1105 = vmatprep.subr.mxu0 0.0
        %1106 = vmatpush1.msra.mxu0 0.0
        %1107 = vmatprep.subr.mxu0 0.0
        %1108 = vmatpush1.msra.mxu0 0.0
        %1109 = vmatprep.subr.mxu0 0.0
        %1110 = vmatpush1.msra.mxu0 0.0
        %1111 = vmatprep.subr.mxu0 0.0
        %1112 = vmatpush1.msra.mxu0 %v1086
        %1113 = vmatprep.subr.mxu0 0.0
        %1114 = vmatpush1.msra.mxu0 %v1085
        %1115 = vmatprep.subr.mxu0 0.0
        %1116 = vmatpush1.msra.mxu0 %v1084
        %1117 = vmatprep.subr.mxu0 0.0
        %1118 = vmatpush1.msra.mxu0 %v1083
        %1119 = vmatprep.subr.mxu0 0.0
        %1120 = vmatpush2.msra.mxu0 0.0
        %1121 = vmatprep.subr.mxu0 0.0
        %1122 = vmatpush2.msra.mxu0 0.0
        %1123 = vmatprep.subr.mxu0 0.0
        %1124 = vmatpush2.msra.mxu0 0.0
        %1125 = vmatprep.subr.mxu0 0.0
        %1126 = vmatpush2.msra.mxu0 0.0
        %1127 = vmatprep.subr.mxu0 0.0
        %1128 = vmatpush2.msra.mxu0 0.0
        %1129 = vmatprep.subr.mxu0 0.0
        %1130 = vmatpush2.msra.mxu0 0.0
        %1131 = vmatprep.subr.mxu0 0.0
        %1132 = vmatpush2.msra.mxu0 0.0
        %1133 = vmatprep.subr.mxu0 0.0
        %1134 = vmatpush2.msra.mxu0 0.0
        %1135 = vmatprep.subr.mxu0 0.0
        %1136 = vmatpush2.msra.mxu0 0.0
        %1137 = vmatprep.subr.mxu0 0.0
        %1138 = vmatpush2.msra.mxu0 0.0
        %1139 = vmatprep.subr.mxu0 0.0
        %1140 = vmatpush2.msra.mxu0 0.0
        %1141 = vmatprep.subr.mxu0 0.0
        %1142 = vmatpush2.msra.mxu0 0.0
        %1143 = vmatprep.subr.mxu0 0.0
        %1144 = vmatpush2.msra.mxu0 0.0
        %1145 = vmatprep.subr.mxu0 0.0
        %1146 = vmatpush2.msra.mxu0 0.0
        %1147 = vmatprep.subr.mxu0 0.0
        %1148 = vmatpush2.msra.mxu0 0.0
        %1149 = vmatprep.subr.mxu0 0.0
        %1150 = vmatpush2.msra.mxu0 0.0
        %1151 = vmatprep.mubr.f32.mxu0 0.0
        %1152 = vmatmul.mubr.f32.gmra.mxu0 %v931
        %v1153 = vpop.f32.mrf.mxu0
        %v1154 = vadd.f32 0.0, %v1153
        %v1155 = vpop.f32.mrf.mxu0
        %1156 = vdwg.mxu0
        %s1157 = scalar_lea.vmem [#allocation2], 16
        %1158 = vst.msk [vmem:[%s1157] sm:$0xff] %vm1003, %v1154
        %s1159 = scalar_lea.vmem %s2, 96
        %v1160 = vld [vmem:[%s1159] sm:$0xff]
        %v1161 = vld [vmem:[%s1159 + $0x8] sm:$0xff]
        %v1162 = vld [vmem:[%s1159 + $0x10] sm:$0xff]
        %v1163 = vld [vmem:[%s1159 + $0x18] sm:$0xff]
        %1164 = vmatprep.subr.mxu0 0.0
        %1165 = vmatpush1.msra.mxu0 0.0
        %1166 = vmatprep.subr.mxu0 0.0
        %1167 = vmatpush1.msra.mxu0 0.0
        %1168 = vmatprep.subr.mxu0 0.0
        %1169 = vmatpush1.msra.mxu0 0.0
        %1170 = vmatprep.subr.mxu0 0.0
        %1171 = vmatpush1.msra.mxu0 0.0
        %1172 = vmatprep.subr.mxu0 0.0
        %1173 = vmatpush1.msra.mxu0 0.0
        %1174 = vmatprep.subr.mxu0 0.0
        %1175 = vmatpush1.msra.mxu0 0.0
        %1176 = vmatprep.subr.mxu0 0.0
        %1177 = vmatpush1.msra.mxu0 0.0
        %1178 = vmatprep.subr.mxu0 0.0
        %1179 = vmatpush1.msra.mxu0 0.0
        %1180 = vmatprep.subr.mxu0 0.0
        %1181 = vmatpush1.msra.mxu0 0.0
        %1182 = vmatprep.subr.mxu0 0.0
        %1183 = vmatpush1.msra.mxu0 0.0
        %1184 = vmatprep.subr.mxu0 0.0
        %1185 = vmatpush1.msra.mxu0 0.0
        %1186 = vmatprep.subr.mxu0 0.0
        %1187 = vmatpush1.msra.mxu0 0.0
        %1188 = vmatprep.subr.mxu0 0.0
        %1189 = vmatpush1.msra.mxu0 %v1163
        %1190 = vmatprep.subr.mxu0 0.0
        %1191 = vmatpush1.msra.mxu0 %v1162
        %1192 = vmatprep.subr.mxu0 0.0
        %1193 = vmatpush1.msra.mxu0 %v1161
        %1194 = vmatprep.subr.mxu0 0.0
        %1195 = vmatpush1.msra.mxu0 %v1160
        %1196 = vmatprep.subr.mxu0 0.0
        %1197 = vmatpush2.msra.mxu0 0.0
        %1198 = vmatprep.subr.mxu0 0.0
        %1199 = vmatpush2.msra.mxu0 0.0
        %1200 = vmatprep.subr.mxu0 0.0
        %1201 = vmatpush2.msra.mxu0 0.0
        %1202 = vmatprep.subr.mxu0 0.0
        %1203 = vmatpush2.msra.mxu0 0.0
        %1204 = vmatprep.subr.mxu0 0.0
        %1205 = vmatpush2.msra.mxu0 0.0
        %1206 = vmatprep.subr.mxu0 0.0
        %1207 = vmatpush2.msra.mxu0 0.0
        %1208 = vmatprep.subr.mxu0 0.0
        %1209 = vmatpush2.msra.mxu0 0.0
        %1210 = vmatprep.subr.mxu0 0.0
        %1211 = vmatpush2.msra.mxu0 0.0
        %1212 = vmatprep.subr.mxu0 0.0
        %1213 = vmatpush2.msra.mxu0 0.0
        %1214 = vmatprep.subr.mxu0 0.0
        %1215 = vmatpush2.msra.mxu0 0.0
        %1216 = vmatprep.subr.mxu0 0.0
        %1217 = vmatpush2.msra.mxu0 0.0
        %1218 = vmatprep.subr.mxu0 0.0
        %1219 = vmatpush2.msra.mxu0 0.0
        %1220 = vmatprep.subr.mxu0 0.0
        %1221 = vmatpush2.msra.mxu0 0.0
        %1222 = vmatprep.subr.mxu0 0.0
        %1223 = vmatpush2.msra.mxu0 0.0
        %1224 = vmatprep.subr.mxu0 0.0
        %1225 = vmatpush2.msra.mxu0 0.0
        %1226 = vmatprep.subr.mxu0 0.0
        %1227 = vmatpush2.msra.mxu0 0.0
        %1228 = vmatprep.mubr.f32.mxu0 0.0
        %1229 = vmatmul.mubr.f32.gmra.mxu0 %v931
        %v1230 = vpop.f32.mrf.mxu0
        %v1231 = vadd.f32 0.0, %v1230
        %v1232 = vpop.f32.mrf.mxu0
        %1233 = vdwg.mxu0
        %s1234 = scalar_lea.vmem [#allocation2], 24
        %1235 = vst.msk [vmem:[%s1234] sm:$0xff] %vm1003, %v1231
        %v1236 = vld [vmem:[#allocation2] sm:$0xff]
        %v1237 = vld [vmem:[#allocation2 + $0x8] sm:$0xff]
        %v1238 = vld [vmem:[#allocation2 + $0x10] sm:$0xff]
        %v1239 = vld [vmem:[#allocation2 + $0x18] sm:$0xff]
        %v1240 = vld [vmem:[%s301] sm:$0x1]
        %vm1241 = vcmp.gt.f32.partialorder %v1240, 0.0
        %v1242 = vsel %vm1241, -10000000.0, 0.0
        %v1243 = vld [vmem:[#allocation3] sm:$0xff]
        %v1244 = vld [vmem:[#allocation3 + $0x8] sm:$0xff]
        %v1245 = vld [vmem:[#allocation3 + $0x10] sm:$0xff]
        %v1246 = vld [vmem:[#allocation3 + $0x18] sm:$0xff]
        %v1247 = vld [vmem:[#allocation4] sm:$0xff]
        %v1248 = vld [vmem:[#allocation4 + $0x8] sm:$0xff]
        %v1249 = vld [vmem:[#allocation4 + $0x10] sm:$0xff]
        %v1250 = vld [vmem:[#allocation4 + $0x18] sm:$0xff]
        %v1252 = vlaneseq
        %v1253 = vshrl.u32 %v1252, 7
        %v1254 = vsub.s32 0, %v1253
        %v1255 = vrot.slane %v1242, %v1254
        %v1258 = vsel %vm1003, %v1236, 0
        %v1261 = vsel %vm1003, %v1243, 0
        %1263 = vmatprep.subr.mxu0 0.0
        %1264 = vmatpush1.xpose.msra.mxu0 0.0
        %1265 = vmatprep.subr.mxu0 0.0
        %1266 = vmatpush1.xpose.msra.mxu0 0.0
        %1267 = vmatprep.subr.mxu0 0.0
        %1268 = vmatpush1.xpose.msra.mxu0 0.0
        %1269 = vmatprep.subr.mxu0 0.0
        %1270 = vmatpush1.xpose.msra.mxu0 0.0
        %1271 = vmatprep.subr.mxu0 0.0
        %1272 = vmatpush1.xpose.msra.mxu0 0.0
        %1273 = vmatprep.subr.mxu0 0.0
        %1274 = vmatpush1.xpose.msra.mxu0 0.0
        %1275 = vmatprep.subr.mxu0 0.0
        %1276 = vmatpush1.xpose.msra.mxu0 0.0
        %1277 = vmatprep.subr.mxu0 0.0
        %1278 = vmatpush1.xpose.msra.mxu0 0.0
        %1279 = vmatprep.subr.mxu0 0.0
        %1280 = vmatpush1.xpose.msra.mxu0 0.0
        %1281 = vmatprep.subr.mxu0 0.0
        %1282 = vmatpush1.xpose.msra.mxu0 0.0
        %1283 = vmatprep.subr.mxu0 0.0
        %1284 = vmatpush1.xpose.msra.mxu0 0.0
        %1285 = vmatprep.subr.mxu0 0.0
        %1286 = vmatpush1.xpose.msra.mxu0 0.0
        %1287 = vmatprep.subr.mxu0 0.0
        %1288 = vmatpush1.xpose.msra.mxu0 0.0
        %1289 = vmatprep.subr.mxu0 0.0
        %1290 = vmatpush1.xpose.msra.mxu0 0.0
        %1291 = vmatprep.subr.mxu0 0.0
        %1292 = vmatpush1.xpose.msra.mxu0 0.0
        %1293 = vmatprep.subr.mxu0 0.0
        %1294 = vmatpush1.xpose.msra.mxu0 %v1261
        %1295 = vmatprep.subr.mxu0 0.0
        %1296 = vmatpush2.xpose.msra.mxu0 0.0
        %1297 = vmatprep.subr.mxu0 0.0
        %1298 = vmatpush2.xpose.msra.mxu0 0.0
        %1299 = vmatprep.subr.mxu0 0.0
        %1300 = vmatpush2.xpose.msra.mxu0 0.0
        %1301 = vmatprep.subr.mxu0 0.0
        %1302 = vmatpush2.xpose.msra.mxu0 0.0
        %1303 = vmatprep.subr.mxu0 0.0
        %1304 = vmatpush2.xpose.msra.mxu0 0.0
        %1305 = vmatprep.subr.mxu0 0.0
        %1306 = vmatpush2.xpose.msra.mxu0 0.0
        %1307 = vmatprep.subr.mxu0 0.0
        %1308 = vmatpush2.xpose.msra.mxu0 0.0
        %1309 = vmatprep.subr.mxu0 0.0
        %1310 = vmatpush2.xpose.msra.mxu0 0.0
        %1311 = vmatprep.subr.mxu0 0.0
        %1312 = vmatpush2.xpose.msra.mxu0 0.0
        %1313 = vmatprep.subr.mxu0 0.0
        %1314 = vmatpush2.xpose.msra.mxu0 0.0
        %1315 = vmatprep.subr.mxu0 0.0
        %1316 = vmatpush2.xpose.msra.mxu0 0.0
        %1317 = vmatprep.subr.mxu0 0.0
        %1318 = vmatpush2.xpose.msra.mxu0 0.0
        %1319 = vmatprep.subr.mxu0 0.0
        %1320 = vmatpush2.xpose.msra.mxu0 0.0
        %1321 = vmatprep.subr.mxu0 0.0
        %1322 = vmatpush2.xpose.msra.mxu0 0.0
        %1323 = vmatprep.subr.mxu0 0.0
        %1324 = vmatpush2.xpose.msra.mxu0 0.0
        %1325 = vmatprep.subr.mxu0 0.0
        %1326 = vmatpush2.xpose.msra.mxu0 0.0
        %1327 = vmatprep.mubr.f32.mxu0 0.0
        %1328 = vmatmul.mubr.f32.gmra.mxu0 %v1258
        %v1329 = vpop.f32.mrf.mxu0
        %v1330 = vadd.f32 %v1255, %v1329
        %v1331 = vpop.f32.mrf.mxu0
        %1332 = vdwg.mxu0
        %v1334 = vsel %vm1003, %v1237, 0
        %v1337 = vsel %vm1003, %v1244, 0
        %1339 = vmatprep.subr.mxu0 0.0
        %1340 = vmatpush1.xpose.msra.mxu0 0.0
        %1341 = vmatprep.subr.mxu0 0.0
        %1342 = vmatpush1.xpose.msra.mxu0 0.0
        %1343 = vmatprep.subr.mxu0 0.0
        %1344 = vmatpush1.xpose.msra.mxu0 0.0
        %1345 = vmatprep.subr.mxu0 0.0
        %1346 = vmatpush1.xpose.msra.mxu0 0.0
        %1347 = vmatprep.subr.mxu0 0.0
        %1348 = vmatpush1.xpose.msra.mxu0 0.0
        %1349 = vmatprep.subr.mxu0 0.0
        %1350 = vmatpush1.xpose.msra.mxu0 0.0
        %1351 = vmatprep.subr.mxu0 0.0
        %1352 = vmatpush1.xpose.msra.mxu0 0.0
        %1353 = vmatprep.subr.mxu0 0.0
        %1354 = vmatpush1.xpose.msra.mxu0 0.0
        %1355 = vmatprep.subr.mxu0 0.0
        %1356 = vmatpush1.xpose.msra.mxu0 0.0
        %1357 = vmatprep.subr.mxu0 0.0
        %1358 = vmatpush1.xpose.msra.mxu0 0.0
        %1359 = vmatprep.subr.mxu0 0.0
        %1360 = vmatpush1.xpose.msra.mxu0 0.0
        %1361 = vmatprep.subr.mxu0 0.0
        %1362 = vmatpush1.xpose.msra.mxu0 0.0
        %1363 = vmatprep.subr.mxu0 0.0
        %1364 = vmatpush1.xpose.msra.mxu0 0.0
        %1365 = vmatprep.subr.mxu0 0.0
        %1366 = vmatpush1.xpose.msra.mxu0 0.0
        %1367 = vmatprep.subr.mxu0 0.0
        %1368 = vmatpush1.xpose.msra.mxu0 0.0
        %1369 = vmatprep.subr.mxu0 0.0
        %1370 = vmatpush1.xpose.msra.mxu0 %v1337
        %1371 = vmatprep.subr.mxu0 0.0
        %1372 = vmatpush2.xpose.msra.mxu0 0.0
        %1373 = vmatprep.subr.mxu0 0.0
        %1374 = vmatpush2.xpose.msra.mxu0 0.0
        %1375 = vmatprep.subr.mxu0 0.0
        %1376 = vmatpush2.xpose.msra.mxu0 0.0
        %1377 = vmatprep.subr.mxu0 0.0
        %1378 = vmatpush2.xpose.msra.mxu0 0.0
        %1379 = vmatprep.subr.mxu0 0.0
        %1380 = vmatpush2.xpose.msra.mxu0 0.0
        %1381 = vmatprep.subr.mxu0 0.0
        %1382 = vmatpush2.xpose.msra.mxu0 0.0
        %1383 = vmatprep.subr.mxu0 0.0
        %1384 = vmatpush2.xpose.msra.mxu0 0.0
        %1385 = vmatprep.subr.mxu0 0.0
        %1386 = vmatpush2.xpose.msra.mxu0 0.0
        %1387 = vmatprep.subr.mxu0 0.0
        %1388 = vmatpush2.xpose.msra.mxu0 0.0
        %1389 = vmatprep.subr.mxu0 0.0
        %1390 = vmatpush2.xpose.msra.mxu0 0.0
        %1391 = vmatprep.subr.mxu0 0.0
        %1392 = vmatpush2.xpose.msra.mxu0 0.0
        %1393 = vmatprep.subr.mxu0 0.0
        %1394 = vmatpush2.xpose.msra.mxu0 0.0
        %1395 = vmatprep.subr.mxu0 0.0
        %1396 = vmatpush2.xpose.msra.mxu0 0.0
        %1397 = vmatprep.subr.mxu0 0.0
        %1398 = vmatpush2.xpose.msra.mxu0 0.0
        %1399 = vmatprep.subr.mxu0 0.0
        %1400 = vmatpush2.xpose.msra.mxu0 0.0
        %1401 = vmatprep.subr.mxu0 0.0
        %1402 = vmatpush2.xpose.msra.mxu0 0.0
        %1403 = vmatprep.mubr.f32.mxu0 0.0
        %1404 = vmatmul.mubr.f32.gmra.mxu0 %v1334
        %v1405 = vpop.f32.mrf.mxu0
        %v1406 = vadd.f32 %v1255, %v1405
        %v1407 = vpop.f32.mrf.mxu0
        %1408 = vdwg.mxu0
        %v1410 = vsel %vm1003, %v1238, 0
        %v1413 = vsel %vm1003, %v1245, 0
        %1415 = vmatprep.subr.mxu0 0.0
        %1416 = vmatpush1.xpose.msra.mxu0 0.0
        %1417 = vmatprep.subr.mxu0 0.0
        %1418 = vmatpush1.xpose.msra.mxu0 0.0
        %1419 = vmatprep.subr.mxu0 0.0
        %1420 = vmatpush1.xpose.msra.mxu0 0.0
        %1421 = vmatprep.subr.mxu0 0.0
        %1422 = vmatpush1.xpose.msra.mxu0 0.0
        %1423 = vmatprep.subr.mxu0 0.0
        %1424 = vmatpush1.xpose.msra.mxu0 0.0
        %1425 = vmatprep.subr.mxu0 0.0
        %1426 = vmatpush1.xpose.msra.mxu0 0.0
        %1427 = vmatprep.subr.mxu0 0.0
        %1428 = vmatpush1.xpose.msra.mxu0 0.0
        %1429 = vmatprep.subr.mxu0 0.0
        %1430 = vmatpush1.xpose.msra.mxu0 0.0
        %1431 = vmatprep.subr.mxu0 0.0
        %1432 = vmatpush1.xpose.msra.mxu0 0.0
        %1433 = vmatprep.subr.mxu0 0.0
        %1434 = vmatpush1.xpose.msra.mxu0 0.0
        %1435 = vmatprep.subr.mxu0 0.0
        %1436 = vmatpush1.xpose.msra.mxu0 0.0
        %1437 = vmatprep.subr.mxu0 0.0
        %1438 = vmatpush1.xpose.msra.mxu0 0.0
        %1439 = vmatprep.subr.mxu0 0.0
        %1440 = vmatpush1.xpose.msra.mxu0 0.0
        %1441 = vmatprep.subr.mxu0 0.0
        %1442 = vmatpush1.xpose.msra.mxu0 0.0
        %1443 = vmatprep.subr.mxu0 0.0
        %1444 = vmatpush1.xpose.msra.mxu0 0.0
        %1445 = vmatprep.subr.mxu0 0.0
        %1446 = vmatpush1.xpose.msra.mxu0 %v1413
        %1447 = vmatprep.subr.mxu0 0.0
        %1448 = vmatpush2.xpose.msra.mxu0 0.0
        %1449 = vmatprep.subr.mxu0 0.0
        %1450 = vmatpush2.xpose.msra.mxu0 0.0
        %1451 = vmatprep.subr.mxu0 0.0
        %1452 = vmatpush2.xpose.msra.mxu0 0.0
        %1453 = vmatprep.subr.mxu0 0.0
        %1454 = vmatpush2.xpose.msra.mxu0 0.0
        %1455 = vmatprep.subr.mxu0 0.0
        %1456 = vmatpush2.xpose.msra.mxu0 0.0
        %1457 = vmatprep.subr.mxu0 0.0
        %1458 = vmatpush2.xpose.msra.mxu0 0.0
        %1459 = vmatprep.subr.mxu0 0.0
        %1460 = vmatpush2.xpose.msra.mxu0 0.0
        %1461 = vmatprep.subr.mxu0 0.0
        %1462 = vmatpush2.xpose.msra.mxu0 0.0
        %1463 = vmatprep.subr.mxu0 0.0
        %1464 = vmatpush2.xpose.msra.mxu0 0.0
        %1465 = vmatprep.subr.mxu0 0.0
        %1466 = vmatpush2.xpose.msra.mxu0 0.0
        %1467 = vmatprep.subr.mxu0 0.0
        %1468 = vmatpush2.xpose.msra.mxu0 0.0
        %1469 = vmatprep.subr.mxu0 0.0
        %1470 = vmatpush2.xpose.msra.mxu0 0.0
        %1471 = vmatprep.subr.mxu0 0.0
        %1472 = vmatpush2.xpose.msra.mxu0 0.0
        %1473 = vmatprep.subr.mxu0 0.0
        %1474 = vmatpush2.xpose.msra.mxu0 0.0
        %1475 = vmatprep.subr.mxu0 0.0
        %1476 = vmatpush2.xpose.msra.mxu0 0.0
        %1477 = vmatprep.subr.mxu0 0.0
        %1478 = vmatpush2.xpose.msra.mxu0 0.0
        %1479 = vmatprep.mubr.f32.mxu0 0.0
        %1480 = vmatmul.mubr.f32.gmra.mxu0 %v1410
        %v1481 = vpop.f32.mrf.mxu0
        %v1482 = vadd.f32 %v1255, %v1481
        %v1483 = vpop.f32.mrf.mxu0
        %1484 = vdwg.mxu0
        %v1486 = vsel %vm1003, %v1239, 0
        %v1489 = vsel %vm1003, %v1246, 0
        %1491 = vmatprep.subr.mxu0 0.0
        %1492 = vmatpush1.xpose.msra.mxu0 0.0
        %1493 = vmatprep.subr.mxu0 0.0
        %1494 = vmatpush1.xpose.msra.mxu0 0.0
        %1495 = vmatprep.subr.mxu0 0.0
        %1496 = vmatpush1.xpose.msra.mxu0 0.0
        %1497 = vmatprep.subr.mxu0 0.0
        %1498 = vmatpush1.xpose.msra.mxu0 0.0
        %1499 = vmatprep.subr.mxu0 0.0
        %1500 = vmatpush1.xpose.msra.mxu0 0.0
        %1501 = vmatprep.subr.mxu0 0.0
        %1502 = vmatpush1.xpose.msra.mxu0 0.0
        %1503 = vmatprep.subr.mxu0 0.0
        %1504 = vmatpush1.xpose.msra.mxu0 0.0
        %1505 = vmatprep.subr.mxu0 0.0
        %1506 = vmatpush1.xpose.msra.mxu0 0.0
        %1507 = vmatprep.subr.mxu0 0.0
        %1508 = vmatpush1.xpose.msra.mxu0 0.0
        %1509 = vmatprep.subr.mxu0 0.0
        %1510 = vmatpush1.xpose.msra.mxu0 0.0
        %1511 = vmatprep.subr.mxu0 0.0
        %1512 = vmatpush1.xpose.msra.mxu0 0.0
        %1513 = vmatprep.subr.mxu0 0.0
        %1514 = vmatpush1.xpose.msra.mxu0 0.0
        %1515 = vmatprep.subr.mxu0 0.0
        %1516 = vmatpush1.xpose.msra.mxu0 0.0
        %1517 = vmatprep.subr.mxu0 0.0
        %1518 = vmatpush1.xpose.msra.mxu0 0.0
        %1519 = vmatprep.subr.mxu0 0.0
        %1520 = vmatpush1.xpose.msra.mxu0 0.0
        %1521 = vmatprep.subr.mxu0 0.0
        %1522 = vmatpush1.xpose.msra.mxu0 %v1489
        %1523 = vmatprep.subr.mxu0 0.0
        %1524 = vmatpush2.xpose.msra.mxu0 0.0
        %1525 = vmatprep.subr.mxu0 0.0
        %1526 = vmatpush2.xpose.msra.mxu0 0.0
        %1527 = vmatprep.subr.mxu0 0.0
        %1528 = vmatpush2.xpose.msra.mxu0 0.0
        %1529 = vmatprep.subr.mxu0 0.0
        %1530 = vmatpush2.xpose.msra.mxu0 0.0
        %1531 = vmatprep.subr.mxu0 0.0
        %1532 = vmatpush2.xpose.msra.mxu0 0.0
        %1533 = vmatprep.subr.mxu0 0.0
        %1534 = vmatpush2.xpose.msra.mxu0 0.0
        %1535 = vmatprep.subr.mxu0 0.0
        %1536 = vmatpush2.xpose.msra.mxu0 0.0
        %1537 = vmatprep.subr.mxu0 0.0
        %1538 = vmatpush2.xpose.msra.mxu0 0.0
        %1539 = vmatprep.subr.mxu0 0.0
        %1540 = vmatpush2.xpose.msra.mxu0 0.0
        %1541 = vmatprep.subr.mxu0 0.0
        %1542 = vmatpush2.xpose.msra.mxu0 0.0
        %1543 = vmatprep.subr.mxu0 0.0
        %1544 = vmatpush2.xpose.msra.mxu0 0.0
        %1545 = vmatprep.subr.mxu0 0.0
        %1546 = vmatpush2.xpose.msra.mxu0 0.0
        %1547 = vmatprep.subr.mxu0 0.0
        %1548 = vmatpush2.xpose.msra.mxu0 0.0
        %1549 = vmatprep.subr.mxu0 0.0
        %1550 = vmatpush2.xpose.msra.mxu0 0.0
        %1551 = vmatprep.subr.mxu0 0.0
        %1552 = vmatpush2.xpose.msra.mxu0 0.0
        %1553 = vmatprep.subr.mxu0 0.0
        %1554 = vmatpush2.xpose.msra.mxu0 0.0
        %1555 = vmatprep.mubr.f32.mxu0 0.0
        %1556 = vmatmul.mubr.f32.gmra.mxu0 %v1486
        %v1557 = vpop.f32.mrf.mxu0
        %v1558 = vadd.f32 %v1255, %v1557
        %v1559 = vpop.f32.mrf.mxu0
        %1560 = vdwg.mxu0
        %v1561 = vsel %vm1003, %v1330, -inf
        %1562 = vmax.xlane.f32.xlu0 %v1561
        %v1563 = vpop.xlane.xlu0 %1562
        %v1564 = vsel %vm1003, %v1406, -inf
        %1565 = vmax.xlane.f32.xlu0 %v1564
        %v1566 = vpop.xlane.xlu0 %1565
        %v1567 = vsel %vm1003, %v1482, -inf
        %1568 = vmax.xlane.f32.xlu0 %v1567
        %v1569 = vpop.xlane.xlu0 %1568
        %v1570 = vsel %vm1003, %v1558, -inf
        %1571 = vmax.xlane.f32.xlu0 %v1570
        %v1572 = vpop.xlane.xlu0 %1571
        %v1573 = vmax.f32 %v1563, -1e+30
        %v1574 = vmax.f32 %v1566, -1e+30
        %v1575 = vmax.f32 %v1569, -1e+30
        %v1576 = vmax.f32 %v1572, -1e+30
        %v1577 = vsub.f32 -1e+30, %v1573
        %v1578 = vsub.f32 -1e+30, %v1574
        %v1579 = vsub.f32 -1e+30, %v1575
        %v1580 = vsub.f32 -1e+30, %v1576
        %v1581 = vmul.f32 %v1577, 1.442695
        %v1582 = vpow.pop %v1581
        %v1583 = vmul.f32 %v1578, 1.442695
        %v1584 = vpow.pop %v1583
        %v1585 = vmul.f32 %v1579, 1.442695
        %v1586 = vpow.pop %v1585
        %v1587 = vmul.f32 %v1580, 1.442695
        %v1588 = vpow.pop %v1587
        %v1589 = vsub.f32 %v1330, %v1573
        %v1590 = vsub.f32 %v1406, %v1574
        %v1591 = vsub.f32 %v1482, %v1575
        %v1592 = vsub.f32 %v1558, %v1576
        %v1593 = vmul.f32 %v1589, 1.442695
        %v1594 = vpow.pop %v1593
        %v1595 = vmul.f32 %v1590, 1.442695
        %v1596 = vpow.pop %v1595
        %v1597 = vmul.f32 %v1591, 1.442695
        %v1598 = vpow.pop %v1597
        %v1599 = vmul.f32 %v1592, 1.442695
        %v1600 = vpow.pop %v1599
        %v1601 = vmul.f32 %v1582, 0.0
        %v1602 = vmul.f32 %v1584, 0.0
        %v1603 = vmul.f32 %v1586, 0.0
        %v1604 = vmul.f32 %v1588, 0.0
        %v1605 = vsel %vm1003, %v1594, 0.0
        %1606 = vadd.xlane.f32.xlu0 %v1605
        %v1607 = vpop.xlane.xlu0 %1606
        %v1608 = vsel %vm1003, %v1596, 0.0
        %1609 = vadd.xlane.f32.xlu0 %v1608
        %v1610 = vpop.xlane.xlu0 %1609
        %v1611 = vsel %vm1003, %v1598, 0.0
        %1612 = vadd.xlane.f32.xlu0 %v1611
        %v1613 = vpop.xlane.xlu0 %1612
        %v1614 = vsel %vm1003, %v1600, 0.0
        %1615 = vadd.xlane.f32.xlu0 %v1614
        %v1616 = vpop.xlane.xlu0 %1615
        %v1617 = vadd.f32 %v1601, %v1607
        %v1618 = vadd.f32 %v1602, %v1610
        %v1619 = vadd.f32 %v1603, %v1613
        %v1620 = vadd.f32 %v1604, %v1616
        %v1622 = vsel %vm1003, %v1594, 0
        %1624 = vmatprep.subr.mxu0 0.0
        %1625 = vmatpush1.msra.mxu0 0.0
        %1626 = vmatprep.subr.mxu0 0.0
        %1627 = vmatpush1.msra.mxu0 0.0
        %1628 = vmatprep.subr.mxu0 0.0
        %1629 = vmatpush1.msra.mxu0 0.0
        %1630 = vmatprep.subr.mxu0 0.0
        %1631 = vmatpush1.msra.mxu0 0.0
        %1632 = vmatprep.subr.mxu0 0.0
        %1633 = vmatpush1.msra.mxu0 0.0
        %1634 = vmatprep.subr.mxu0 0.0
        %1635 = vmatpush1.msra.mxu0 0.0
        %1636 = vmatprep.subr.mxu0 0.0
        %1637 = vmatpush1.msra.mxu0 0.0
        %1638 = vmatprep.subr.mxu0 0.0
        %1639 = vmatpush1.msra.mxu0 0.0
        %1640 = vmatprep.subr.mxu0 0.0
        %1641 = vmatpush1.msra.mxu0 0.0
        %1642 = vmatprep.subr.mxu0 0.0
        %1643 = vmatpush1.msra.mxu0 0.0
        %1644 = vmatprep.subr.mxu0 0.0
        %1645 = vmatpush1.msra.mxu0 0.0
        %1646 = vmatprep.subr.mxu0 0.0
        %1647 = vmatpush1.msra.mxu0 0.0
        %1648 = vmatprep.subr.mxu0 0.0
        %1649 = vmatpush1.msra.mxu0 0.0
        %1650 = vmatprep.subr.mxu0 0.0
        %1651 = vmatpush1.msra.mxu0 0.0
        %1652 = vmatprep.subr.mxu0 0.0
        %1653 = vmatpush1.msra.mxu0 0.0
        %1654 = vmatprep.subr.mxu0 0.0
        %1655 = vmatpush1.msra.mxu0 %v1247
        %1656 = vmatprep.subr.mxu0 0.0
        %1657 = vmatpush2.msra.mxu0 0.0
        %1658 = vmatprep.subr.mxu0 0.0
        %1659 = vmatpush2.msra.mxu0 0.0
        %1660 = vmatprep.subr.mxu0 0.0
        %1661 = vmatpush2.msra.mxu0 0.0
        %1662 = vmatprep.subr.mxu0 0.0
        %1663 = vmatpush2.msra.mxu0 0.0
        %1664 = vmatprep.subr.mxu0 0.0
        %1665 = vmatpush2.msra.mxu0 0.0
        %1666 = vmatprep.subr.mxu0 0.0
        %1667 = vmatpush2.msra.mxu0 0.0
        %1668 = vmatprep.subr.mxu0 0.0
        %1669 = vmatpush2.msra.mxu0 0.0
        %1670 = vmatprep.subr.mxu0 0.0
        %1671 = vmatpush2.msra.mxu0 0.0
        %1672 = vmatprep.subr.mxu0 0.0
        %1673 = vmatpush2.msra.mxu0 0.0
        %1674 = vmatprep.subr.mxu0 0.0
        %1675 = vmatpush2.msra.mxu0 0.0
        %1676 = vmatprep.subr.mxu0 0.0
        %1677 = vmatpush2.msra.mxu0 0.0
        %1678 = vmatprep.subr.mxu0 0.0
        %1679 = vmatpush2.msra.mxu0 0.0
        %1680 = vmatprep.subr.mxu0 0.0
        %1681 = vmatpush2.msra.mxu0 0.0
        %1682 = vmatprep.subr.mxu0 0.0
        %1683 = vmatpush2.msra.mxu0 0.0
        %1684 = vmatprep.subr.mxu0 0.0
        %1685 = vmatpush2.msra.mxu0 0.0
        %1686 = vmatprep.subr.mxu0 0.0
        %1687 = vmatpush2.msra.mxu0 0.0
        %1688 = vmatprep.mubr.f32.mxu0 0.0
        %1689 = vmatmul.mubr.f32.gmra.mxu0 %v1622
        %v1690 = vpop.f32.mrf.mxu0
        %v1691 = vadd.f32 0.0, %v1690
        %v1692 = vpop.f32.mrf.mxu0
        %1693 = vdwg.mxu0
        %v1695 = vsel %vm1003, %v1596, 0
        %1697 = vmatprep.subr.mxu0 0.0
        %1698 = vmatpush1.msra.mxu0 0.0
        %1699 = vmatprep.subr.mxu0 0.0
        %1700 = vmatpush1.msra.mxu0 0.0
        %1701 = vmatprep.subr.mxu0 0.0
        %1702 = vmatpush1.msra.mxu0 0.0
        %1703 = vmatprep.subr.mxu0 0.0
        %1704 = vmatpush1.msra.mxu0 0.0
        %1705 = vmatprep.subr.mxu0 0.0
        %1706 = vmatpush1.msra.mxu0 0.0
        %1707 = vmatprep.subr.mxu0 0.0
        %1708 = vmatpush1.msra.mxu0 0.0
        %1709 = vmatprep.subr.mxu0 0.0
        %1710 = vmatpush1.msra.mxu0 0.0
        %1711 = vmatprep.subr.mxu0 0.0
        %1712 = vmatpush1.msra.mxu0 0.0
        %1713 = vmatprep.subr.mxu0 0.0
        %1714 = vmatpush1.msra.mxu0 0.0
        %1715 = vmatprep.subr.mxu0 0.0
        %1716 = vmatpush1.msra.mxu0 0.0
        %1717 = vmatprep.subr.mxu0 0.0
        %1718 = vmatpush1.msra.mxu0 0.0
        %1719 = vmatprep.subr.mxu0 0.0
        %1720 = vmatpush1.msra.mxu0 0.0
        %1721 = vmatprep.subr.mxu0 0.0
        %1722 = vmatpush1.msra.mxu0 0.0
        %1723 = vmatprep.subr.mxu0 0.0
        %1724 = vmatpush1.msra.mxu0 0.0
        %1725 = vmatprep.subr.mxu0 0.0
        %1726 = vmatpush1.msra.mxu0 0.0
        %1727 = vmatprep.subr.mxu0 0.0
        %1728 = vmatpush1.msra.mxu0 %v1248
        %1729 = vmatprep.subr.mxu0 0.0
        %1730 = vmatpush2.msra.mxu0 0.0
        %1731 = vmatprep.subr.mxu0 0.0
        %1732 = vmatpush2.msra.mxu0 0.0
        %1733 = vmatprep.subr.mxu0 0.0
        %1734 = vmatpush2.msra.mxu0 0.0
        %1735 = vmatprep.subr.mxu0 0.0
        %1736 = vmatpush2.msra.mxu0 0.0
        %1737 = vmatprep.subr.mxu0 0.0
        %1738 = vmatpush2.msra.mxu0 0.0
        %1739 = vmatprep.subr.mxu0 0.0
        %1740 = vmatpush2.msra.mxu0 0.0
        %1741 = vmatprep.subr.mxu0 0.0
        %1742 = vmatpush2.msra.mxu0 0.0
        %1743 = vmatprep.subr.mxu0 0.0
        %1744 = vmatpush2.msra.mxu0 0.0
        %1745 = vmatprep.subr.mxu0 0.0
        %1746 = vmatpush2.msra.mxu0 0.0
        %1747 = vmatprep.subr.mxu0 0.0
        %1748 = vmatpush2.msra.mxu0 0.0
        %1749 = vmatprep.subr.mxu0 0.0
        %1750 = vmatpush2.msra.mxu0 0.0
        %1751 = vmatprep.subr.mxu0 0.0
        %1752 = vmatpush2.msra.mxu0 0.0
        %1753 = vmatprep.subr.mxu0 0.0
        %1754 = vmatpush2.msra.mxu0 0.0
        %1755 = vmatprep.subr.mxu0 0.0
        %1756 = vmatpush2.msra.mxu0 0.0
        %1757 = vmatprep.subr.mxu0 0.0
        %1758 = vmatpush2.msra.mxu0 0.0
        %1759 = vmatprep.subr.mxu0 0.0
        %1760 = vmatpush2.msra.mxu0 0.0
        %1761 = vmatprep.mubr.f32.mxu0 0.0
        %1762 = vmatmul.mubr.f32.gmra.mxu0 %v1695
        %v1763 = vpop.f32.mrf.mxu0
        %v1764 = vadd.f32 0.0, %v1763
        %v1765 = vpop.f32.mrf.mxu0
        %1766 = vdwg.mxu0
        %v1768 = vsel %vm1003, %v1598, 0
        %1770 = vmatprep.subr.mxu0 0.0
        %1771 = vmatpush1.msra.mxu0 0.0
        %1772 = vmatprep.subr.mxu0 0.0
        %1773 = vmatpush1.msra.mxu0 0.0
        %1774 = vmatprep.subr.mxu0 0.0
        %1775 = vmatpush1.msra.mxu0 0.0
        %1776 = vmatprep.subr.mxu0 0.0
        %1777 = vmatpush1.msra.mxu0 0.0
        %1778 = vmatprep.subr.mxu0 0.0
        %1779 = vmatpush1.msra.mxu0 0.0
        %1780 = vmatprep.subr.mxu0 0.0
        %1781 = vmatpush1.msra.mxu0 0.0
        %1782 = vmatprep.subr.mxu0 0.0
        %1783 = vmatpush1.msra.mxu0 0.0
        %1784 = vmatprep.subr.mxu0 0.0
        %1785 = vmatpush1.msra.mxu0 0.0
        %1786 = vmatprep.subr.mxu0 0.0
        %1787 = vmatpush1.msra.mxu0 0.0
        %1788 = vmatprep.subr.mxu0 0.0
        %1789 = vmatpush1.msra.mxu0 0.0
        %1790 = vmatprep.subr.mxu0 0.0
        %1791 = vmatpush1.msra.mxu0 0.0
        %1792 = vmatprep.subr.mxu0 0.0
        %1793 = vmatpush1.msra.mxu0 0.0
        %1794 = vmatprep.subr.mxu0 0.0
        %1795 = vmatpush1.msra.mxu0 0.0
        %1796 = vmatprep.subr.mxu0 0.0
        %1797 = vmatpush1.msra.mxu0 0.0
        %1798 = vmatprep.subr.mxu0 0.0
        %1799 = vmatpush1.msra.mxu0 0.0
        %1800 = vmatprep.subr.mxu0 0.0
        %1801 = vmatpush1.msra.mxu0 %v1249
        %1802 = vmatprep.subr.mxu0 0.0
        %1803 = vmatpush2.msra.mxu0 0.0
        %1804 = vmatprep.subr.mxu0 0.0
        %1805 = vmatpush2.msra.mxu0 0.0
        %1806 = vmatprep.subr.mxu0 0.0
        %1807 = vmatpush2.msra.mxu0 0.0
        %1808 = vmatprep.subr.mxu0 0.0
        %1809 = vmatpush2.msra.mxu0 0.0
        %1810 = vmatprep.subr.mxu0 0.0
        %1811 = vmatpush2.msra.mxu0 0.0
        %1812 = vmatprep.subr.mxu0 0.0
        %1813 = vmatpush2.msra.mxu0 0.0
        %1814 = vmatprep.subr.mxu0 0.0
        %1815 = vmatpush2.msra.mxu0 0.0
        %1816 = vmatprep.subr.mxu0 0.0
        %1817 = vmatpush2.msra.mxu0 0.0
        %1818 = vmatprep.subr.mxu0 0.0
        %1819 = vmatpush2.msra.mxu0 0.0
        %1820 = vmatprep.subr.mxu0 0.0
        %1821 = vmatpush2.msra.mxu0 0.0
        %1822 = vmatprep.subr.mxu0 0.0
        %1823 = vmatpush2.msra.mxu0 0.0
        %1824 = vmatprep.subr.mxu0 0.0
        %1825 = vmatpush2.msra.mxu0 0.0
        %1826 = vmatprep.subr.mxu0 0.0
        %1827 = vmatpush2.msra.mxu0 0.0
        %1828 = vmatprep.subr.mxu0 0.0
        %1829 = vmatpush2.msra.mxu0 0.0
        %1830 = vmatprep.subr.mxu0 0.0
        %1831 = vmatpush2.msra.mxu0 0.0
        %1832 = vmatprep.subr.mxu0 0.0
        %1833 = vmatpush2.msra.mxu0 0.0
        %1834 = vmatprep.mubr.f32.mxu0 0.0
        %1835 = vmatmul.mubr.f32.gmra.mxu0 %v1768
        %v1836 = vpop.f32.mrf.mxu0
        %v1837 = vadd.f32 0.0, %v1836
        %v1838 = vpop.f32.mrf.mxu0
        %1839 = vdwg.mxu0
        %v1841 = vsel %vm1003, %v1600, 0
        %1843 = vmatprep.subr.mxu0 0.0
        %1844 = vmatpush1.msra.mxu0 0.0
        %1845 = vmatprep.subr.mxu0 0.0
        %1846 = vmatpush1.msra.mxu0 0.0
        %1847 = vmatprep.subr.mxu0 0.0
        %1848 = vmatpush1.msra.mxu0 0.0
        %1849 = vmatprep.subr.mxu0 0.0
        %1850 = vmatpush1.msra.mxu0 0.0
        %1851 = vmatprep.subr.mxu0 0.0
        %1852 = vmatpush1.msra.mxu0 0.0
        %1853 = vmatprep.subr.mxu0 0.0
        %1854 = vmatpush1.msra.mxu0 0.0
        %1855 = vmatprep.subr.mxu0 0.0
        %1856 = vmatpush1.msra.mxu0 0.0
        %1857 = vmatprep.subr.mxu0 0.0
        %1858 = vmatpush1.msra.mxu0 0.0
        %1859 = vmatprep.subr.mxu0 0.0
        %1860 = vmatpush1.msra.mxu0 0.0
        %1861 = vmatprep.subr.mxu0 0.0
        %1862 = vmatpush1.msra.mxu0 0.0
        %1863 = vmatprep.subr.mxu0 0.0
        %1864 = vmatpush1.msra.mxu0 0.0
        %1865 = vmatprep.subr.mxu0 0.0
        %1866 = vmatpush1.msra.mxu0 0.0
        %1867 = vmatprep.subr.mxu0 0.0
        %1868 = vmatpush1.msra.mxu0 0.0
        %1869 = vmatprep.subr.mxu0 0.0
        %1870 = vmatpush1.msra.mxu0 0.0
        %1871 = vmatprep.subr.mxu0 0.0
        %1872 = vmatpush1.msra.mxu0 0.0
        %1873 = vmatprep.subr.mxu0 0.0
        %1874 = vmatpush1.msra.mxu0 %v1250
        %1875 = vmatprep.subr.mxu0 0.0
        %1876 = vmatpush2.msra.mxu0 0.0
        %1877 = vmatprep.subr.mxu0 0.0
        %1878 = vmatpush2.msra.mxu0 0.0
        %1879 = vmatprep.subr.mxu0 0.0
        %1880 = vmatpush2.msra.mxu0 0.0
        %1881 = vmatprep.subr.mxu0 0.0
        %1882 = vmatpush2.msra.mxu0 0.0
        %1883 = vmatprep.subr.mxu0 0.0
        %1884 = vmatpush2.msra.mxu0 0.0
        %1885 = vmatprep.subr.mxu0 0.0
        %1886 = vmatpush2.msra.mxu0 0.0
        %1887 = vmatprep.subr.mxu0 0.0
        %1888 = vmatpush2.msra.mxu0 0.0
        %1889 = vmatprep.subr.mxu0 0.0
        %1890 = vmatpush2.msra.mxu0 0.0
        %1891 = vmatprep.subr.mxu0 0.0
        %1892 = vmatpush2.msra.mxu0 0.0
        %1893 = vmatprep.subr.mxu0 0.0
        %1894 = vmatpush2.msra.mxu0 0.0
        %1895 = vmatprep.subr.mxu0 0.0
        %1896 = vmatpush2.msra.mxu0 0.0
        %1897 = vmatprep.subr.mxu0 0.0
        %1898 = vmatpush2.msra.mxu0 0.0
        %1899 = vmatprep.subr.mxu0 0.0
        %1900 = vmatpush2.msra.mxu0 0.0
        %1901 = vmatprep.subr.mxu0 0.0
        %1902 = vmatpush2.msra.mxu0 0.0
        %1903 = vmatprep.subr.mxu0 0.0
        %1904 = vmatpush2.msra.mxu0 0.0
        %1905 = vmatprep.subr.mxu0 0.0
        %1906 = vmatpush2.msra.mxu0 0.0
        %1907 = vmatprep.mubr.f32.mxu0 0.0
        %1908 = vmatmul.mubr.f32.gmra.mxu0 %v1841
        %v1909 = vpop.f32.mrf.mxu0
        %v1910 = vadd.f32 0.0, %v1909
        %v1911 = vpop.f32.mrf.mxu0
        %1912 = vdwg.mxu0
        %v1913 = vadd.f32 %v1601, %v1691
        %v1914 = vadd.f32 %v1602, %v1764
        %v1915 = vadd.f32 %v1603, %v1837
        %v1916 = vadd.f32 %v1604, %v1910
        %v1917 = vrcp.pop %v1617
        %v1918 = vmul.f32 %v1913, %v1917
        %v1919 = vrcp.pop %v1618
        %v1920 = vmul.f32 %v1914, %v1919
        %v1921 = vrcp.pop %v1619
        %v1922 = vmul.f32 %v1915, %v1921
        %v1923 = vrcp.pop %v1620
        %v1924 = vmul.f32 %v1916, %v1923
        %v1925 = vld [vmem:[%s5] sm:$0xff]
        %s1926 = scalar_lea.vmem %s5, 8
        %v1927 = vld [vmem:[%s1926] sm:$0xff]
        %v1929 = vsel %vm1003, %v1920, 0
        %1931 = vmatprep.subr.mxu0 0.0
        %1932 = vmatpush1.msra.mxu0 0.0
        %1933 = vmatprep.subr.mxu0 0.0
        %1934 = vmatpush1.msra.mxu0 0.0
        %1935 = vmatprep.subr.mxu0 0.0
        %1936 = vmatpush1.msra.mxu0 0.0
        %1937 = vmatprep.subr.mxu0 0.0
        %1938 = vmatpush1.msra.mxu0 0.0
        %1939 = vmatprep.subr.mxu0 0.0
        %1940 = vmatpush1.msra.mxu0 0.0
        %1941 = vmatprep.subr.mxu0 0.0
        %1942 = vmatpush1.msra.mxu0 0.0
        %1943 = vmatprep.subr.mxu0 0.0
        %1944 = vmatpush1.msra.mxu0 0.0
        %1945 = vmatprep.subr.mxu0 0.0
        %1946 = vmatpush1.msra.mxu0 0.0
        %1947 = vmatprep.subr.mxu0 0.0
        %1948 = vmatpush1.msra.mxu0 0.0
        %1949 = vmatprep.subr.mxu0 0.0
        %1950 = vmatpush1.msra.mxu0 0.0
        %1951 = vmatprep.subr.mxu0 0.0
        %1952 = vmatpush1.msra.mxu0 0.0
        %1953 = vmatprep.subr.mxu0 0.0
        %1954 = vmatpush1.msra.mxu0 0.0
        %1955 = vmatprep.subr.mxu0 0.0
        %1956 = vmatpush1.msra.mxu0 0.0
        %1957 = vmatprep.subr.mxu0 0.0
        %1958 = vmatpush1.msra.mxu0 0.0
        %1959 = vmatprep.subr.mxu0 0.0
        %1960 = vmatpush1.msra.mxu0 0.0
        %1961 = vmatprep.subr.mxu0 0.0
        %1962 = vmatpush1.msra.mxu0 %v1927
        %1963 = vmatprep.subr.mxu0 0.0
        %1964 = vmatpush2.msra.mxu0 0.0
        %1965 = vmatprep.subr.mxu0 0.0
        %1966 = vmatpush2.msra.mxu0 0.0
        %1967 = vmatprep.subr.mxu0 0.0
        %1968 = vmatpush2.msra.mxu0 0.0
        %1969 = vmatprep.subr.mxu0 0.0
        %1970 = vmatpush2.msra.mxu0 0.0
        %1971 = vmatprep.subr.mxu0 0.0
        %1972 = vmatpush2.msra.mxu0 0.0
        %1973 = vmatprep.subr.mxu0 0.0
        %1974 = vmatpush2.msra.mxu0 0.0
        %1975 = vmatprep.subr.mxu0 0.0
        %1976 = vmatpush2.msra.mxu0 0.0
        %1977 = vmatprep.subr.mxu0 0.0
        %1978 = vmatpush2.msra.mxu0 0.0
        %1979 = vmatprep.subr.mxu0 0.0
        %1980 = vmatpush2.msra.mxu0 0.0
        %1981 = vmatprep.subr.mxu0 0.0
        %1982 = vmatpush2.msra.mxu0 0.0
        %1983 = vmatprep.subr.mxu0 0.0
        %1984 = vmatpush2.msra.mxu0 0.0
        %1985 = vmatprep.subr.mxu0 0.0
        %1986 = vmatpush2.msra.mxu0 0.0
        %1987 = vmatprep.subr.mxu0 0.0
        %1988 = vmatpush2.msra.mxu0 0.0
        %1989 = vmatprep.subr.mxu0 0.0
        %1990 = vmatpush2.msra.mxu0 0.0
        %1991 = vmatprep.subr.mxu0 0.0
        %1992 = vmatpush2.msra.mxu0 0.0
        %1993 = vmatprep.subr.mxu0 0.0
        %1994 = vmatpush2.msra.mxu0 0.0
        %1995 = vmatprep.mubr.f32.mxu0 0.0
        %1996 = vmatmul.mubr.f32.gmra.mxu0 %v1929
        %v1997 = vpop.f32.mrf.mxu0
        %v1998 = vadd.f32 0.0, %v1997
        %v1999 = vpop.f32.mrf.mxu0
        %2000 = vdwg.mxu0
        %v2002 = vsel %vm1003, %v1918, 0
        %2004 = vmatprep.subr.mxu0 0.0
        %2005 = vmatpush1.msra.mxu0 0.0
        %2006 = vmatprep.subr.mxu0 0.0
        %2007 = vmatpush1.msra.mxu0 0.0
        %2008 = vmatprep.subr.mxu0 0.0
        %2009 = vmatpush1.msra.mxu0 0.0
        %2010 = vmatprep.subr.mxu0 0.0
        %2011 = vmatpush1.msra.mxu0 0.0
        %2012 = vmatprep.subr.mxu0 0.0
        %2013 = vmatpush1.msra.mxu0 0.0
        %2014 = vmatprep.subr.mxu0 0.0
        %2015 = vmatpush1.msra.mxu0 0.0
        %2016 = vmatprep.subr.mxu0 0.0
        %2017 = vmatpush1.msra.mxu0 0.0
        %2018 = vmatprep.subr.mxu0 0.0
        %2019 = vmatpush1.msra.mxu0 0.0
        %2020 = vmatprep.subr.mxu0 0.0
        %2021 = vmatpush1.msra.mxu0 0.0
        %2022 = vmatprep.subr.mxu0 0.0
        %2023 = vmatpush1.msra.mxu0 0.0
        %2024 = vmatprep.subr.mxu0 0.0
        %2025 = vmatpush1.msra.mxu0 0.0
        %2026 = vmatprep.subr.mxu0 0.0
        %2027 = vmatpush1.msra.mxu0 0.0
        %2028 = vmatprep.subr.mxu0 0.0
        %2029 = vmatpush1.msra.mxu0 0.0
        %2030 = vmatprep.subr.mxu0 0.0
        %2031 = vmatpush1.msra.mxu0 0.0
        %2032 = vmatprep.subr.mxu0 0.0
        %2033 = vmatpush1.msra.mxu0 0.0
        %2034 = vmatprep.subr.mxu0 0.0
        %2035 = vmatpush1.msra.mxu0 %v1925
        %2036 = vmatprep.subr.mxu0 0.0
        %2037 = vmatpush2.msra.mxu0 0.0
        %2038 = vmatprep.subr.mxu0 0.0
        %2039 = vmatpush2.msra.mxu0 0.0
        %2040 = vmatprep.subr.mxu0 0.0
        %2041 = vmatpush2.msra.mxu0 0.0
        %2042 = vmatprep.subr.mxu0 0.0
        %2043 = vmatpush2.msra.mxu0 0.0
        %2044 = vmatprep.subr.mxu0 0.0
        %2045 = vmatpush2.msra.mxu0 0.0
        %2046 = vmatprep.subr.mxu0 0.0
        %2047 = vmatpush2.msra.mxu0 0.0
        %2048 = vmatprep.subr.mxu0 0.0
        %2049 = vmatpush2.msra.mxu0 0.0
        %2050 = vmatprep.subr.mxu0 0.0
        %2051 = vmatpush2.msra.mxu0 0.0
        %2052 = vmatprep.subr.mxu0 0.0
        %2053 = vmatpush2.msra.mxu0 0.0
        %2054 = vmatprep.subr.mxu0 0.0
        %2055 = vmatpush2.msra.mxu0 0.0
        %2056 = vmatprep.subr.mxu0 0.0
        %2057 = vmatpush2.msra.mxu0 0.0
        %2058 = vmatprep.subr.mxu0 0.0
        %2059 = vmatpush2.msra.mxu0 0.0
        %2060 = vmatprep.subr.mxu0 0.0
        %2061 = vmatpush2.msra.mxu0 0.0
        %2062 = vmatprep.subr.mxu0 0.0
        %2063 = vmatpush2.msra.mxu0 0.0
        %2064 = vmatprep.subr.mxu0 0.0
        %2065 = vmatpush2.msra.mxu0 0.0
        %2066 = vmatprep.subr.mxu0 0.0
        %2067 = vmatpush2.msra.mxu0 0.0
        %2068 = vmatprep.mubr.f32.mxu0 0.0
        %2069 = vmatmul.mubr.f32.gmra.mxu0 %v2002
        %v2070 = vpop.f32.mrf.mxu0
        %v2071 = vadd.f32 %v1998, %v2070
        %v2072 = vpop.f32.mrf.mxu0
        %2073 = vdwg.mxu0
        %s2074 = scalar_lea.vmem %s5, 16
        %v2075 = vld [vmem:[%s2074] sm:$0xff]
        %v2077 = vsel %vm1003, %v1922, 0
        %2079 = vmatprep.subr.mxu0 0.0
        %2080 = vmatpush1.msra.mxu0 0.0
        %2081 = vmatprep.subr.mxu0 0.0
        %2082 = vmatpush1.msra.mxu0 0.0
        %2083 = vmatprep.subr.mxu0 0.0
        %2084 = vmatpush1.msra.mxu0 0.0
        %2085 = vmatprep.subr.mxu0 0.0
        %2086 = vmatpush1.msra.mxu0 0.0
        %2087 = vmatprep.subr.mxu0 0.0
        %2088 = vmatpush1.msra.mxu0 0.0
        %2089 = vmatprep.subr.mxu0 0.0
        %2090 = vmatpush1.msra.mxu0 0.0
        %2091 = vmatprep.subr.mxu0 0.0
        %2092 = vmatpush1.msra.mxu0 0.0
        %2093 = vmatprep.subr.mxu0 0.0
        %2094 = vmatpush1.msra.mxu0 0.0
        %2095 = vmatprep.subr.mxu0 0.0
        %2096 = vmatpush1.msra.mxu0 0.0
        %2097 = vmatprep.subr.mxu0 0.0
        %2098 = vmatpush1.msra.mxu0 0.0
        %2099 = vmatprep.subr.mxu0 0.0
        %2100 = vmatpush1.msra.mxu0 0.0
        %2101 = vmatprep.subr.mxu0 0.0
        %2102 = vmatpush1.msra.mxu0 0.0
        %2103 = vmatprep.subr.mxu0 0.0
        %2104 = vmatpush1.msra.mxu0 0.0
        %2105 = vmatprep.subr.mxu0 0.0
        %2106 = vmatpush1.msra.mxu0 0.0
        %2107 = vmatprep.subr.mxu0 0.0
        %2108 = vmatpush1.msra.mxu0 0.0
        %2109 = vmatprep.subr.mxu0 0.0
        %2110 = vmatpush1.msra.mxu0 %v2075
        %2111 = vmatprep.subr.mxu0 0.0
        %2112 = vmatpush2.msra.mxu0 0.0
        %2113 = vmatprep.subr.mxu0 0.0
        %2114 = vmatpush2.msra.mxu0 0.0
        %2115 = vmatprep.subr.mxu0 0.0
        %2116 = vmatpush2.msra.mxu0 0.0
        %2117 = vmatprep.subr.mxu0 0.0
        %2118 = vmatpush2.msra.mxu0 0.0
        %2119 = vmatprep.subr.mxu0 0.0
        %2120 = vmatpush2.msra.mxu0 0.0
        %2121 = vmatprep.subr.mxu0 0.0
        %2122 = vmatpush2.msra.mxu0 0.0
        %2123 = vmatprep.subr.mxu0 0.0
        %2124 = vmatpush2.msra.mxu0 0.0
        %2125 = vmatprep.subr.mxu0 0.0
        %2126 = vmatpush2.msra.mxu0 0.0
        %2127 = vmatprep.subr.mxu0 0.0
        %2128 = vmatpush2.msra.mxu0 0.0
        %2129 = vmatprep.subr.mxu0 0.0
        %2130 = vmatpush2.msra.mxu0 0.0
        %2131 = vmatprep.subr.mxu0 0.0
        %2132 = vmatpush2.msra.mxu0 0.0
        %2133 = vmatprep.subr.mxu0 0.0
        %2134 = vmatpush2.msra.mxu0 0.0
        %2135 = vmatprep.subr.mxu0 0.0
        %2136 = vmatpush2.msra.mxu0 0.0
        %2137 = vmatprep.subr.mxu0 0.0
        %2138 = vmatpush2.msra.mxu0 0.0
        %2139 = vmatprep.subr.mxu0 0.0
        %2140 = vmatpush2.msra.mxu0 0.0
        %2141 = vmatprep.subr.mxu0 0.0
        %2142 = vmatpush2.msra.mxu0 0.0
        %2143 = vmatprep.mubr.f32.mxu0 0.0
        %2144 = vmatmul.mubr.f32.gmra.mxu0 %v2077
        %v2145 = vpop.f32.mrf.mxu0
        %v2146 = vadd.f32 0.0, %v2145
        %v2147 = vpop.f32.mrf.mxu0
        %2148 = vdwg.mxu0
        %v2149 = vadd.f32 %v2071, %v2146
        %s2150 = scalar_lea.vmem %s5, 24
        %v2151 = vld [vmem:[%s2150] sm:$0xff]
        %v2153 = vsel %vm1003, %v1924, 0
        %2155 = vmatprep.subr.mxu0 0.0
        %2156 = vmatpush1.msra.mxu0 0.0
        %2157 = vmatprep.subr.mxu0 0.0
        %2158 = vmatpush1.msra.mxu0 0.0
        %2159 = vmatprep.subr.mxu0 0.0
        %2160 = vmatpush1.msra.mxu0 0.0
        %2161 = vmatprep.subr.mxu0 0.0
        %2162 = vmatpush1.msra.mxu0 0.0
        %2163 = vmatprep.subr.mxu0 0.0
        %2164 = vmatpush1.msra.mxu0 0.0
        %2165 = vmatprep.subr.mxu0 0.0
        %2166 = vmatpush1.msra.mxu0 0.0
        %2167 = vmatprep.subr.mxu0 0.0
        %2168 = vmatpush1.msra.mxu0 0.0
        %2169 = vmatprep.subr.mxu0 0.0
        %2170 = vmatpush1.msra.mxu0 0.0
        %2171 = vmatprep.subr.mxu0 0.0
        %2172 = vmatpush1.msra.mxu0 0.0
        %2173 = vmatprep.subr.mxu0 0.0
        %2174 = vmatpush1.msra.mxu0 0.0
        %2175 = vmatprep.subr.mxu0 0.0
        %2176 = vmatpush1.msra.mxu0 0.0
        %2177 = vmatprep.subr.mxu0 0.0
        %2178 = vmatpush1.msra.mxu0 0.0
        %2179 = vmatprep.subr.mxu0 0.0
        %2180 = vmatpush1.msra.mxu0 0.0
        %2181 = vmatprep.subr.mxu0 0.0
        %2182 = vmatpush1.msra.mxu0 0.0
        %2183 = vmatprep.subr.mxu0 0.0
        %2184 = vmatpush1.msra.mxu0 0.0
        %2185 = vmatprep.subr.mxu0 0.0
        %2186 = vmatpush1.msra.mxu0 %v2151
        %2187 = vmatprep.subr.mxu0 0.0
        %2188 = vmatpush2.msra.mxu0 0.0
        %2189 = vmatprep.subr.mxu0 0.0
        %2190 = vmatpush2.msra.mxu0 0.0
        %2191 = vmatprep.subr.mxu0 0.0
        %2192 = vmatpush2.msra.mxu0 0.0
        %2193 = vmatprep.subr.mxu0 0.0
        %2194 = vmatpush2.msra.mxu0 0.0
        %2195 = vmatprep.subr.mxu0 0.0
        %2196 = vmatpush2.msra.mxu0 0.0
        %2197 = vmatprep.subr.mxu0 0.0
        %2198 = vmatpush2.msra.mxu0 0.0
        %2199 = vmatprep.subr.mxu0 0.0
        %2200 = vmatpush2.msra.mxu0 0.0
        %2201 = vmatprep.subr.mxu0 0.0
        %2202 = vmatpush2.msra.mxu0 0.0
        %2203 = vmatprep.subr.mxu0 0.0
        %2204 = vmatpush2.msra.mxu0 0.0
        %2205 = vmatprep.subr.mxu0 0.0
        %2206 = vmatpush2.msra.mxu0 0.0
        %2207 = vmatprep.subr.mxu0 0.0
        %2208 = vmatpush2.msra.mxu0 0.0
        %2209 = vmatprep.subr.mxu0 0.0
        %2210 = vmatpush2.msra.mxu0 0.0
        %2211 = vmatprep.subr.mxu0 0.0
        %2212 = vmatpush2.msra.mxu0 0.0
        %2213 = vmatprep.subr.mxu0 0.0
        %2214 = vmatpush2.msra.mxu0 0.0
        %2215 = vmatprep.subr.mxu0 0.0
        %2216 = vmatpush2.msra.mxu0 0.0
        %2217 = vmatprep.subr.mxu0 0.0
        %2218 = vmatpush2.msra.mxu0 0.0
        %2219 = vmatprep.mubr.f32.mxu0 0.0
        %2220 = vmatmul.mubr.f32.gmra.mxu0 %v2153
        %v2221 = vpop.f32.mrf.mxu0
        %v2222 = vadd.f32 0.0, %v2221
        %v2223 = vpop.f32.mrf.mxu0
        %2224 = vdwg.mxu0
        %v2225 = vadd.f32 %v2149, %v2222
        %v2226 = vld [vmem:[%s6] sm:$0x1]
        %v2228 = vlaneseq
        %v2229 = vshrl.u32 %v2228, 7
        %v2230 = vsub.s32 0, %v2229
        %v2231 = vrot.slane %v2226, %v2230
        %v2233 = vadd.f32 %v2225, %v2231
        %2234 = vst.msk [vmem:[%s294] sm:$0xff] %vm929, %v2233
        %s2235 = sand.u32 %s200, 1
        %s2236 = scalar_lea.sflag [#allocation6], %s2235
        %s2237 = sand.u32 %s200, 1
        %s2238 = smul.addr %s2237, 8
        %s2239 = scalar_lea.vmem [#allocation5], %s2238
        // Predicated region
        $region53: #{tpu_custom_call.1} parent=47 // pred_check
          %p2240 = pneg %p210
        $region54: #{tpu_custom_call.1} parent=47 // pred_check_branch
          %2242 = sbr.rel (%p2240) target = $region56
        $region55: #{tpu_custom_call.1} parent=47 // pred_region
          %s2244 = ssub.s32 128, 128
          %2245 = vsyncadd %s2236, %s2244
          %s2246 = sadd.s32 %s26, %s25
          %s2247 = smul.addr %s2246, 128
          %s2248 = scalar_lea.hbm %s7, %s2247
          %s2250 = sshll.u32 %s2239, 4
          %s2251 = int_to_ptr.vmem [resolvable:$true] %s2250
          %2253 = dma.vmem_to_hbm [thread:$0]  %s2251, 128, %s2248, %s2236
        $region56: #{tpu_custom_call.1} parent=47 // pred_fallthru
          _
      $region48: #{tpu_custom_call.1} parent=5 // pred_fallthru
        _
      %p2254 = scmp.le.s32.totalorder 2, %s16
      // Predicated region
      $region57: #{tpu_custom_call.1} parent=5 // pred_check
        %p2255 = pneg %p2254
      $region58: #{tpu_custom_call.1} parent=5 // pred_check_branch
        %2257 = sbr.rel (%p2255) target = $region60
      $region59: #{tpu_custom_call.1} parent=5 // pred_region
        %s2258 = ssub.s32 %s16, 2
        // Predicated region
        $region61: #{tpu_custom_call.1} parent=59 // pred_check
          %p2259 = pneg %p216
        $region62: #{tpu_custom_call.1} parent=59 // pred_check_branch
          %2261 = sbr.rel (%p2259) target = $region64
        $region63: #{tpu_custom_call.1} parent=59 // pred_region
          %s2262 = sand.u32 %s201, 1
          %s2263 = scalar_lea.sflag [#allocation6], %s2262
          %s2264 = sand.u32 %s201, 1
          %s2265 = smul.addr %s2264, 8
          %s2266 = scalar_lea.vmem [#allocation5], %s2265
          %2267 = dma.done %s2263, 128
        $region64: #{tpu_custom_call.1} parent=59 // pred_fallthru
          _
      $region60: #{tpu_custom_call.1} parent=5 // pred_fallthru
        _
    $region6: #{tpu_custom_call.1} parent=1 // loop_footer
      %s20 = sadd.s32 1, %s16
    $region7: #{tpu_custom_call.1} parent=1 // loop_footer_branch
      %15 = sbr.rel target = $region3
    $region8: #{tpu_custom_call.1} parent=1 // loop_exit
      _
    %2268 = vsyncpa [#allocation6], 1
    %s2269 = scalar_lea.sflag [#allocation6], 1
    %2270 = vsyncpa %s2269, 1

// kernel: tpu_custom_call.1
$region0: #{tpu_custom_call.1}
  #allocation0 [shape = 'u32[]', space=smem, size = 0x4, offset = 0x4, fixed_abs, tag = 'smem constant byte address 0x4 - core index']
  #allocation1 [shape = 'u32[144,128]{1,0:T(1,128)}', space=vmem, size = 0x12000, scoped, tag = 'internal scratch']
  #allocation2 [shape = 'f32[4,8,8]{2,1,0:T(8,128)}', space=vmem, size = 0x4000, scoped, tag = 'scratch operand']
  #allocation3 [shape = 'f32[4,8,8]{2,1,0:T(8,128)}', space=vmem, size = 0x4000, scoped, tag = 'scratch operand']
  #allocation4 [shape = 'f32[4,8,8]{2,1,0:T(8,128)}', space=vmem, size = 0x4000, scoped, tag = 'scratch operand']
  %s0 = inlined_call_operand.vmem [shape: f32[2,8,32], index: 0, kind: input, shape index: {}]
  %s1 = inlined_call_operand.vmem [shape: f32[2,1,8], index: 1, kind: input, shape index: {}]
  %s2 = inlined_call_operand.vmem [shape: f32[4,32,8], index: 2, kind: input, shape index: {}]
  %s3 = inlined_call_operand.vmem [shape: f32[4,32,8], index: 3, kind: input, shape index: {}]
  %s4 = inlined_call_operand.vmem [shape: f32[4,32,8], index: 4, kind: input, shape index: {}]
  %s5 = inlined_call_operand.vmem [shape: f32[4,8,32], index: 5, kind: input, shape index: {}]
  %s6 = inlined_call_operand.vmem [shape: f32[1,32], index: 6, kind: input, shape index: {}]
  %s7 = inlined_call_operand.hbm [shape: f32[2,8,32], index: 7, kind: output, shape index: {}]
  %s8 = sld [smem:[#allocation0]]
  $region65: #{tpu_custom_call.1} parent=0
    _
  %s10 = ssub.s32 1, %s8
  %s11 = scalar_select 0, %s10, %s8
  $region1: #{tpu_custom_call.1} parent=0
    #allocation5 [shape = 'u8[8192]{0}', space=vmem, size = 0x2000, scoped, tag = 'output window, operand 0']
    #allocation6 [shape = 's32[2]{0}', space=sflag, size = 0x8, scoped, tag = 'scoped memory for tpu_custom_call.1']
    %12 = vsyncpa [#allocation6], 0
    %s13 = scalar_lea.sflag [#allocation6], 1
    %14 = vsyncpa %s13, 0
    loop: start=0, step=1, limit=4
    $region2: #{tpu_custom_call.1} parent=1 // loop_pre_header
      _
    $region3: #{tpu_custom_call.1} parent=1 // loop_header
      %s16 = sphi 0, %s20
      %p17 = scmp.ge.s32.totalorder %s16, 4
      %s23 = sphi 0, %s35
      %s24 = sphi 0, %s31
      %s25 = sphi 0, %s23
      %s26 = sphi 0, %s24
      %s27 = sphi 0, %s25
      %s28 = sphi 0, %s26
      %s38 = sphi 0, %s40
      %s41 = sphi 0, %s38
      %s42 = sphi 0, %s41
      %s58 = sphi 0, %s42
      %s64 = sphi 0, %s66
      %s67 = sphi 0, %s64
      %s68 = sphi 0, %s67
      %s84 = sphi 0, %s68
      %s88 = sphi 0, %s88
      %s90 = sphi 0, %s88
      %s91 = sphi 0, %s90
      %s105 = sphi 0, %s91
      %s109 = sphi 0, %s109
      %s111 = sphi 0, %s109
      %s112 = sphi 0, %s111
      %s126 = sphi 0, %s112
      %s130 = sphi 0, %s130
      %s132 = sphi 0, %s130
      %s133 = sphi 0, %s132
      %s147 = sphi 0, %s133
      %s151 = sphi 0, %s151
      %s153 = sphi 0, %s151
      %s154 = sphi 0, %s153
      %s168 = sphi 0, %s154
      %s172 = sphi 0, %s172
      %s174 = sphi 0, %s172
      %s175 = sphi 0, %s174
      %s189 = sphi 0, %s175
      %s197 = sphi 0, %s199
      %s200 = sphi 0, %s197
      %s201 = sphi 0, %s200
      %s217 = sphi 0, %s201
    $region4: #{tpu_custom_call.1} parent=1 // loop_header_branch
      %19 = sbr.rel (%p17) target = $region8
    $region5: #{tpu_custom_call.1} parent=1 // loop_body
      %s21 = ssub.s32 %s16, 1
      %s22 = ssub.s32 %s16, 2
      %s29 = sadd.s32 1, %s24
      %p30 = scmp.ge.s32.totalorder %s29, 1
      %s31 = scalar_select %p30, 0, %s29
      %s32 = sadd.s32 1, %s23
      %s33 = scalar_select %p30, %s32, %s23
      %p34 = scmp.ge.s32.totalorder %s33, 2
      %s35 = scalar_select %p34, 0, %s33
      %s36 = ssub.s32 %s23, %s35
      %p37 = scmp.eq.s32.totalorder %s36, 0
      %s39 = sadd.s32 %s38, 1
      %s40 = scalar_select %p37, %s38, %s39
      %p43 = pneg %p37
      %p44 = scmp.eq.s32.totalorder %s16, 1
      %p45 = por %p43, %p44
      %p46 = scmp.ne.s32.totalorder %s38, %s41
      %p47 = scmp.eq.s32.totalorder %s16, 0
      %p48 = por %p46, %p47
      %p49 = scmp.ne.s32.totalorder %s38, %s41
      %p50 = scmp.eq.s32.totalorder %s21, 1
      %p51 = por %p49, %p50
      %p52 = scmp.ne.s32.totalorder %s41, %s42
      %p53 = scmp.eq.s32.totalorder %s21, 0
      %p54 = por %p52, %p53
      %p55 = scmp.ne.s32.totalorder %s41, %s42
      %p56 = scmp.eq.s32.totalorder %s22, 1
      %p57 = por %p55, %p56
      %p59 = scmp.ne.s32.totalorder %s42, %s58
      %p60 = scmp.eq.s32.totalorder %s22, 0
      %p61 = por %p59, %p60
      %s62 = ssub.s32 %s23, %s35
      %p63 = scmp.eq.s32.totalorder %s62, 0
      %s65 = sadd.s32 %s64, 1
      %s66 = scalar_select %p63, %s64, %s65
      %p69 = pneg %p63
      %p70 = scmp.eq.s32.totalorder %s16, 1
      %p71 = por %p69, %p70
      %p72 = scmp.ne.s32.totalorder %s64, %s67
      %p73 = scmp.eq.s32.totalorder %s16, 0
      %p74 = por %p72, %p73
      %p75 = scmp.ne.s32.totalorder %s64, %s67
      %p76 = scmp.eq.s32.totalorder %s21, 1
      %p77 = por %p75, %p76
      %p78 = scmp.ne.s32.totalorder %s67, %s68
      %p79 = scmp.eq.s32.totalorder %s21, 0
      %p80 = por %p78, %p79
      %p81 = scmp.ne.s32.totalorder %s67, %s68
      %p82 = scmp.eq.s32.totalorder %s22, 1
      %p83 = por %p81, %p82
      %p85 = scmp.ne.s32.totalorder %s68, %s84
      %p86 = scmp.eq.s32.totalorder %s22, 0
      %p87 = por %p85, %p86
      %s89 = sadd.s32 %s88, 1
      %p92 = scmp.eq.s32.totalorder %s16, 1
      %p93 = scmp.ne.s32.totalorder %s88, %s90
      %p94 = scmp.eq.s32.totalorder %s16, 0
      %p95 = por %p93, %p94
      %p96 = scmp.ne.s32.totalorder %s88, %s90
      %p97 = scmp.eq.s32.totalorder %s21, 1
      %p98 = por %p96, %p97
      %p99 = scmp.ne.s32.totalorder %s90, %s91
      %p100 = scmp.eq.s32.totalorder %s21, 0
      %p101 = por %p99, %p100
      %p102 = scmp.ne.s32.totalorder %s90, %s91
      %p103 = scmp.eq.s32.totalorder %s22, 1
      %p104 = por %p102, %p103
      %p106 = scmp.ne.s32.totalorder %s91, %s105
      %p107 = scmp.eq.s32.totalorder %s22, 0
      %p108 = por %p106, %p107
      %s110 = sadd.s32 %s109, 1
      %p113 = scmp.eq.s32.totalorder %s16, 1
      %p114 = scmp.ne.s32.totalorder %s109, %s111
      %p115 = scmp.eq.s32.totalorder %s16, 0
      %p116 = por %p114, %p115
      %p117 = scmp.ne.s32.totalorder %s109, %s111
      %p118 = scmp.eq.s32.totalorder %s21, 1
      %p119 = por %p117, %p118
      %p120 = scmp.ne.s32.totalorder %s111, %s112
      %p121 = scmp.eq.s32.totalorder %s21, 0
      %p122 = por %p120, %p121
      %p123 = scmp.ne.s32.totalorder %s111, %s112
      %p124 = scmp.eq.s32.totalorder %s22, 1
      %p125 = por %p123, %p124
      %p127 = scmp.ne.s32.totalorder %s112, %s126
      %p128 = scmp.eq.s32.totalorder %s22, 0
      %p129 = por %p127, %p128
      %s131 = sadd.s32 %s130, 1
      %p134 = scmp.eq.s32.totalorder %s16, 1
      %p135 = scmp.ne.s32.totalorder %s130, %s132
      %p136 = scmp.eq.s32.totalorder %s16, 0
      %p137 = por %p135, %p136
      %p138 = scmp.ne.s32.totalorder %s130, %s132
      %p139 = scmp.eq.s32.totalorder %s21, 1
      %p140 = por %p138, %p139
      %p141 = scmp.ne.s32.totalorder %s132, %s133
      %p142 = scmp.eq.s32.totalorder %s21, 0
      %p143 = por %p141, %p142
      %p144 = scmp.ne.s32.totalorder %s132, %s133
      %p145 = scmp.eq.s32.totalorder %s22, 1
      %p146 = por %p144, %p145
      %p148 = scmp.ne.s32.totalorder %s133, %s147
      %p149 = scmp.eq.s32.totalorder %s22, 0
      %p150 = por %p148, %p149
      %s152 = sadd.s32 %s151, 1
      %p155 = scmp.eq.s32.totalorder %s16, 1
      %p156 = scmp.ne.s32.totalorder %s151, %s153
      %p157 = scmp.eq.s32.totalorder %s16, 0
      %p158 = por %p156, %p157
      %p159 = scmp.ne.s32.totalorder %s151, %s153
      %p160 = scmp.eq.s32.totalorder %s21, 1
      %p161 = por %p159, %p160
      %p162 = scmp.ne.s32.totalorder %s153, %s154
      %p163 = scmp.eq.s32.totalorder %s21, 0
      %p164 = por %p162, %p163
      %p165 = scmp.ne.s32.totalorder %s153, %s154
      %p166 = scmp.eq.s32.totalorder %s22, 1
      %p167 = por %p165, %p166
      %p169 = scmp.ne.s32.totalorder %s154, %s168
      %p170 = scmp.eq.s32.totalorder %s22, 0
      %p171 = por %p169, %p170
      %s173 = sadd.s32 %s172, 1
      %p176 = scmp.eq.s32.totalorder %s16, 1
      %p177 = scmp.ne.s32.totalorder %s172, %s174
      %p178 = scmp.eq.s32.totalorder %s16, 0
      %p179 = por %p177, %p178
      %p180 = scmp.ne.s32.totalorder %s172, %s174
      %p181 = scmp.eq.s32.totalorder %s21, 1
      %p182 = por %p180, %p181
      %p183 = scmp.ne.s32.totalorder %s174, %s175
      %p184 = scmp.eq.s32.totalorder %s21, 0
      %p185 = por %p183, %p184
      %p186 = scmp.ne.s32.totalorder %s174, %s175
      %p187 = scmp.eq.s32.totalorder %s22, 1
      %p188 = por %p186, %p187
      %p190 = scmp.ne.s32.totalorder %s175, %s189
      %p191 = scmp.eq.s32.totalorder %s22, 0
      %p192 = por %p190, %p191
      %s193 = ssub.s32 %s23, %s35
      %s194 = ssub.s32 %s24, %s31
      %s195 = sor.u32 %s193, %s194
      %p196 = scmp.eq.s32.totalorder %s195, 0
      %s198 = sadd.s32 %s197, 1
      %s199 = scalar_select %p196, %s197, %s198
      %p202 = pneg %p196
      %p203 = scmp.eq.s32.totalorder %s16, 1
      %p204 = por %p202, %p203
      %p205 = scmp.ne.s32.totalorder %s197, %s200
      %p206 = scmp.eq.s32.totalorder %s16, 0
      %p207 = por %p205, %p206
      %p208 = scmp.ne.s32.totalorder %s197, %s200
      %p209 = scmp.eq.s32.totalorder %s21, 1
      %p210 = por %p208, %p209
      %p211 = scmp.ne.s32.totalorder %s200, %s201
      %p212 = scmp.eq.s32.totalorder %s21, 0
      %p213 = por %p211, %p212
      %p214 = scmp.ne.s32.totalorder %s200, %s201
      %p215 = scmp.eq.s32.totalorder %s22, 1
      %p216 = por %p214, %p215
      %p218 = scmp.ne.s32.totalorder %s201, %s217
      %p219 = scmp.eq.s32.totalorder %s22, 0
      %p220 = por %p218, %p219
      %p221 = scmp.le.s32.totalorder 1, %s16
      %p222 = scmp.lt.s32.totalorder %s16, 3
      %p223 = pnand %p221, %p222
      %p224 = pneg %p223
      // Predicated region
      $region9: #{tpu_custom_call.1} parent=5 // pred_check
        _
      $region10: #{tpu_custom_call.1} parent=5 // pred_check_branch
        %226 = sbr.rel (%p223) target = $region12
      $region11: #{tpu_custom_call.1} parent=5 // pred_region
        %s227 = ssub.s32 %s16, 1
        // Predicated region
        $region13: #{tpu_custom_call.1} parent=11 // pred_check
          %p228 = pneg %p101
        $region14: #{tpu_custom_call.1} parent=11 // pred_check_branch
          %230 = sbr.rel (%p228) target = $region16
        $region15: #{tpu_custom_call.1} parent=11 // pred_region
          _
        $region16: #{tpu_custom_call.1} parent=11 // pred_fallthru
          _
        // Predicated region
        $region17: #{tpu_custom_call.1} parent=11 // pred_check
          %p231 = pneg %p122
        $region18: #{tpu_custom_call.1} parent=11 // pred_check_branch
          %233 = sbr.rel (%p231) target = $region20
        $region19: #{tpu_custom_call.1} parent=11 // pred_region
          _
        $region20: #{tpu_custom_call.1} parent=11 // pred_fallthru
          _
        // Predicated region
        $region21: #{tpu_custom_call.1} parent=11 // pred_check
          %p234 = pneg %p143
        $region22: #{tpu_custom_call.1} parent=11 // pred_check_branch
          %236 = sbr.rel (%p234) target = $region24
        $region23: #{tpu_custom_call.1} parent=11 // pred_region
          _
        $region24: #{tpu_custom_call.1} parent=11 // pred_fallthru
          _
        // Predicated region
        $region25: #{tpu_custom_call.1} parent=11 // pred_check
          %p237 = pneg %p164
        $region26: #{tpu_custom_call.1} parent=11 // pred_check_branch
          %239 = sbr.rel (%p237) target = $region28
        $region27: #{tpu_custom_call.1} parent=11 // pred_region
          _
        $region28: #{tpu_custom_call.1} parent=11 // pred_fallthru
          _
        // Predicated region
        $region29: #{tpu_custom_call.1} parent=11 // pred_check
          %p240 = pneg %p185
        $region30: #{tpu_custom_call.1} parent=11 // pred_check_branch
          %242 = sbr.rel (%p240) target = $region32
        $region31: #{tpu_custom_call.1} parent=11 // pred_region
          _
        $region32: #{tpu_custom_call.1} parent=11 // pred_fallthru
          _
      $region12: #{tpu_custom_call.1} parent=5 // pred_fallthru
        _
      %p243 = scmp.lt.s32.totalorder %s16, 2
      // Predicated region
      $region33: #{tpu_custom_call.1} parent=5 // pred_check
        %p244 = pneg %p243
      $region34: #{tpu_custom_call.1} parent=5 // pred_check_branch
        %246 = sbr.rel (%p244) target = $region36
      $region35: #{tpu_custom_call.1} parent=5 // pred_region
        // Predicated region
        $region37: #{tpu_custom_call.1} parent=35 // pred_check
          %p247 = pneg %p48
        $region38: #{tpu_custom_call.1} parent=35 // pred_check_branch
          %249 = sbr.rel (%p247) target = $region40
        $region39: #{tpu_custom_call.1} parent=35 // pred_region
          %p250 = scmp.lt.s32.totalorder %s23, 1
          %s251 = scalar_select %p250, %s23, 1
          %s252 = smul.addr %s251, 8
          %s253 = scalar_lea.vmem %s0, %s252
        $region40: #{tpu_custom_call.1} parent=35 // pred_fallthru
          _
        // Predicated region
        $region41: #{tpu_custom_call.1} parent=35 // pred_check
          %p254 = pneg %p74
        $region42: #{tpu_custom_call.1} parent=35 // pred_check_branch
          %256 = sbr.rel (%p254) target = $region44
        $region43: #{tpu_custom_call.1} parent=35 // pred_region
          %p257 = scmp.lt.s32.totalorder %s23, 1
          %s258 = scalar_select %p257, %s23, 1
          %s259 = scalar_lea.vmem %s1, %s258
        $region44: #{tpu_custom_call.1} parent=35 // pred_fallthru
          _
      $region36: #{tpu_custom_call.1} parent=5 // pred_fallthru
        _
      %p260 = scmp.le.s32.totalorder 1, %s16
      %p261 = scmp.lt.s32.totalorder %s16, 3
      %p262 = pnand %p260, %p261
      %p263 = pneg %p262
      // Predicated region
      $region45: #{tpu_custom_call.1} parent=5 // pred_check
        _
      $region46: #{tpu_custom_call.1} parent=5 // pred_check_branch
        %265 = sbr.rel (%p262) target = $region48
      $region47: #{tpu_custom_call.1} parent=5 // pred_region
        %s266 = ssub.s32 %s16, 1
        %p267 = scmp.lt.s32.totalorder %s25, 1
        %s268 = scalar_select %p267, %s25, 1
        %s269 = smul.addr %s268, 8
        %s270 = scalar_lea.vmem %s0, %s269
        %p271 = pneg %p54
        %p272 = pneg %p51
        %p273 = scmp.lt.s32.totalorder %s25, 1
        %s274 = scalar_select %p273, %s25, 1
        %s275 = scalar_lea.vmem %s1, %s274
        %p276 = pneg %p80
        %p277 = pneg %p77
        %p278 = pneg %p101
        %p279 = pneg %p98
        %p280 = pneg %p122
        %p281 = pneg %p119
        %p282 = pneg %p143
        %p283 = pneg %p140
        %p284 = pneg %p164
        %p285 = pneg %p161
        %p286 = pneg %p185
        %p287 = pneg %p182
        %p288 = pneg %p213
        %p289 = pneg %p210
        %s290 = sand.u32 %s200, 1
        %s291 = scalar_lea.sflag [#allocation6], %s290
        %s292 = sand.u32 %s200, 1
        %s293 = smul.addr %s292, 8
        %s294 = scalar_lea.vmem [#allocation5], %s293
        %p295 = scmp.lt.s32.totalorder %s25, 1
        %s296 = scalar_select %p295, %s25, 1
        %s297 = smul.addr %s296, 8
        %s298 = scalar_lea.vmem %s0, %s297
        %p299 = scmp.lt.s32.totalorder %s25, 1
        %s300 = scalar_select %p299, %s25, 1
        %s301 = scalar_lea.vmem %s1, %s300
        %p302 = scmp.eq.s32.totalorder %s26, 0
        // Predicated region
        $region49: #{tpu_custom_call.1} parent=47 // pred_check
          %p303 = pneg %p302
        $region50: #{tpu_custom_call.1} parent=47 // pred_check_branch
          %305 = sbr.rel (%p303) target = $region52
        $region51: #{tpu_custom_call.1} parent=47 // pred_region
          %v306 = vld [vmem:[%s298] sm:$0xff]
          %v307 = vld [vmem:[%s3] sm:$0xff]
          %v308 = vld [vmem:[%s3 + $0x8] sm:$0xff]
          %v309 = vld [vmem:[%s3 + $0x10] sm:$0xff]
          %v310 = vld [vmem:[%s3 + $0x18] sm:$0xff]
          %vm311 = vcmask 261120
          %v313 = vsel %vm311, %v306, 0
          %315 = vmatprep.subr.mxu0 0.0
          %316 = vmatpush1.msra.mxu0 0.0
          %317 = vmatprep.subr.mxu0 0.0
          %318 = vmatpush1.msra.mxu0 0.0
          %319 = vmatprep.subr.mxu0 0.0
          %320 = vmatpush1.msra.mxu0 0.0
          %321 = vmatprep.subr.mxu0 0.0
          %322 = vmatpush1.msra.mxu0 0.0
          %323 = vmatprep.subr.mxu0 0.0
          %324 = vmatpush1.msra.mxu0 0.0
          %325 = vmatprep.subr.mxu0 0.0
          %326 = vmatpush1.msra.mxu0 0.0
          %327 = vmatprep.subr.mxu0 0.0
          %328 = vmatpush1.msra.mxu0 0.0
          %329 = vmatprep.subr.mxu0 0.0
          %330 = vmatpush1.msra.mxu0 0.0
          %331 = vmatprep.subr.mxu0 0.0
          %332 = vmatpush1.msra.mxu0 0.0
          %333 = vmatprep.subr.mxu0 0.0
          %334 = vmatpush1.msra.mxu0 0.0
          %335 = vmatprep.subr.mxu0 0.0
          %336 = vmatpush1.msra.mxu0 0.0
          %337 = vmatprep.subr.mxu0 0.0
          %338 = vmatpush1.msra.mxu0 0.0
          %339 = vmatprep.subr.mxu0 0.0
          %340 = vmatpush1.msra.mxu0 %v310
          %341 = vmatprep.subr.mxu0 0.0
          %342 = vmatpush1.msra.mxu0 %v309
          %343 = vmatprep.subr.mxu0 0.0
          %344 = vmatpush1.msra.mxu0 %v308
          %345 = vmatprep.subr.mxu0 0.0
          %346 = vmatpush1.msra.mxu0 %v307
          %347 = vmatprep.subr.mxu0 0.0
          %348 = vmatpush2.msra.mxu0 0.0
          %349 = vmatprep.subr.mxu0 0.0
          %350 = vmatpush2.msra.mxu0 0.0
          %351 = vmatprep.subr.mxu0 0.0
          %352 = vmatpush2.msra.mxu0 0.0
          %353 = vmatprep.subr.mxu0 0.0
          %354 = vmatpush2.msra.mxu0 0.0
          %355 = vmatprep.subr.mxu0 0.0
          %356 = vmatpush2.msra.mxu0 0.0
          %357 = vmatprep.subr.mxu0 0.0
          %358 = vmatpush2.msra.mxu0 0.0
          %359 = vmatprep.subr.mxu0 0.0
          %360 = vmatpush2.msra.mxu0 0.0
          %361 = vmatprep.subr.mxu0 0.0
          %362 = vmatpush2.msra.mxu0 0.0
          %363 = vmatprep.subr.mxu0 0.0
          %364 = vmatpush2.msra.mxu0 0.0
          %365 = vmatprep.subr.mxu0 0.0
          %366 = vmatpush2.msra.mxu0 0.0
          %367 = vmatprep.subr.mxu0 0.0
          %368 = vmatpush2.msra.mxu0 0.0
          %369 = vmatprep.subr.mxu0 0.0
          %370 = vmatpush2.msra.mxu0 0.0
          %371 = vmatprep.subr.mxu0 0.0
          %372 = vmatpush2.msra.mxu0 0.0
          %373 = vmatprep.subr.mxu0 0.0
          %374 = vmatpush2.msra.mxu0 0.0
          %375 = vmatprep.subr.mxu0 0.0
          %376 = vmatpush2.msra.mxu0 0.0
          %377 = vmatprep.subr.mxu0 0.0
          %378 = vmatpush2.msra.mxu0 0.0
          %379 = vmatprep.mubr.f32.mxu0 0.0
          %380 = vmatmul.mubr.f32.gmra.mxu0 %v313
          %v381 = vpop.f32.mrf.mxu0
          %v382 = vadd.f32 0.0, %v381
          %v383 = vpop.f32.mrf.mxu0
          %384 = vdwg.mxu0
          %vm385 = vcmask 64512
          %386 = vst.msk [vmem:[#allocation3] sm:$0xff] %vm385, %v382
          %v387 = vld [vmem:[%s4] sm:$0xff]
          %v388 = vld [vmem:[%s4 + $0x8] sm:$0xff]
          %v389 = vld [vmem:[%s4 + $0x10] sm:$0xff]
          %v390 = vld [vmem:[%s4 + $0x18] sm:$0xff]
          %391 = vmatprep.subr.mxu0 0.0
          %392 = vmatpush1.msra.mxu0 0.0
          %393 = vmatprep.subr.mxu0 0.0
          %394 = vmatpush1.msra.mxu0 0.0
          %395 = vmatprep.subr.mxu0 0.0
          %396 = vmatpush1.msra.mxu0 0.0
          %397 = vmatprep.subr.mxu0 0.0
          %398 = vmatpush1.msra.mxu0 0.0
          %399 = vmatprep.subr.mxu0 0.0
          %400 = vmatpush1.msra.mxu0 0.0
          %401 = vmatprep.subr.mxu0 0.0
          %402 = vmatpush1.msra.mxu0 0.0
          %403 = vmatprep.subr.mxu0 0.0
          %404 = vmatpush1.msra.mxu0 0.0
          %405 = vmatprep.subr.mxu0 0.0
          %406 = vmatpush1.msra.mxu0 0.0
          %407 = vmatprep.subr.mxu0 0.0
          %408 = vmatpush1.msra.mxu0 0.0
          %409 = vmatprep.subr.mxu0 0.0
          %410 = vmatpush1.msra.mxu0 0.0
          %411 = vmatprep.subr.mxu0 0.0
          %412 = vmatpush1.msra.mxu0 0.0
          %413 = vmatprep.subr.mxu0 0.0
          %414 = vmatpush1.msra.mxu0 0.0
          %415 = vmatprep.subr.mxu0 0.0
          %416 = vmatpush1.msra.mxu0 %v390
          %417 = vmatprep.subr.mxu0 0.0
          %418 = vmatpush1.msra.mxu0 %v389
          %419 = vmatprep.subr.mxu0 0.0
          %420 = vmatpush1.msra.mxu0 %v388
          %421 = vmatprep.subr.mxu0 0.0
          %422 = vmatpush1.msra.mxu0 %v387
          %423 = vmatprep.subr.mxu0 0.0
          %424 = vmatpush2.msra.mxu0 0.0
          %425 = vmatprep.subr.mxu0 0.0
          %426 = vmatpush2.msra.mxu0 0.0
          %427 = vmatprep.subr.mxu0 0.0
          %428 = vmatpush2.msra.mxu0 0.0
          %429 = vmatprep.subr.mxu0 0.0
          %430 = vmatpush2.msra.mxu0 0.0
          %431 = vmatprep.subr.mxu0 0.0
          %432 = vmatpush2.msra.mxu0 0.0
          %433 = vmatprep.subr.mxu0 0.0
          %434 = vmatpush2.msra.mxu0 0.0
          %435 = vmatprep.subr.mxu0 0.0
          %436 = vmatpush2.msra.mxu0 0.0
          %437 = vmatprep.subr.mxu0 0.0
          %438 = vmatpush2.msra.mxu0 0.0
          %439 = vmatprep.subr.mxu0 0.0
          %440 = vmatpush2.msra.mxu0 0.0
          %441 = vmatprep.subr.mxu0 0.0
          %442 = vmatpush2.msra.mxu0 0.0
          %443 = vmatprep.subr.mxu0 0.0
          %444 = vmatpush2.msra.mxu0 0.0
          %445 = vmatprep.subr.mxu0 0.0
          %446 = vmatpush2.msra.mxu0 0.0
          %447 = vmatprep.subr.mxu0 0.0
          %448 = vmatpush2.msra.mxu0 0.0
          %449 = vmatprep.subr.mxu0 0.0
          %450 = vmatpush2.msra.mxu0 0.0
          %451 = vmatprep.subr.mxu0 0.0
          %452 = vmatpush2.msra.mxu0 0.0
          %453 = vmatprep.subr.mxu0 0.0
          %454 = vmatpush2.msra.mxu0 0.0
          %455 = vmatprep.mubr.f32.mxu0 0.0
          %456 = vmatmul.mubr.f32.gmra.mxu0 %v313
          %v457 = vpop.f32.mrf.mxu0
          %v458 = vadd.f32 0.0, %v457
          %v459 = vpop.f32.mrf.mxu0
          %460 = vdwg.mxu0
          %461 = vst.msk [vmem:[#allocation4] sm:$0xff] %vm385, %v458
          %s462 = scalar_lea.vmem %s3, 32
          %v463 = vld [vmem:[%s462] sm:$0xff]
          %v464 = vld [vmem:[%s462 + $0x8] sm:$0xff]
          %v465 = vld [vmem:[%s462 + $0x10] sm:$0xff]
          %v466 = vld [vmem:[%s462 + $0x18] sm:$0xff]
          %467 = vmatprep.subr.mxu0 0.0
          %468 = vmatpush1.msra.mxu0 0.0
          %469 = vmatprep.subr.mxu0 0.0
          %470 = vmatpush1.msra.mxu0 0.0
          %471 = vmatprep.subr.mxu0 0.0
          %472 = vmatpush1.msra.mxu0 0.0
          %473 = vmatprep.subr.mxu0 0.0
          %474 = vmatpush1.msra.mxu0 0.0
          %475 = vmatprep.subr.mxu0 0.0
          %476 = vmatpush1.msra.mxu0 0.0
          %477 = vmatprep.subr.mxu0 0.0
          %478 = vmatpush1.msra.mxu0 0.0
          %479 = vmatprep.subr.mxu0 0.0
          %480 = vmatpush1.msra.mxu0 0.0
          %481 = vmatprep.subr.mxu0 0.0
          %482 = vmatpush1.msra.mxu0 0.0
          %483 = vmatprep.subr.mxu0 0.0
          %484 = vmatpush1.msra.mxu0 0.0
          %485 = vmatprep.subr.mxu0 0.0
          %486 = vmatpush1.msra.mxu0 0.0
          %487 = vmatprep.subr.mxu0 0.0
          %488 = vmatpush1.msra.mxu0 0.0
          %489 = vmatprep.subr.mxu0 0.0
          %490 = vmatpush1.msra.mxu0 0.0
          %491 = vmatprep.subr.mxu0 0.0
          %492 = vmatpush1.msra.mxu0 %v466
          %493 = vmatprep.subr.mxu0 0.0
          %494 = vmatpush1.msra.mxu0 %v465
          %495 = vmatprep.subr.mxu0 0.0
          %496 = vmatpush1.msra.mxu0 %v464
          %497 = vmatprep.subr.mxu0 0.0
          %498 = vmatpush1.msra.mxu0 %v463
          %499 = vmatprep.subr.mxu0 0.0
          %500 = vmatpush2.msra.mxu0 0.0
          %501 = vmatprep.subr.mxu0 0.0
          %502 = vmatpush2.msra.mxu0 0.0
          %503 = vmatprep.subr.mxu0 0.0
          %504 = vmatpush2.msra.mxu0 0.0
          %505 = vmatprep.subr.mxu0 0.0
          %506 = vmatpush2.msra.mxu0 0.0
          %507 = vmatprep.subr.mxu0 0.0
          %508 = vmatpush2.msra.mxu0 0.0
          %509 = vmatprep.subr.mxu0 0.0
          %510 = vmatpush2.msra.mxu0 0.0
          %511 = vmatprep.subr.mxu0 0.0
          %512 = vmatpush2.msra.mxu0 0.0
          %513 = vmatprep.subr.mxu0 0.0
          %514 = vmatpush2.msra.mxu0 0.0
          %515 = vmatprep.subr.mxu0 0.0
          %516 = vmatpush2.msra.mxu0 0.0
          %517 = vmatprep.subr.mxu0 0.0
          %518 = vmatpush2.msra.mxu0 0.0
          %519 = vmatprep.subr.mxu0 0.0
          %520 = vmatpush2.msra.mxu0 0.0
          %521 = vmatprep.subr.mxu0 0.0
          %522 = vmatpush2.msra.mxu0 0.0
          %523 = vmatprep.subr.mxu0 0.0
          %524 = vmatpush2.msra.mxu0 0.0
          %525 = vmatprep.subr.mxu0 0.0
          %526 = vmatpush2.msra.mxu0 0.0
          %527 = vmatprep.subr.mxu0 0.0
          %528 = vmatpush2.msra.mxu0 0.0
          %529 = vmatprep.subr.mxu0 0.0
          %530 = vmatpush2.msra.mxu0 0.0
          %531 = vmatprep.mubr.f32.mxu0 0.0
          %532 = vmatmul.mubr.f32.gmra.mxu0 %v313
          %v533 = vpop.f32.mrf.mxu0
          %v534 = vadd.f32 0.0, %v533
          %v535 = vpop.f32.mrf.mxu0
          %536 = vdwg.mxu0
          %s537 = scalar_lea.vmem [#allocation3], 8
          %538 = vst.msk [vmem:[%s537] sm:$0xff] %vm385, %v534
          %s539 = scalar_lea.vmem %s4, 32
          %v540 = vld [vmem:[%s539] sm:$0xff]
          %v541 = vld [vmem:[%s539 + $0x8] sm:$0xff]
          %v542 = vld [vmem:[%s539 + $0x10] sm:$0xff]
          %v543 = vld [vmem:[%s539 + $0x18] sm:$0xff]
          %544 = vmatprep.subr.mxu0 0.0
          %545 = vmatpush1.msra.mxu0 0.0
          %546 = vmatprep.subr.mxu0 0.0
          %547 = vmatpush1.msra.mxu0 0.0
          %548 = vmatprep.subr.mxu0 0.0
          %549 = vmatpush1.msra.mxu0 0.0
          %550 = vmatprep.subr.mxu0 0.0
          %551 = vmatpush1.msra.mxu0 0.0
          %552 = vmatprep.subr.mxu0 0.0
          %553 = vmatpush1.msra.mxu0 0.0
          %554 = vmatprep.subr.mxu0 0.0
          %555 = vmatpush1.msra.mxu0 0.0
          %556 = vmatprep.subr.mxu0 0.0
          %557 = vmatpush1.msra.mxu0 0.0
          %558 = vmatprep.subr.mxu0 0.0
          %559 = vmatpush1.msra.mxu0 0.0
          %560 = vmatprep.subr.mxu0 0.0
          %561 = vmatpush1.msra.mxu0 0.0
          %562 = vmatprep.subr.mxu0 0.0
          %563 = vmatpush1.msra.mxu0 0.0
          %564 = vmatprep.subr.mxu0 0.0
          %565 = vmatpush1.msra.mxu0 0.0
          %566 = vmatprep.subr.mxu0 0.0
          %567 = vmatpush1.msra.mxu0 0.0
          %568 = vmatprep.subr.mxu0 0.0
          %569 = vmatpush1.msra.mxu0 %v543
          %570 = vmatprep.subr.mxu0 0.0
          %571 = vmatpush1.msra.mxu0 %v542
          %572 = vmatprep.subr.mxu0 0.0
          %573 = vmatpush1.msra.mxu0 %v541
          %574 = vmatprep.subr.mxu0 0.0
          %575 = vmatpush1.msra.mxu0 %v540
          %576 = vmatprep.subr.mxu0 0.0
          %577 = vmatpush2.msra.mxu0 0.0
          %578 = vmatprep.subr.mxu0 0.0
          %579 = vmatpush2.msra.mxu0 0.0
          %580 = vmatprep.subr.mxu0 0.0
          %581 = vmatpush2.msra.mxu0 0.0
          %582 = vmatprep.subr.mxu0 0.0
          %583 = vmatpush2.msra.mxu0 0.0
          %584 = vmatprep.subr.mxu0 0.0
          %585 = vmatpush2.msra.mxu0 0.0
          %586 = vmatprep.subr.mxu0 0.0
          %587 = vmatpush2.msra.mxu0 0.0
          %588 = vmatprep.subr.mxu0 0.0
          %589 = vmatpush2.msra.mxu0 0.0
          %590 = vmatprep.subr.mxu0 0.0
          %591 = vmatpush2.msra.mxu0 0.0
          %592 = vmatprep.subr.mxu0 0.0
          %593 = vmatpush2.msra.mxu0 0.0
          %594 = vmatprep.subr.mxu0 0.0
          %595 = vmatpush2.msra.mxu0 0.0
          %596 = vmatprep.subr.mxu0 0.0
          %597 = vmatpush2.msra.mxu0 0.0
          %598 = vmatprep.subr.mxu0 0.0
          %599 = vmatpush2.msra.mxu0 0.0
          %600 = vmatprep.subr.mxu0 0.0
          %601 = vmatpush2.msra.mxu0 0.0
          %602 = vmatprep.subr.mxu0 0.0
          %603 = vmatpush2.msra.mxu0 0.0
          %604 = vmatprep.subr.mxu0 0.0
          %605 = vmatpush2.msra.mxu0 0.0
          %606 = vmatprep.subr.mxu0 0.0
          %607 = vmatpush2.msra.mxu0 0.0
          %608 = vmatprep.mubr.f32.mxu0 0.0
          %609 = vmatmul.mubr.f32.gmra.mxu0 %v313
          %v610 = vpop.f32.mrf.mxu0
          %v611 = vadd.f32 0.0, %v610
          %v612 = vpop.f32.mrf.mxu0
          %613 = vdwg.mxu0
          %s614 = scalar_lea.vmem [#allocation4], 8
          %615 = vst.msk [vmem:[%s614] sm:$0xff] %vm385, %v611
          %s616 = scalar_lea.vmem %s3, 64
          %v617 = vld [vmem:[%s616] sm:$0xff]
          %v618 = vld [vmem:[%s616 + $0x8] sm:$0xff]
          %v619 = vld [vmem:[%s616 + $0x10] sm:$0xff]
          %v620 = vld [vmem:[%s616 + $0x18] sm:$0xff]
          %621 = vmatprep.subr.mxu0 0.0
          %622 = vmatpush1.msra.mxu0 0.0
          %623 = vmatprep.subr.mxu0 0.0
          %624 = vmatpush1.msra.mxu0 0.0
          %625 = vmatprep.subr.mxu0 0.0
          %626 = vmatpush1.msra.mxu0 0.0
          %627 = vmatprep.subr.mxu0 0.0
          %628 = vmatpush1.msra.mxu0 0.0
          %629 = vmatprep.subr.mxu0 0.0
          %630 = vmatpush1.msra.mxu0 0.0
          %631 = vmatprep.subr.mxu0 0.0
          %632 = vmatpush1.msra.mxu0 0.0
          %633 = vmatprep.subr.mxu0 0.0
          %634 = vmatpush1.msra.mxu0 0.0
          %635 = vmatprep.subr.mxu0 0.0
          %636 = vmatpush1.msra.mxu0 0.0
          %637 = vmatprep.subr.mxu0 0.0
          %638 = vmatpush1.msra.mxu0 0.0
          %639 = vmatprep.subr.mxu0 0.0
          %640 = vmatpush1.msra.mxu0 0.0
          %641 = vmatprep.subr.mxu0 0.0
          %642 = vmatpush1.msra.mxu0 0.0
          %643 = vmatprep.subr.mxu0 0.0
          %644 = vmatpush1.msra.mxu0 0.0
          %645 = vmatprep.subr.mxu0 0.0
          %646 = vmatpush1.msra.mxu0 %v620
          %647 = vmatprep.subr.mxu0 0.0
          %648 = vmatpush1.msra.mxu0 %v619
          %649 = vmatprep.subr.mxu0 0.0
          %650 = vmatpush1.msra.mxu0 %v618
          %651 = vmatprep.subr.mxu0 0.0
          %652 = vmatpush1.msra.mxu0 %v617
          %653 = vmatprep.subr.mxu0 0.0
          %654 = vmatpush2.msra.mxu0 0.0
          %655 = vmatprep.subr.mxu0 0.0
          %656 = vmatpush2.msra.mxu0 0.0
          %657 = vmatprep.subr.mxu0 0.0
          %658 = vmatpush2.msra.mxu0 0.0
          %659 = vmatprep.subr.mxu0 0.0
          %660 = vmatpush2.msra.mxu0 0.0
          %661 = vmatprep.subr.mxu0 0.0
          %662 = vmatpush2.msra.mxu0 0.0
          %663 = vmatprep.subr.mxu0 0.0
          %664 = vmatpush2.msra.mxu0 0.0
          %665 = vmatprep.subr.mxu0 0.0
          %666 = vmatpush2.msra.mxu0 0.0
          %667 = vmatprep.subr.mxu0 0.0
          %668 = vmatpush2.msra.mxu0 0.0
          %669 = vmatprep.subr.mxu0 0.0
          %670 = vmatpush2.msra.mxu0 0.0
          %671 = vmatprep.subr.mxu0 0.0
          %672 = vmatpush2.msra.mxu0 0.0
          %673 = vmatprep.subr.mxu0 0.0
          %674 = vmatpush2.msra.mxu0 0.0
          %675 = vmatprep.subr.mxu0 0.0
          %676 = vmatpush2.msra.mxu0 0.0
          %677 = vmatprep.subr.mxu0 0.0
          %678 = vmatpush2.msra.mxu0 0.0
          %679 = vmatprep.subr.mxu0 0.0
          %680 = vmatpush2.msra.mxu0 0.0
          %681 = vmatprep.subr.mxu0 0.0
          %682 = vmatpush2.msra.mxu0 0.0
          %683 = vmatprep.subr.mxu0 0.0
          %684 = vmatpush2.msra.mxu0 0.0
          %685 = vmatprep.mubr.f32.mxu0 0.0
          %686 = vmatmul.mubr.f32.gmra.mxu0 %v313
          %v687 = vpop.f32.mrf.mxu0
          %v688 = vadd.f32 0.0, %v687
          %v689 = vpop.f32.mrf.mxu0
          %690 = vdwg.mxu0
          %s691 = scalar_lea.vmem [#allocation3], 16
          %692 = vst.msk [vmem:[%s691] sm:$0xff] %vm385, %v688
          %s693 = scalar_lea.vmem %s4, 64
          %v694 = vld [vmem:[%s693] sm:$0xff]
          %v695 = vld [vmem:[%s693 + $0x8] sm:$0xff]
          %v696 = vld [vmem:[%s693 + $0x10] sm:$0xff]
          %v697 = vld [vmem:[%s693 + $0x18] sm:$0xff]
          %698 = vmatprep.subr.mxu0 0.0
          %699 = vmatpush1.msra.mxu0 0.0
          %700 = vmatprep.subr.mxu0 0.0
          %701 = vmatpush1.msra.mxu0 0.0
          %702 = vmatprep.subr.mxu0 0.0
          %703 = vmatpush1.msra.mxu0 0.0
          %704 = vmatprep.subr.mxu0 0.0
          %705 = vmatpush1.msra.mxu0 0.0
          %706 = vmatprep.subr.mxu0 0.0
          %707 = vmatpush1.msra.mxu0 0.0
          %708 = vmatprep.subr.mxu0 0.0
          %709 = vmatpush1.msra.mxu0 0.0
          %710 = vmatprep.subr.mxu0 0.0
          %711 = vmatpush1.msra.mxu0 0.0
          %712 = vmatprep.subr.mxu0 0.0
          %713 = vmatpush1.msra.mxu0 0.0
          %714 = vmatprep.subr.mxu0 0.0
          %715 = vmatpush1.msra.mxu0 0.0
          %716 = vmatprep.subr.mxu0 0.0
          %717 = vmatpush1.msra.mxu0 0.0
          %718 = vmatprep.subr.mxu0 0.0
          %719 = vmatpush1.msra.mxu0 0.0
          %720 = vmatprep.subr.mxu0 0.0
          %721 = vmatpush1.msra.mxu0 0.0
          %722 = vmatprep.subr.mxu0 0.0
          %723 = vmatpush1.msra.mxu0 %v697
          %724 = vmatprep.subr.mxu0 0.0
          %725 = vmatpush1.msra.mxu0 %v696
          %726 = vmatprep.subr.mxu0 0.0
          %727 = vmatpush1.msra.mxu0 %v695
          %728 = vmatprep.subr.mxu0 0.0
          %729 = vmatpush1.msra.mxu0 %v694
          %730 = vmatprep.subr.mxu0 0.0
          %731 = vmatpush2.msra.mxu0 0.0
          %732 = vmatprep.subr.mxu0 0.0
          %733 = vmatpush2.msra.mxu0 0.0
          %734 = vmatprep.subr.mxu0 0.0
          %735 = vmatpush2.msra.mxu0 0.0
          %736 = vmatprep.subr.mxu0 0.0
          %737 = vmatpush2.msra.mxu0 0.0
          %738 = vmatprep.subr.mxu0 0.0
          %739 = vmatpush2.msra.mxu0 0.0
          %740 = vmatprep.subr.mxu0 0.0
          %741 = vmatpush2.msra.mxu0 0.0
          %742 = vmatprep.subr.mxu0 0.0
          %743 = vmatpush2.msra.mxu0 0.0
          %744 = vmatprep.subr.mxu0 0.0
          %745 = vmatpush2.msra.mxu0 0.0
          %746 = vmatprep.subr.mxu0 0.0
          %747 = vmatpush2.msra.mxu0 0.0
          %748 = vmatprep.subr.mxu0 0.0
          %749 = vmatpush2.msra.mxu0 0.0
          %750 = vmatprep.subr.mxu0 0.0
          %751 = vmatpush2.msra.mxu0 0.0
          %752 = vmatprep.subr.mxu0 0.0
          %753 = vmatpush2.msra.mxu0 0.0
          %754 = vmatprep.subr.mxu0 0.0
          %755 = vmatpush2.msra.mxu0 0.0
          %756 = vmatprep.subr.mxu0 0.0
          %757 = vmatpush2.msra.mxu0 0.0
          %758 = vmatprep.subr.mxu0 0.0
          %759 = vmatpush2.msra.mxu0 0.0
          %760 = vmatprep.subr.mxu0 0.0
          %761 = vmatpush2.msra.mxu0 0.0
          %762 = vmatprep.mubr.f32.mxu0 0.0
          %763 = vmatmul.mubr.f32.gmra.mxu0 %v313
          %v764 = vpop.f32.mrf.mxu0
          %v765 = vadd.f32 0.0, %v764
          %v766 = vpop.f32.mrf.mxu0
          %767 = vdwg.mxu0
          %s768 = scalar_lea.vmem [#allocation4], 16
          %769 = vst.msk [vmem:[%s768] sm:$0xff] %vm385, %v765
          %s770 = scalar_lea.vmem %s3, 96
          %v771 = vld [vmem:[%s770] sm:$0xff]
          %v772 = vld [vmem:[%s770 + $0x8] sm:$0xff]
          %v773 = vld [vmem:[%s770 + $0x10] sm:$0xff]
          %v774 = vld [vmem:[%s770 + $0x18] sm:$0xff]
          %775 = vmatprep.subr.mxu0 0.0
          %776 = vmatpush1.msra.mxu0 0.0
          %777 = vmatprep.subr.mxu0 0.0
          %778 = vmatpush1.msra.mxu0 0.0
          %779 = vmatprep.subr.mxu0 0.0
          %780 = vmatpush1.msra.mxu0 0.0
          %781 = vmatprep.subr.mxu0 0.0
          %782 = vmatpush1.msra.mxu0 0.0
          %783 = vmatprep.subr.mxu0 0.0
          %784 = vmatpush1.msra.mxu0 0.0
          %785 = vmatprep.subr.mxu0 0.0
          %786 = vmatpush1.msra.mxu0 0.0
          %787 = vmatprep.subr.mxu0 0.0
          %788 = vmatpush1.msra.mxu0 0.0
          %789 = vmatprep.subr.mxu0 0.0
          %790 = vmatpush1.msra.mxu0 0.0
          %791 = vmatprep.subr.mxu0 0.0
          %792 = vmatpush1.msra.mxu0 0.0
          %793 = vmatprep.subr.mxu0 0.0
          %794 = vmatpush1.msra.mxu0 0.0
          %795 = vmatprep.subr.mxu0 0.0
          %796 = vmatpush1.msra.mxu0 0.0
          %797 = vmatprep.subr.mxu0 0.0
          %798 = vmatpush1.msra.mxu0 0.0
          %799 = vmatprep.subr.mxu0 0.0
          %800 = vmatpush1.msra.mxu0 %v774
          %801 = vmatprep.subr.mxu0 0.0
          %802 = vmatpush1.msra.mxu0 %v773
          %803 = vmatprep.subr.mxu0 0.0
          %804 = vmatpush1.msra.mxu0 %v772
          %805 = vmatprep.subr.mxu0 0.0
          %806 = vmatpush1.msra.mxu0 %v771
          %807 = vmatprep.subr.mxu0 0.0
          %808 = vmatpush2.msra.mxu0 0.0
          %809 = vmatprep.subr.mxu0 0.0
          %810 = vmatpush2.msra.mxu0 0.0
          %811 = vmatprep.subr.mxu0 0.0
          %812 = vmatpush2.msra.mxu0 0.0
          %813 = vmatprep.subr.mxu0 0.0
          %814 = vmatpush2.msra.mxu0 0.0
          %815 = vmatprep.subr.mxu0 0.0
          %816 = vmatpush2.msra.mxu0 0.0
          %817 = vmatprep.subr.mxu0 0.0
          %818 = vmatpush2.msra.mxu0 0.0
          %819 = vmatprep.subr.mxu0 0.0
          %820 = vmatpush2.msra.mxu0 0.0
          %821 = vmatprep.subr.mxu0 0.0
          %822 = vmatpush2.msra.mxu0 0.0
          %823 = vmatprep.subr.mxu0 0.0
          %824 = vmatpush2.msra.mxu0 0.0
          %825 = vmatprep.subr.mxu0 0.0
          %826 = vmatpush2.msra.mxu0 0.0
          %827 = vmatprep.subr.mxu0 0.0
          %828 = vmatpush2.msra.mxu0 0.0
          %829 = vmatprep.subr.mxu0 0.0
          %830 = vmatpush2.msra.mxu0 0.0
          %831 = vmatprep.subr.mxu0 0.0
          %832 = vmatpush2.msra.mxu0 0.0
          %833 = vmatprep.subr.mxu0 0.0
          %834 = vmatpush2.msra.mxu0 0.0
          %835 = vmatprep.subr.mxu0 0.0
          %836 = vmatpush2.msra.mxu0 0.0
          %837 = vmatprep.subr.mxu0 0.0
          %838 = vmatpush2.msra.mxu0 0.0
          %839 = vmatprep.mubr.f32.mxu0 0.0
          %840 = vmatmul.mubr.f32.gmra.mxu0 %v313
          %v841 = vpop.f32.mrf.mxu0
          %v842 = vadd.f32 0.0, %v841
          %v843 = vpop.f32.mrf.mxu0
          %844 = vdwg.mxu0
          %s845 = scalar_lea.vmem [#allocation3], 24
          %846 = vst.msk [vmem:[%s845] sm:$0xff] %vm385, %v842
          %s847 = scalar_lea.vmem %s4, 96
          %v848 = vld [vmem:[%s847] sm:$0xff]
          %v849 = vld [vmem:[%s847 + $0x8] sm:$0xff]
          %v850 = vld [vmem:[%s847 + $0x10] sm:$0xff]
          %v851 = vld [vmem:[%s847 + $0x18] sm:$0xff]
          %852 = vmatprep.subr.mxu0 0.0
          %853 = vmatpush1.msra.mxu0 0.0
          %854 = vmatprep.subr.mxu0 0.0
          %855 = vmatpush1.msra.mxu0 0.0
          %856 = vmatprep.subr.mxu0 0.0
          %857 = vmatpush1.msra.mxu0 0.0
          %858 = vmatprep.subr.mxu0 0.0
          %859 = vmatpush1.msra.mxu0 0.0
          %860 = vmatprep.subr.mxu0 0.0
          %861 = vmatpush1.msra.mxu0 0.0
          %862 = vmatprep.subr.mxu0 0.0
          %863 = vmatpush1.msra.mxu0 0.0
          %864 = vmatprep.subr.mxu0 0.0
          %865 = vmatpush1.msra.mxu0 0.0
          %866 = vmatprep.subr.mxu0 0.0
          %867 = vmatpush1.msra.mxu0 0.0
          %868 = vmatprep.subr.mxu0 0.0
          %869 = vmatpush1.msra.mxu0 0.0
          %870 = vmatprep.subr.mxu0 0.0
          %871 = vmatpush1.msra.mxu0 0.0
          %872 = vmatprep.subr.mxu0 0.0
          %873 = vmatpush1.msra.mxu0 0.0
          %874 = vmatprep.subr.mxu0 0.0
          %875 = vmatpush1.msra.mxu0 0.0
          %876 = vmatprep.subr.mxu0 0.0
          %877 = vmatpush1.msra.mxu0 %v851
          %878 = vmatprep.subr.mxu0 0.0
          %879 = vmatpush1.msra.mxu0 %v850
          %880 = vmatprep.subr.mxu0 0.0
          %881 = vmatpush1.msra.mxu0 %v849
          %882 = vmatprep.subr.mxu0 0.0
          %883 = vmatpush1.msra.mxu0 %v848
          %884 = vmatprep.subr.mxu0 0.0
          %885 = vmatpush2.msra.mxu0 0.0
          %886 = vmatprep.subr.mxu0 0.0
          %887 = vmatpush2.msra.mxu0 0.0
          %888 = vmatprep.subr.mxu0 0.0
          %889 = vmatpush2.msra.mxu0 0.0
          %890 = vmatprep.subr.mxu0 0.0
          %891 = vmatpush2.msra.mxu0 0.0
          %892 = vmatprep.subr.mxu0 0.0
          %893 = vmatpush2.msra.mxu0 0.0
          %894 = vmatprep.subr.mxu0 0.0
          %895 = vmatpush2.msra.mxu0 0.0
          %896 = vmatprep.subr.mxu0 0.0
          %897 = vmatpush2.msra.mxu0 0.0
          %898 = vmatprep.subr.mxu0 0.0
          %899 = vmatpush2.msra.mxu0 0.0
          %900 = vmatprep.subr.mxu0 0.0
          %901 = vmatpush2.msra.mxu0 0.0
          %902 = vmatprep.subr.mxu0 0.0
          %903 = vmatpush2.msra.mxu0 0.0
          %904 = vmatprep.subr.mxu0 0.0
          %905 = vmatpush2.msra.mxu0 0.0
          %906 = vmatprep.subr.mxu0 0.0
          %907 = vmatpush2.msra.mxu0 0.0
          %908 = vmatprep.subr.mxu0 0.0
          %909 = vmatpush2.msra.mxu0 0.0
          %910 = vmatprep.subr.mxu0 0.0
          %911 = vmatpush2.msra.mxu0 0.0
          %912 = vmatprep.subr.mxu0 0.0
          %913 = vmatpush2.msra.mxu0 0.0
          %914 = vmatprep.subr.mxu0 0.0
          %915 = vmatpush2.msra.mxu0 0.0
          %916 = vmatprep.mubr.f32.mxu0 0.0
          %917 = vmatmul.mubr.f32.gmra.mxu0 %v313
          %v918 = vpop.f32.mrf.mxu0
          %v919 = vadd.f32 0.0, %v918
          %v920 = vpop.f32.mrf.mxu0
          %921 = vdwg.mxu0
          %s922 = scalar_lea.vmem [#allocation4], 24
          %923 = vst.msk [vmem:[%s922] sm:$0xff] %vm385, %v919
        $region52: #{tpu_custom_call.1} parent=47 // pred_fallthru
          _
        %v924 = vld [vmem:[%s298] sm:$0xff]
        %v925 = vld [vmem:[%s2] sm:$0xff]
        %v926 = vld [vmem:[%s2 + $0x8] sm:$0xff]
        %v927 = vld [vmem:[%s2 + $0x10] sm:$0xff]
        %v928 = vld [vmem:[%s2 + $0x18] sm:$0xff]
        %vm929 = vcmask 261120
        %v931 = vsel %vm929, %v924, 0
        %933 = vmatprep.subr.mxu0 0.0
        %934 = vmatpush1.msra.mxu0 0.0
        %935 = vmatprep.subr.mxu0 0.0
        %936 = vmatpush1.msra.mxu0 0.0
        %937 = vmatprep.subr.mxu0 0.0
        %938 = vmatpush1.msra.mxu0 0.0
        %939 = vmatprep.subr.mxu0 0.0
        %940 = vmatpush1.msra.mxu0 0.0
        %941 = vmatprep.subr.mxu0 0.0
        %942 = vmatpush1.msra.mxu0 0.0
        %943 = vmatprep.subr.mxu0 0.0
        %944 = vmatpush1.msra.mxu0 0.0
        %945 = vmatprep.subr.mxu0 0.0
        %946 = vmatpush1.msra.mxu0 0.0
        %947 = vmatprep.subr.mxu0 0.0
        %948 = vmatpush1.msra.mxu0 0.0
        %949 = vmatprep.subr.mxu0 0.0
        %950 = vmatpush1.msra.mxu0 0.0
        %951 = vmatprep.subr.mxu0 0.0
        %952 = vmatpush1.msra.mxu0 0.0
        %953 = vmatprep.subr.mxu0 0.0
        %954 = vmatpush1.msra.mxu0 0.0
        %955 = vmatprep.subr.mxu0 0.0
        %956 = vmatpush1.msra.mxu0 0.0
        %957 = vmatprep.subr.mxu0 0.0
        %958 = vmatpush1.msra.mxu0 %v928
        %959 = vmatprep.subr.mxu0 0.0
        %960 = vmatpush1.msra.mxu0 %v927
        %961 = vmatprep.subr.mxu0 0.0
        %962 = vmatpush1.msra.mxu0 %v926
        %963 = vmatprep.subr.mxu0 0.0
        %964 = vmatpush1.msra.mxu0 %v925
        %965 = vmatprep.subr.mxu0 0.0
        %966 = vmatpush2.msra.mxu0 0.0
        %967 = vmatprep.subr.mxu0 0.0
        %968 = vmatpush2.msra.mxu0 0.0
        %969 = vmatprep.subr.mxu0 0.0
        %970 = vmatpush2.msra.mxu0 0.0
        %971 = vmatprep.subr.mxu0 0.0
        %972 = vmatpush2.msra.mxu0 0.0
        %973 = vmatprep.subr.mxu0 0.0
        %974 = vmatpush2.msra.mxu0 0.0
        %975 = vmatprep.subr.mxu0 0.0
        %976 = vmatpush2.msra.mxu0 0.0
        %977 = vmatprep.subr.mxu0 0.0
        %978 = vmatpush2.msra.mxu0 0.0
        %979 = vmatprep.subr.mxu0 0.0
        %980 = vmatpush2.msra.mxu0 0.0
        %981 = vmatprep.subr.mxu0 0.0
        %982 = vmatpush2.msra.mxu0 0.0
        %983 = vmatprep.subr.mxu0 0.0
        %984 = vmatpush2.msra.mxu0 0.0
        %985 = vmatprep.subr.mxu0 0.0
        %986 = vmatpush2.msra.mxu0 0.0
        %987 = vmatprep.subr.mxu0 0.0
        %988 = vmatpush2.msra.mxu0 0.0
        %989 = vmatprep.subr.mxu0 0.0
        %990 = vmatpush2.msra.mxu0 0.0
        %991 = vmatprep.subr.mxu0 0.0
        %992 = vmatpush2.msra.mxu0 0.0
        %993 = vmatprep.subr.mxu0 0.0
        %994 = vmatpush2.msra.mxu0 0.0
        %995 = vmatprep.subr.mxu0 0.0
        %996 = vmatpush2.msra.mxu0 0.0
        %997 = vmatprep.mubr.f32.mxu0 0.0
        %998 = vmatmul.mubr.f32.gmra.mxu0 %v931
        %v999 = vpop.f32.mrf.mxu0
        %v1000 = vadd.f32 0.0, %v999
        %v1001 = vpop.f32.mrf.mxu0
        %1002 = vdwg.mxu0
        %vm1003 = vcmask 64512
        %1004 = vst.msk [vmem:[#allocation2] sm:$0xff] %vm1003, %v1000
        %s1005 = scalar_lea.vmem %s2, 32
        %v1006 = vld [vmem:[%s1005] sm:$0xff]
        %v1007 = vld [vmem:[%s1005 + $0x8] sm:$0xff]
        %v1008 = vld [vmem:[%s1005 + $0x10] sm:$0xff]
        %v1009 = vld [vmem:[%s1005 + $0x18] sm:$0xff]
        %1010 = vmatprep.subr.mxu0 0.0
        %1011 = vmatpush1.msra.mxu0 0.0
        %1012 = vmatprep.subr.mxu0 0.0
        %1013 = vmatpush1.msra.mxu0 0.0
        %1014 = vmatprep.subr.mxu0 0.0
        %1015 = vmatpush1.msra.mxu0 0.0
        %1016 = vmatprep.subr.mxu0 0.0
        %1017 = vmatpush1.msra.mxu0 0.0
        %1018 = vmatprep.subr.mxu0 0.0
        %1019 = vmatpush1.msra.mxu0 0.0
        %1020 = vmatprep.subr.mxu0 0.0
        %1021 = vmatpush1.msra.mxu0 0.0
        %1022 = vmatprep.subr.mxu0 0.0
        %1023 = vmatpush1.msra.mxu0 0.0
        %1024 = vmatprep.subr.mxu0 0.0
        %1025 = vmatpush1.msra.mxu0 0.0
        %1026 = vmatprep.subr.mxu0 0.0
        %1027 = vmatpush1.msra.mxu0 0.0
        %1028 = vmatprep.subr.mxu0 0.0
        %1029 = vmatpush1.msra.mxu0 0.0
        %1030 = vmatprep.subr.mxu0 0.0
        %1031 = vmatpush1.msra.mxu0 0.0
        %1032 = vmatprep.subr.mxu0 0.0
        %1033 = vmatpush1.msra.mxu0 0.0
        %1034 = vmatprep.subr.mxu0 0.0
        %1035 = vmatpush1.msra.mxu0 %v1009
        %1036 = vmatprep.subr.mxu0 0.0
        %1037 = vmatpush1.msra.mxu0 %v1008
        %1038 = vmatprep.subr.mxu0 0.0
        %1039 = vmatpush1.msra.mxu0 %v1007
        %1040 = vmatprep.subr.mxu0 0.0
        %1041 = vmatpush1.msra.mxu0 %v1006
        %1042 = vmatprep.subr.mxu0 0.0
        %1043 = vmatpush2.msra.mxu0 0.0
        %1044 = vmatprep.subr.mxu0 0.0
        %1045 = vmatpush2.msra.mxu0 0.0
        %1046 = vmatprep.subr.mxu0 0.0
        %1047 = vmatpush2.msra.mxu0 0.0
        %1048 = vmatprep.subr.mxu0 0.0
        %1049 = vmatpush2.msra.mxu0 0.0
        %1050 = vmatprep.subr.mxu0 0.0
        %1051 = vmatpush2.msra.mxu0 0.0
        %1052 = vmatprep.subr.mxu0 0.0
        %1053 = vmatpush2.msra.mxu0 0.0
        %1054 = vmatprep.subr.mxu0 0.0
        %1055 = vmatpush2.msra.mxu0 0.0
        %1056 = vmatprep.subr.mxu0 0.0
        %1057 = vmatpush2.msra.mxu0 0.0
        %1058 = vmatprep.subr.mxu0 0.0
        %1059 = vmatpush2.msra.mxu0 0.0
        %1060 = vmatprep.subr.mxu0 0.0
        %1061 = vmatpush2.msra.mxu0 0.0
        %1062 = vmatprep.subr.mxu0 0.0
        %1063 = vmatpush2.msra.mxu0 0.0
        %1064 = vmatprep.subr.mxu0 0.0
        %1065 = vmatpush2.msra.mxu0 0.0
        %1066 = vmatprep.subr.mxu0 0.0
        %1067 = vmatpush2.msra.mxu0 0.0
        %1068 = vmatprep.subr.mxu0 0.0
        %1069 = vmatpush2.msra.mxu0 0.0
        %1070 = vmatprep.subr.mxu0 0.0
        %1071 = vmatpush2.msra.mxu0 0.0
        %1072 = vmatprep.subr.mxu0 0.0
        %1073 = vmatpush2.msra.mxu0 0.0
        %1074 = vmatprep.mubr.f32.mxu0 0.0
        %1075 = vmatmul.mubr.f32.gmra.mxu0 %v931
        %v1076 = vpop.f32.mrf.mxu0
        %v1077 = vadd.f32 0.0, %v1076
        %v1078 = vpop.f32.mrf.mxu0
        %1079 = vdwg.mxu0
        %s1080 = scalar_lea.vmem [#allocation2], 8
        %1081 = vst.msk [vmem:[%s1080] sm:$0xff] %vm1003, %v1077
        %s1082 = scalar_lea.vmem %s2, 64
        %v1083 = vld [vmem:[%s1082] sm:$0xff]
        %v1084 = vld [vmem:[%s1082 + $0x8] sm:$0xff]
        %v1085 = vld [vmem:[%s1082 + $0x10] sm:$0xff]
        %v1086 = vld [vmem:[%s1082 + $0x18] sm:$0xff]
        %1087 = vmatprep.subr.mxu0 0.0
        %1088 = vmatpush1.msra.mxu0 0.0
        %1089 = vmatprep.subr.mxu0 0.0
        %1090 = vmatpush1.msra.mxu0 0.0
        %1091 = vmatprep.subr.mxu0 0.0
        %1092 = vmatpush1.msra.mxu0 0.0
        %1093 = vmatprep.subr.mxu0 0.0
        %1094 = vmatpush1.msra.mxu0 0.0
        %1095 = vmatprep.subr.mxu0 0.0
        %1096 = vmatpush1.msra.mxu0 0.0
        %1097 = vmatprep.subr.mxu0 0.0
        %1098 = vmatpush1.msra.mxu0 0.0
        %1099 = vmatprep.subr.mxu0 0.0
        %1100 = vmatpush1.msra.mxu0 0.0
        %1101 = vmatprep.subr.mxu0 0.0
        %1102 = vmatpush1.msra.mxu0 0.0
        %1103 = vmatprep.subr.mxu0 0.0
        %1104 = vmatpush1.msra.mxu0 0.0
        %1105 = vmatprep.subr.mxu0 0.0
        %1106 = vmatpush1.msra.mxu0 0.0
        %1107 = vmatprep.subr.mxu0 0.0
        %1108 = vmatpush1.msra.mxu0 0.0
        %1109 = vmatprep.subr.mxu0 0.0
        %1110 = vmatpush1.msra.mxu0 0.0
        %1111 = vmatprep.subr.mxu0 0.0
        %1112 = vmatpush1.msra.mxu0 %v1086
        %1113 = vmatprep.subr.mxu0 0.0
        %1114 = vmatpush1.msra.mxu0 %v1085
        %1115 = vmatprep.subr.mxu0 0.0
        %1116 = vmatpush1.msra.mxu0 %v1084
        %1117 = vmatprep.subr.mxu0 0.0
        %1118 = vmatpush1.msra.mxu0 %v1083
        %1119 = vmatprep.subr.mxu0 0.0
        %1120 = vmatpush2.msra.mxu0 0.0
        %1121 = vmatprep.subr.mxu0 0.0
        %1122 = vmatpush2.msra.mxu0 0.0
        %1123 = vmatprep.subr.mxu0 0.0
        %1124 = vmatpush2.msra.mxu0 0.0
        %1125 = vmatprep.subr.mxu0 0.0
        %1126 = vmatpush2.msra.mxu0 0.0
        %1127 = vmatprep.subr.mxu0 0.0
        %1128 = vmatpush2.msra.mxu0 0.0
        %1129 = vmatprep.subr.mxu0 0.0
        %1130 = vmatpush2.msra.mxu0 0.0
        %1131 = vmatprep.subr.mxu0 0.0
        %1132 = vmatpush2.msra.mxu0 0.0
        %1133 = vmatprep.subr.mxu0 0.0
        %1134 = vmatpush2.msra.mxu0 0.0
        %1135 = vmatprep.subr.mxu0 0.0
        %1136 = vmatpush2.msra.mxu0 0.0
        %1137 = vmatprep.subr.mxu0 0.0
        %1138 = vmatpush2.msra.mxu0 0.0
        %1139 = vmatprep.subr.mxu0 0.0
        %1140 = vmatpush2.msra.mxu0 0.0
        %1141 = vmatprep.subr.mxu0 0.0
        %1142 = vmatpush2.msra.mxu0 0.0
        %1143 = vmatprep.subr.mxu0 0.0
        %1144 = vmatpush2.msra.mxu0 0.0
        %1145 = vmatprep.subr.mxu0 0.0
        %1146 = vmatpush2.msra.mxu0 0.0
        %1147 = vmatprep.subr.mxu0 0.0
        %1148 = vmatpush2.msra.mxu0 0.0
        %1149 = vmatprep.subr.mxu0 0.0
        %1150 = vmatpush2.msra.mxu0 0.0
        %1151 = vmatprep.mubr.f32.mxu0 0.0
        %1152 = vmatmul.mubr.f32.gmra.mxu0 %v931
        %v1153 = vpop.f32.mrf.mxu0
        %v1154 = vadd.f32 0.0, %v1153
        %v1155 = vpop.f32.mrf.mxu0
        %1156 = vdwg.mxu0
        %s1157 = scalar_lea.vmem [#allocation2], 16
        %1158 = vst.msk [vmem:[%s1157] sm:$0xff] %vm1003, %v1154
        %s1159 = scalar_lea.vmem %s2, 96
        %v1160 = vld [vmem:[%s1159] sm:$0xff]
        %v1161 = vld [vmem:[%s1159 + $0x8] sm:$0xff]
        %v1162 = vld [vmem:[%s1159 + $0x10] sm:$0xff]
        %v1163 = vld [vmem:[%s1159 + $0x18] sm:$0xff]
        %1164 = vmatprep.subr.mxu0 0.0
        %1165 = vmatpush1.msra.mxu0 0.0
        %1166 = vmatprep.subr.mxu0 0.0
        %1167 = vmatpush1.msra.mxu0 0.0
        %1168 = vmatprep.subr.mxu0 0.0
        %1169 = vmatpush1.msra.mxu0 0.0
        %1170 = vmatprep.subr.mxu0 0.0
        %1171 = vmatpush1.msra.mxu0 0.0
        %1172 = vmatprep.subr.mxu0 0.0
        %1173 = vmatpush1.msra.mxu0 0.0
        %1174 = vmatprep.subr.mxu0 0.0
        %1175 = vmatpush1.msra.mxu0 0.0
        %1176 = vmatprep.subr.mxu0 0.0
        %1177 = vmatpush1.msra.mxu0 0.0
        %1178 = vmatprep.subr.mxu0 0.0
        %1179 = vmatpush1.msra.mxu0 0.0
        %1180 = vmatprep.subr.mxu0 0.0
        %1181 = vmatpush1.msra.mxu0 0.0
        %1182 = vmatprep.subr.mxu0 0.0
        %1183 = vmatpush1.msra.mxu0 0.0
        %1184 = vmatprep.subr.mxu0 0.0
        %1185 = vmatpush1.msra.mxu0 0.0
        %1186 = vmatprep.subr.mxu0 0.0
        %1187 = vmatpush1.msra.mxu0 0.0
        %1188 = vmatprep.subr.mxu0 0.0
        %1189 = vmatpush1.msra.mxu0 %v1163
        %1190 = vmatprep.subr.mxu0 0.0
        %1191 = vmatpush1.msra.mxu0 %v1162
        %1192 = vmatprep.subr.mxu0 0.0
        %1193 = vmatpush1.msra.mxu0 %v1161
        %1194 = vmatprep.subr.mxu0 0.0
        %1195 = vmatpush1.msra.mxu0 %v1160
        %1196 = vmatprep.subr.mxu0 0.0
        %1197 = vmatpush2.msra.mxu0 0.0
        %1198 = vmatprep.subr.mxu0 0.0
        %1199 = vmatpush2.msra.mxu0 0.0
        %1200 = vmatprep.subr.mxu0 0.0
        %1201 = vmatpush2.msra.mxu0 0.0
        %1202 = vmatprep.subr.mxu0 0.0
        %1203 = vmatpush2.msra.mxu0 0.0
        %1204 = vmatprep.subr.mxu0 0.0
        %1205 = vmatpush2.msra.mxu0 0.0
        %1206 = vmatprep.subr.mxu0 0.0
        %1207 = vmatpush2.msra.mxu0 0.0
        %1208 = vmatprep.subr.mxu0 0.0
        %1209 = vmatpush2.msra.mxu0 0.0
        %1210 = vmatprep.subr.mxu0 0.0
        %1211 = vmatpush2.msra.mxu0 0.0
        %1212 = vmatprep.subr.mxu0 0.0
        %1213 = vmatpush2.msra.mxu0 0.0
        %1214 = vmatprep.subr.mxu0 0.0
        %1215 = vmatpush2.msra.mxu0 0.0
        %1216 = vmatprep.subr.mxu0 0.0
        %1217 = vmatpush2.msra.mxu0 0.0
        %1218 = vmatprep.subr.mxu0 0.0
        %1219 = vmatpush2.msra.mxu0 0.0
        %1220 = vmatprep.subr.mxu0 0.0
        %1221 = vmatpush2.msra.mxu0 0.0
        %1222 = vmatprep.subr.mxu0 0.0
        %1223 = vmatpush2.msra.mxu0 0.0
        %1224 = vmatprep.subr.mxu0 0.0
        %1225 = vmatpush2.msra.mxu0 0.0
        %1226 = vmatprep.subr.mxu0 0.0
        %1227 = vmatpush2.msra.mxu0 0.0
        %1228 = vmatprep.mubr.f32.mxu0 0.0
        %1229 = vmatmul.mubr.f32.gmra.mxu0 %v931
        %v1230 = vpop.f32.mrf.mxu0
        %v1231 = vadd.f32 0.0, %v1230
        %v1232 = vpop.f32.mrf.mxu0
        %1233 = vdwg.mxu0
        %s1234 = scalar_lea.vmem [#allocation2], 24
        %1235 = vst.msk [vmem:[%s1234] sm:$0xff] %vm1003, %v1231
        %v1236 = vld [vmem:[#allocation2] sm:$0xff]
        %v1237 = vld [vmem:[#allocation2 + $0x8] sm:$0xff]
        %v1238 = vld [vmem:[#allocation2 + $0x10] sm:$0xff]
        %v1239 = vld [vmem:[#allocation2 + $0x18] sm:$0xff]
        %v1240 = vld [vmem:[%s301] sm:$0x1]
        %vm1241 = vcmp.gt.f32.partialorder %v1240, 0.0
        %v1242 = vsel %vm1241, -10000000.0, 0.0
        %v1243 = vld [vmem:[#allocation3] sm:$0xff]
        %v1244 = vld [vmem:[#allocation3 + $0x8] sm:$0xff]
        %v1245 = vld [vmem:[#allocation3 + $0x10] sm:$0xff]
        %v1246 = vld [vmem:[#allocation3 + $0x18] sm:$0xff]
        %v1247 = vld [vmem:[#allocation4] sm:$0xff]
        %v1248 = vld [vmem:[#allocation4 + $0x8] sm:$0xff]
        %v1249 = vld [vmem:[#allocation4 + $0x10] sm:$0xff]
        %v1250 = vld [vmem:[#allocation4 + $0x18] sm:$0xff]
        %v1252 = vlaneseq
        %v1253 = vshrl.u32 %v1252, 7
        %v1254 = vsub.s32 0, %v1253
        %v1255 = vrot.slane %v1242, %v1254
        %v1258 = vsel %vm1003, %v1236, 0
        %v1261 = vsel %vm1003, %v1243, 0
        %1263 = vmatprep.subr.mxu0 0.0
        %1264 = vmatpush1.xpose.msra.mxu0 0.0
        %1265 = vmatprep.subr.mxu0 0.0
        %1266 = vmatpush1.xpose.msra.mxu0 0.0
        %1267 = vmatprep.subr.mxu0 0.0
        %1268 = vmatpush1.xpose.msra.mxu0 0.0
        %1269 = vmatprep.subr.mxu0 0.0
        %1270 = vmatpush1.xpose.msra.mxu0 0.0
        %1271 = vmatprep.subr.mxu0 0.0
        %1272 = vmatpush1.xpose.msra.mxu0 0.0
        %1273 = vmatprep.subr.mxu0 0.0
        %1274 = vmatpush1.xpose.msra.mxu0 0.0
        %1275 = vmatprep.subr.mxu0 0.0
        %1276 = vmatpush1.xpose.msra.mxu0 0.0
        %1277 = vmatprep.subr.mxu0 0.0
        %1278 = vmatpush1.xpose.msra.mxu0 0.0
        %1279 = vmatprep.subr.mxu0 0.0
        %1280 = vmatpush1.xpose.msra.mxu0 0.0
        %1281 = vmatprep.subr.mxu0 0.0
        %1282 = vmatpush1.xpose.msra.mxu0 0.0
        %1283 = vmatprep.subr.mxu0 0.0
        %1284 = vmatpush1.xpose.msra.mxu0 0.0
        %1285 = vmatprep.subr.mxu0 0.0
        %1286 = vmatpush1.xpose.msra.mxu0 0.0
        %1287 = vmatprep.subr.mxu0 0.0
        %1288 = vmatpush1.xpose.msra.mxu0 0.0
        %1289 = vmatprep.subr.mxu0 0.0
        %1290 = vmatpush1.xpose.msra.mxu0 0.0
        %1291 = vmatprep.subr.mxu0 0.0
        %1292 = vmatpush1.xpose.msra.mxu0 0.0
        %1293 = vmatprep.subr.mxu0 0.0
        %1294 = vmatpush1.xpose.msra.mxu0 %v1261
        %1295 = vmatprep.subr.mxu0 0.0
        %1296 = vmatpush2.xpose.msra.mxu0 0.0
        %1297 = vmatprep.subr.mxu0 0.0
        %1298 = vmatpush2.xpose.msra.mxu0 0.0
        %1299 = vmatprep.subr.mxu0 0.0
        %1300 = vmatpush2.xpose.msra.mxu0 0.0
        %1301 = vmatprep.subr.mxu0 0.0
        %1302 = vmatpush2.xpose.msra.mxu0 0.0
        %1303 = vmatprep.subr.mxu0 0.0
        %1304 = vmatpush2.xpose.msra.mxu0 0.0
        %1305 = vmatprep.subr.mxu0 0.0
        %1306 = vmatpush2.xpose.msra.mxu0 0.0
        %1307 = vmatprep.subr.mxu0 0.0
        %1308 = vmatpush2.xpose.msra.mxu0 0.0
        %1309 = vmatprep.subr.mxu0 0.0
        %1310 = vmatpush2.xpose.msra.mxu0 0.0
        %1311 = vmatprep.subr.mxu0 0.0
        %1312 = vmatpush2.xpose.msra.mxu0 0.0
        %1313 = vmatprep.subr.mxu0 0.0
        %1314 = vmatpush2.xpose.msra.mxu0 0.0
        %1315 = vmatprep.subr.mxu0 0.0
        %1316 = vmatpush2.xpose.msra.mxu0 0.0
        %1317 = vmatprep.subr.mxu0 0.0
        %1318 = vmatpush2.xpose.msra.mxu0 0.0
        %1319 = vmatprep.subr.mxu0 0.0
        %1320 = vmatpush2.xpose.msra.mxu0 0.0
        %1321 = vmatprep.subr.mxu0 0.0
        %1322 = vmatpush2.xpose.msra.mxu0 0.0
        %1323 = vmatprep.subr.mxu0 0.0
        %1324 = vmatpush2.xpose.msra.mxu0 0.0
        %1325 = vmatprep.subr.mxu0 0.0
        %1326 = vmatpush2.xpose.msra.mxu0 0.0
        %1327 = vmatprep.mubr.f32.mxu0 0.0
        %1328 = vmatmul.mubr.f32.gmra.mxu0 %v1258
        %v1329 = vpop.f32.mrf.mxu0
        %v1330 = vadd.f32 %v1255, %v1329
        %v1331 = vpop.f32.mrf.mxu0
        %1332 = vdwg.mxu0
        %v1334 = vsel %vm1003, %v1237, 0
        %v1337 = vsel %vm1003, %v1244, 0
        %1339 = vmatprep.subr.mxu0 0.0
        %1340 = vmatpush1.xpose.msra.mxu0 0.0
        %1341 = vmatprep.subr.mxu0 0.0
        %1342 = vmatpush1.xpose.msra.mxu0 0.0
        %1343 = vmatprep.subr.mxu0 0.0
        %1344 = vmatpush1.xpose.msra.mxu0 0.0
        %1345 = vmatprep.subr.mxu0 0.0
        %1346 = vmatpush1.xpose.msra.mxu0 0.0
        %1347 = vmatprep.subr.mxu0 0.0
        %1348 = vmatpush1.xpose.msra.mxu0 0.0
        %1349 = vmatprep.subr.mxu0 0.0
        %1350 = vmatpush1.xpose.msra.mxu0 0.0
        %1351 = vmatprep.subr.mxu0 0.0
        %1352 = vmatpush1.xpose.msra.mxu0 0.0
        %1353 = vmatprep.subr.mxu0 0.0
        %1354 = vmatpush1.xpose.msra.mxu0 0.0
        %1355 = vmatprep.subr.mxu0 0.0
        %1356 = vmatpush1.xpose.msra.mxu0 0.0
        %1357 = vmatprep.subr.mxu0 0.0
        %1358 = vmatpush1.xpose.msra.mxu0 0.0
        %1359 = vmatprep.subr.mxu0 0.0
        %1360 = vmatpush1.xpose.msra.mxu0 0.0
        %1361 = vmatprep.subr.mxu0 0.0
        %1362 = vmatpush1.xpose.msra.mxu0 0.0
        %1363 = vmatprep.subr.mxu0 0.0
        %1364 = vmatpush1.xpose.msra.mxu0 0.0
        %1365 = vmatprep.subr.mxu0 0.0
        %1366 = vmatpush1.xpose.msra.mxu0 0.0
        %1367 = vmatprep.subr.mxu0 0.0
        %1368 = vmatpush1.xpose.msra.mxu0 0.0
        %1369 = vmatprep.subr.mxu0 0.0
        %1370 = vmatpush1.xpose.msra.mxu0 %v1337
        %1371 = vmatprep.subr.mxu0 0.0
        %1372 = vmatpush2.xpose.msra.mxu0 0.0
        %1373 = vmatprep.subr.mxu0 0.0
        %1374 = vmatpush2.xpose.msra.mxu0 0.0
        %1375 = vmatprep.subr.mxu0 0.0
        %1376 = vmatpush2.xpose.msra.mxu0 0.0
        %1377 = vmatprep.subr.mxu0 0.0
        %1378 = vmatpush2.xpose.msra.mxu0 0.0
        %1379 = vmatprep.subr.mxu0 0.0
        %1380 = vmatpush2.xpose.msra.mxu0 0.0
        %1381 = vmatprep.subr.mxu0 0.0
        %1382 = vmatpush2.xpose.msra.mxu0 0.0
        %1383 = vmatprep.subr.mxu0 0.0
        %1384 = vmatpush2.xpose.msra.mxu0 0.0
        %1385 = vmatprep.subr.mxu0 0.0
        %1386 = vmatpush2.xpose.msra.mxu0 0.0
        %1387 = vmatprep.subr.mxu0 0.0
        %1388 = vmatpush2.xpose.msra.mxu0 0.0
        %1389 = vmatprep.subr.mxu0 0.0
        %1390 = vmatpush2.xpose.msra.mxu0 0.0
        %1391 = vmatprep.subr.mxu0 0.0
        %1392 = vmatpush2.xpose.msra.mxu0 0.0
        %1393 = vmatprep.subr.mxu0 0.0
        %1394 = vmatpush2.xpose.msra.mxu0 0.0
        %1395 = vmatprep.subr.mxu0 0.0
        %1396 = vmatpush2.xpose.msra.mxu0 0.0
        %1397 = vmatprep.subr.mxu0 0.0
        %1398 = vmatpush2.xpose.msra.mxu0 0.0
        %1399 = vmatprep.subr.mxu0 0.0
        %1400 = vmatpush2.xpose.msra.mxu0 0.0
        %1401 = vmatprep.subr.mxu0 0.0
        %1402 = vmatpush2.xpose.msra.mxu0 0.0
        %1403 = vmatprep.mubr.f32.mxu0 0.0
        %1404 = vmatmul.mubr.f32.gmra.mxu0 %v1334
        %v1405 = vpop.f32.mrf.mxu0
        %v1406 = vadd.f32 %v1255, %v1405
        %v1407 = vpop.f32.mrf.mxu0
        %1408 = vdwg.mxu0
        %v1410 = vsel %vm1003, %v1238, 0
        %v1413 = vsel %vm1003, %v1245, 0
        %1415 = vmatprep.subr.mxu0 0.0
        %1416 = vmatpush1.xpose.msra.mxu0 0.0
        %1417 = vmatprep.subr.mxu0 0.0
        %1418 = vmatpush1.xpose.msra.mxu0 0.0
        %1419 = vmatprep.subr.mxu0 0.0
        %1420 = vmatpush1.xpose.msra.mxu0 0.0
        %1421 = vmatprep.subr.mxu0 0.0
        %1422 = vmatpush1.xpose.msra.mxu0 0.0
        %1423 = vmatprep.subr.mxu0 0.0
        %1424 = vmatpush1.xpose.msra.mxu0 0.0
        %1425 = vmatprep.subr.mxu0 0.0
        %1426 = vmatpush1.xpose.msra.mxu0 0.0
        %1427 = vmatprep.subr.mxu0 0.0
        %1428 = vmatpush1.xpose.msra.mxu0 0.0
        %1429 = vmatprep.subr.mxu0 0.0
        %1430 = vmatpush1.xpose.msra.mxu0 0.0
        %1431 = vmatprep.subr.mxu0 0.0
        %1432 = vmatpush1.xpose.msra.mxu0 0.0
        %1433 = vmatprep.subr.mxu0 0.0
        %1434 = vmatpush1.xpose.msra.mxu0 0.0
        %1435 = vmatprep.subr.mxu0 0.0
        %1436 = vmatpush1.xpose.msra.mxu0 0.0
        %1437 = vmatprep.subr.mxu0 0.0
        %1438 = vmatpush1.xpose.msra.mxu0 0.0
        %1439 = vmatprep.subr.mxu0 0.0
        %1440 = vmatpush1.xpose.msra.mxu0 0.0
        %1441 = vmatprep.subr.mxu0 0.0
        %1442 = vmatpush1.xpose.msra.mxu0 0.0
        %1443 = vmatprep.subr.mxu0 0.0
        %1444 = vmatpush1.xpose.msra.mxu0 0.0
        %1445 = vmatprep.subr.mxu0 0.0
        %1446 = vmatpush1.xpose.msra.mxu0 %v1413
        %1447 = vmatprep.subr.mxu0 0.0
        %1448 = vmatpush2.xpose.msra.mxu0 0.0
        %1449 = vmatprep.subr.mxu0 0.0
        %1450 = vmatpush2.xpose.msra.mxu0 0.0
        %1451 = vmatprep.subr.mxu0 0.0
        %1452 = vmatpush2.xpose.msra.mxu0 0.0
        %1453 = vmatprep.subr.mxu0 0.0
        %1454 = vmatpush2.xpose.msra.mxu0 0.0
        %1455 = vmatprep.subr.mxu0 0.0
        %1456 = vmatpush2.xpose.msra.mxu0 0.0
        %1457 = vmatprep.subr.mxu0 0.0
        %1458 = vmatpush2.xpose.msra.mxu0 0.0
        %1459 = vmatprep.subr.mxu0 0.0
        %1460 = vmatpush2.xpose.msra.mxu0 0.0
        %1461 = vmatprep.subr.mxu0 0.0
        %1462 = vmatpush2.xpose.msra.mxu0 0.0
        %1463 = vmatprep.subr.mxu0 0.0
        %1464 = vmatpush2.xpose.msra.mxu0 0.0
        %1465 = vmatprep.subr.mxu0 0.0
        %1466 = vmatpush2.xpose.msra.mxu0 0.0
        %1467 = vmatprep.subr.mxu0 0.0
        %1468 = vmatpush2.xpose.msra.mxu0 0.0
        %1469 = vmatprep.subr.mxu0 0.0
        %1470 = vmatpush2.xpose.msra.mxu0 0.0
        %1471 = vmatprep.subr.mxu0 0.0
        %1472 = vmatpush2.xpose.msra.mxu0 0.0
        %1473 = vmatprep.subr.mxu0 0.0
        %1474 = vmatpush2.xpose.msra.mxu0 0.0
        %1475 = vmatprep.subr.mxu0 0.0
        %1476 = vmatpush2.xpose.msra.mxu0 0.0
        %1477 = vmatprep.subr.mxu0 0.0
        %1478 = vmatpush2.xpose.msra.mxu0 0.0
        %1479 = vmatprep.mubr.f32.mxu0 0.0
        %1480 = vmatmul.mubr.f32.gmra.mxu0 %v1410
        %v1481 = vpop.f32.mrf.mxu0
        %v1482 = vadd.f32 %v1255, %v1481
        %v1483 = vpop.f32.mrf.mxu0
        %1484 = vdwg.mxu0
        %v1486 = vsel %vm1003, %v1239, 0
        %v1489 = vsel %vm1003, %v1246, 0
        %1491 = vmatprep.subr.mxu0 0.0
        %1492 = vmatpush1.xpose.msra.mxu0 0.0
        %1493 = vmatprep.subr.mxu0 0.0
        %1494 = vmatpush1.xpose.msra.mxu0 0.0
        %1495 = vmatprep.subr.mxu0 0.0
        %1496 = vmatpush1.xpose.msra.mxu0 0.0
        %1497 = vmatprep.subr.mxu0 0.0
        %1498 = vmatpush1.xpose.msra.mxu0 0.0
        %1499 = vmatprep.subr.mxu0 0.0
        %1500 = vmatpush1.xpose.msra.mxu0 0.0
        %1501 = vmatprep.subr.mxu0 0.0
        %1502 = vmatpush1.xpose.msra.mxu0 0.0
        %1503 = vmatprep.subr.mxu0 0.0
        %1504 = vmatpush1.xpose.msra.mxu0 0.0
        %1505 = vmatprep.subr.mxu0 0.0
        %1506 = vmatpush1.xpose.msra.mxu0 0.0
        %1507 = vmatprep.subr.mxu0 0.0
        %1508 = vmatpush1.xpose.msra.mxu0 0.0
        %1509 = vmatprep.subr.mxu0 0.0
        %1510 = vmatpush1.xpose.msra.mxu0 0.0
        %1511 = vmatprep.subr.mxu0 0.0
        %1512 = vmatpush1.xpose.msra.mxu0 0.0
        %1513 = vmatprep.subr.mxu0 0.0
        %1514 = vmatpush1.xpose.msra.mxu0 0.0
        %1515 = vmatprep.subr.mxu0 0.0
        %1516 = vmatpush1.xpose.msra.mxu0 0.0
        %1517 = vmatprep.subr.mxu0 0.0
        %1518 = vmatpush1.xpose.msra.mxu0 0.0
        %1519 = vmatprep.subr.mxu0 0.0
        %1520 = vmatpush1.xpose.msra.mxu0 0.0
        %1521 = vmatprep.subr.mxu0 0.0
        %1522 = vmatpush1.xpose.msra.mxu0 %v1489
        %1523 = vmatprep.subr.mxu0 0.0
        %1524 = vmatpush2.xpose.msra.mxu0 0.0
        %1525 = vmatprep.subr.mxu0 0.0
        %1526 = vmatpush2.xpose.msra.mxu0 0.0
        %1527 = vmatprep.subr.mxu0 0.0
        %1528 = vmatpush2.xpose.msra.mxu0 0.0
        %1529 = vmatprep.subr.mxu0 0.0
        %1530 = vmatpush2.xpose.msra.mxu0 0.0
        %1531 = vmatprep.subr.mxu0 0.0
        %1532 = vmatpush2.xpose.msra.mxu0 0.0
        %1533 = vmatprep.subr.mxu0 0.0
        %1534 = vmatpush2.xpose.msra.mxu0 0.0
        %1535 = vmatprep.subr.mxu0 0.0
        %1536 = vmatpush2.xpose.msra.mxu0 0.0
        %1537 = vmatprep.subr.mxu0 0.0
        %1538 = vmatpush2.xpose.msra.mxu0 0.0
        %1539 = vmatprep.subr.mxu0 0.0
        %1540 = vmatpush2.xpose.msra.mxu0 0.0
        %1541 = vmatprep.subr.mxu0 0.0
        %1542 = vmatpush2.xpose.msra.mxu0 0.0
        %1543 = vmatprep.subr.mxu0 0.0
        %1544 = vmatpush2.xpose.msra.mxu0 0.0
        %1545 = vmatprep.subr.mxu0 0.0
        %1546 = vmatpush2.xpose.msra.mxu0 0.0
        %1547 = vmatprep.subr.mxu0 0.0
        %1548 = vmatpush2.xpose.msra.mxu0 0.0
        %1549 = vmatprep.subr.mxu0 0.0
        %1550 = vmatpush2.xpose.msra.mxu0 0.0
        %1551 = vmatprep.subr.mxu0 0.0
        %1552 = vmatpush2.xpose.msra.mxu0 0.0
        %1553 = vmatprep.subr.mxu0 0.0
        %1554 = vmatpush2.xpose.msra.mxu0 0.0
        %1555 = vmatprep.mubr.f32.mxu0 0.0
        %1556 = vmatmul.mubr.f32.gmra.mxu0 %v1486
        %v1557 = vpop.f32.mrf.mxu0
        %v1558 = vadd.f32 %v1255, %v1557
        %v1559 = vpop.f32.mrf.mxu0
        %1560 = vdwg.mxu0
        %v1561 = vsel %vm1003, %v1330, -inf
        %1562 = vmax.xlane.f32.xlu0 %v1561
        %v1563 = vpop.xlane.xlu0 %1562
        %v1564 = vsel %vm1003, %v1406, -inf
        %1565 = vmax.xlane.f32.xlu0 %v1564
        %v1566 = vpop.xlane.xlu0 %1565
        %v1567 = vsel %vm1003, %v1482, -inf
        %1568 = vmax.xlane.f32.xlu0 %v1567
        %v1569 = vpop.xlane.xlu0 %1568
        %v1570 = vsel %vm1003, %v1558, -inf
        %1571 = vmax.xlane.f32.xlu0 %v1570
        %v1572 = vpop.xlane.xlu0 %1571
        %v1573 = vmax.f32 %v1563, -1e+30
        %v1574 = vmax.f32 %v1566, -1e+30
        %v1575 = vmax.f32 %v1569, -1e+30
        %v1576 = vmax.f32 %v1572, -1e+30
        %v1577 = vsub.f32 -1e+30, %v1573
        %v1578 = vsub.f32 -1e+30, %v1574
        %v1579 = vsub.f32 -1e+30, %v1575
        %v1580 = vsub.f32 -1e+30, %v1576
        %v1581 = vmul.f32 %v1577, 1.442695
        %v1582 = vpow.pop %v1581
        %v1583 = vmul.f32 %v1578, 1.442695
        %v1584 = vpow.pop %v1583
        %v1585 = vmul.f32 %v1579, 1.442695
        %v1586 = vpow.pop %v1585
        %v1587 = vmul.f32 %v1580, 1.442695
        %v1588 = vpow.pop %v1587
        %v1589 = vsub.f32 %v1330, %v1573
        %v1590 = vsub.f32 %v1406, %v1574
        %v1591 = vsub.f32 %v1482, %v1575
        %v1592 = vsub.f32 %v1558, %v1576
        %v1593 = vmul.f32 %v1589, 1.442695
        %v1594 = vpow.pop %v1593
        %v1595 = vmul.f32 %v1590, 1.442695
        %v1596 = vpow.pop %v1595
        %v1597 = vmul.f32 %v1591, 1.442695
        %v1598 = vpow.pop %v1597
        %v1599 = vmul.f32 %v1592, 1.442695
        %v1600 = vpow.pop %v1599
        %v1601 = vmul.f32 %v1582, 0.0
        %v1602 = vmul.f32 %v1584, 0.0
        %v1603 = vmul.f32 %v1586, 0.0
        %v1604 = vmul.f32 %v1588, 0.0
        %v1605 = vsel %vm1003, %v1594, 0.0
        %1606 = vadd.xlane.f32.xlu0 %v1605
        %v1607 = vpop.xlane.xlu0 %1606
        %v1608 = vsel %vm1003, %v1596, 0.0
        %1609 = vadd.xlane.f32.xlu0 %v1608
        %v1610 = vpop.xlane.xlu0 %1609
        %v1611 = vsel %vm1003, %v1598, 0.0
        %1612 = vadd.xlane.f32.xlu0 %v1611
        %v1613 = vpop.xlane.xlu0 %1612
        %v1614 = vsel %vm1003, %v1600, 0.0
        %1615 = vadd.xlane.f32.xlu0 %v1614
        %v1616 = vpop.xlane.xlu0 %1615
        %v1617 = vadd.f32 %v1601, %v1607
        %v1618 = vadd.f32 %v1602, %v1610
        %v1619 = vadd.f32 %v1603, %v1613
        %v1620 = vadd.f32 %v1604, %v1616
        %v1622 = vsel %vm1003, %v1594, 0
        %1624 = vmatprep.subr.mxu0 0.0
        %1625 = vmatpush1.msra.mxu0 0.0
        %1626 = vmatprep.subr.mxu0 0.0
        %1627 = vmatpush1.msra.mxu0 0.0
        %1628 = vmatprep.subr.mxu0 0.0
        %1629 = vmatpush1.msra.mxu0 0.0
        %1630 = vmatprep.subr.mxu0 0.0
        %1631 = vmatpush1.msra.mxu0 0.0
        %1632 = vmatprep.subr.mxu0 0.0
        %1633 = vmatpush1.msra.mxu0 0.0
        %1634 = vmatprep.subr.mxu0 0.0
        %1635 = vmatpush1.msra.mxu0 0.0
        %1636 = vmatprep.subr.mxu0 0.0
        %1637 = vmatpush1.msra.mxu0 0.0
        %1638 = vmatprep.subr.mxu0 0.0
        %1639 = vmatpush1.msra.mxu0 0.0
        %1640 = vmatprep.subr.mxu0 0.0
        %1641 = vmatpush1.msra.mxu0 0.0
        %1642 = vmatprep.subr.mxu0 0.0
        %1643 = vmatpush1.msra.mxu0 0.0
        %1644 = vmatprep.subr.mxu0 0.0
        %1645 = vmatpush1.msra.mxu0 0.0
        %1646 = vmatprep.subr.mxu0 0.0
        %1647 = vmatpush1.msra.mxu0 0.0
        %1648 = vmatprep.subr.mxu0 0.0
        %1649 = vmatpush1.msra.mxu0 0.0
        %1650 = vmatprep.subr.mxu0 0.0
        %1651 = vmatpush1.msra.mxu0 0.0
        %1652 = vmatprep.subr.mxu0 0.0
        %1653 = vmatpush1.msra.mxu0 0.0
        %1654 = vmatprep.subr.mxu0 0.0
        %1655 = vmatpush1.msra.mxu0 %v1247
        %1656 = vmatprep.subr.mxu0 0.0
        %1657 = vmatpush2.msra.mxu0 0.0
        %1658 = vmatprep.subr.mxu0 0.0
        %1659 = vmatpush2.msra.mxu0 0.0
        %1660 = vmatprep.subr.mxu0 0.0
        %1661 = vmatpush2.msra.mxu0 0.0
        %1662 = vmatprep.subr.mxu0 0.0
        %1663 = vmatpush2.msra.mxu0 0.0
        %1664 = vmatprep.subr.mxu0 0.0
        %1665 = vmatpush2.msra.mxu0 0.0
        %1666 = vmatprep.subr.mxu0 0.0
        %1667 = vmatpush2.msra.mxu0 0.0
        %1668 = vmatprep.subr.mxu0 0.0
        %1669 = vmatpush2.msra.mxu0 0.0
        %1670 = vmatprep.subr.mxu0 0.0
        %1671 = vmatpush2.msra.mxu0 0.0
        %1672 = vmatprep.subr.mxu0 0.0
        %1673 = vmatpush2.msra.mxu0 0.0
        %1674 = vmatprep.subr.mxu0 0.0
        %1675 = vmatpush2.msra.mxu0 0.0
        %1676 = vmatprep.subr.mxu0 0.0
        %1677 = vmatpush2.msra.mxu0 0.0
        %1678 = vmatprep.subr.mxu0 0.0
        %1679 = vmatpush2.msra.mxu0 0.0
        %1680 = vmatprep.subr.mxu0 0.0
        %1681 = vmatpush2.msra.mxu0 0.0
        %1682 = vmatprep.subr.mxu0 0.0
        %1683 = vmatpush2.msra.mxu0 0.0
        %1684 = vmatprep.subr.mxu0 0.0
        %1685 = vmatpush2.msra.mxu0 0.0
        %1686 = vmatprep.subr.mxu0 0.0
        %1687 = vmatpush2.msra.mxu0 0.0
        %1688 = vmatprep.mubr.f32.mxu0 0.0
        %1689 = vmatmul.mubr.f32.gmra.mxu0 %v1622
        %v1690 = vpop.f32.mrf.mxu0
        %v1691 = vadd.f32 0.0, %v1690
        %v1692 = vpop.f32.mrf.mxu0
        %1693 = vdwg.mxu0
        %v1695 = vsel %vm1003, %v1596, 0
        %1697 = vmatprep.subr.mxu0 0.0
        %1698 = vmatpush1.msra.mxu0 0.0
        %1699 = vmatprep.subr.mxu0 0.0
        %1700 = vmatpush1.msra.mxu0 0.0
        %1701 = vmatprep.subr.mxu0 0.0
        %1702 = vmatpush1.msra.mxu0 0.0
        %1703 = vmatprep.subr.mxu0 0.0
        %1704 = vmatpush1.msra.mxu0 0.0
        %1705 = vmatprep.subr.mxu0 0.0
        %1706 = vmatpush1.msra.mxu0 0.0
        %1707 = vmatprep.subr.mxu0 0.0
        %1708 = vmatpush1.msra.mxu0 0.0
        %1709 = vmatprep.subr.mxu0 0.0
        %1710 = vmatpush1.msra.mxu0 0.0
        %1711 = vmatprep.subr.mxu0 0.0
        %1712 = vmatpush1.msra.mxu0 0.0
        %1713 = vmatprep.subr.mxu0 0.0
        %1714 = vmatpush1.msra.mxu0 0.0
        %1715 = vmatprep.subr.mxu0 0.0
        %1716 = vmatpush1.msra.mxu0 0.0
        %1717 = vmatprep.subr.mxu0 0.0
        %1718 = vmatpush1.msra.mxu0 0.0
        %1719 = vmatprep.subr.mxu0 0.0
        %1720 = vmatpush1.msra.mxu0 0.0
        %1721 = vmatprep.subr.mxu0 0.0
        %1722 = vmatpush1.msra.mxu0 0.0
        %1723 = vmatprep.subr.mxu0 0.0
        %1724 = vmatpush1.msra.mxu0 0.0
        %1725 = vmatprep.subr.mxu0 0.0
        %1726 = vmatpush1.msra.mxu0 0.0
        %1727 = vmatprep.subr.mxu0 0.0
        %1728 = vmatpush1.msra.mxu0 %v1248
        %1729 = vmatprep.subr.mxu0 0.0
        %1730 = vmatpush2.msra.mxu0 0.0
        %1731 = vmatprep.subr.mxu0 0.0
        %1732 = vmatpush2.msra.mxu0 0.0
        %1733 = vmatprep.subr.mxu0 0.0
        %1734 = vmatpush2.msra.mxu0 0.0
        %1735 = vmatprep.subr.mxu0 0.0
        %1736 = vmatpush2.msra.mxu0 0.0
        %1737 = vmatprep.subr.mxu0 0.0
        %1738 = vmatpush2.msra.mxu0 0.0
        %1739 = vmatprep.subr.mxu0 0.0
        %1740 = vmatpush2.msra.mxu0 0.0
        %1741 = vmatprep.subr.mxu0 0.0
        %1742 = vmatpush2.msra.mxu0 0.0
        %1743 = vmatprep.subr.mxu0 0.0
        %1744 = vmatpush2.msra.mxu0 0.0
        %1745 = vmatprep.subr.mxu0 0.0
        %1746 = vmatpush2.msra.mxu0 0.0
        %1747 = vmatprep.subr.mxu0 0.0
        %1748 = vmatpush2.msra.mxu0 0.0
        %1749 = vmatprep.subr.mxu0 0.0
        %1750 = vmatpush2.msra.mxu0 0.0
        %1751 = vmatprep.subr.mxu0 0.0
        %1752 = vmatpush2.msra.mxu0 0.0
        %1753 = vmatprep.subr.mxu0 0.0
        %1754 = vmatpush2.msra.mxu0 0.0
        %1755 = vmatprep.subr.mxu0 0.0
        %1756 = vmatpush2.msra.mxu0 0.0
        %1757 = vmatprep.subr.mxu0 0.0
        %1758 = vmatpush2.msra.mxu0 0.0
        %1759 = vmatprep.subr.mxu0 0.0
        %1760 = vmatpush2.msra.mxu0 0.0
        %1761 = vmatprep.mubr.f32.mxu0 0.0
        %1762 = vmatmul.mubr.f32.gmra.mxu0 %v1695
        %v1763 = vpop.f32.mrf.mxu0
        %v1764 = vadd.f32 0.0, %v1763
        %v1765 = vpop.f32.mrf.mxu0
        %1766 = vdwg.mxu0
        %v1768 = vsel %vm1003, %v1598, 0
        %1770 = vmatprep.subr.mxu0 0.0
        %1771 = vmatpush1.msra.mxu0 0.0
        %1772 = vmatprep.subr.mxu0 0.0
        %1773 = vmatpush1.msra.mxu0 0.0
        %1774 = vmatprep.subr.mxu0 0.0
        %1775 = vmatpush1.msra.mxu0 0.0
        %1776 = vmatprep.subr.mxu0 0.0
        %1777 = vmatpush1.msra.mxu0 0.0
        %1778 = vmatprep.subr.mxu0 0.0
        %1779 = vmatpush1.msra.mxu0 0.0
        %1780 = vmatprep.subr.mxu0 0.0
        %1781 = vmatpush1.msra.mxu0 0.0
        %1782 = vmatprep.subr.mxu0 0.0
        %1783 = vmatpush1.msra.mxu0 0.0
        %1784 = vmatprep.subr.mxu0 0.0
        %1785 = vmatpush1.msra.mxu0 0.0
        %1786 = vmatprep.subr.mxu0 0.0
        %1787 = vmatpush1.msra.mxu0 0.0
        %1788 = vmatprep.subr.mxu0 0.0
        %1789 = vmatpush1.msra.mxu0 0.0
        %1790 = vmatprep.subr.mxu0 0.0
        %1791 = vmatpush1.msra.mxu0 0.0
        %1792 = vmatprep.subr.mxu0 0.0
        %1793 = vmatpush1.msra.mxu0 0.0
        %1794 = vmatprep.subr.mxu0 0.0
        %1795 = vmatpush1.msra.mxu0 0.0
        %1796 = vmatprep.subr.mxu0 0.0
        %1797 = vmatpush1.msra.mxu0 0.0
        %1798 = vmatprep.subr.mxu0 0.0
        %1799 = vmatpush1.msra.mxu0 0.0
        %1800 = vmatprep.subr.mxu0 0.0
        %1801 = vmatpush1.msra.mxu0 %v1249
        %1802 = vmatprep.subr.mxu0 0.0
        %1803 = vmatpush2.msra.mxu0 0.0
        %1804 = vmatprep.subr.mxu0 0.0
        %1805 = vmatpush2.msra.mxu0 0.0
        %1806 = vmatprep.subr.mxu0 0.0
        %1807 = vmatpush2.msra.mxu0 0.0
        %1808 = vmatprep.subr.mxu0 0.0
        %1809 = vmatpush2.msra.mxu0 0.0
        %1810 = vmatprep.subr.mxu0 0.0
        %1811 = vmatpush2.msra.mxu0 0.0
        %1812 = vmatprep.subr.mxu0 0.0
        %1813 = vmatpush2.msra.mxu0 0.0
        %1814 = vmatprep.subr.mxu0 0.0
        %1815 = vmatpush2.msra.mxu0 0.0
        %1816 = vmatprep.subr.mxu0 0.0
        %1817 = vmatpush2.msra.mxu0 0.0
        %1818 = vmatprep.subr.mxu0 0.0
        %1819 = vmatpush2.msra.mxu0 0.0
        %1820 = vmatprep.subr.mxu0 0.0
        %1821 = vmatpush2.msra.mxu0 0.0
        %1822 = vmatprep.subr.mxu0 0.0
        %1823 = vmatpush2.msra.mxu0 0.0
        %1824 = vmatprep.subr.mxu0 0.0
        %1825 = vmatpush2.msra.mxu0 0.0
        %1826 = vmatprep.subr.mxu0 0.0
        %1827 = vmatpush2.msra.mxu0 0.0
        %1828 = vmatprep.subr.mxu0 0.0
        %1829 = vmatpush2.msra.mxu0 0.0
        %1830 = vmatprep.subr.mxu0 0.0
        %1831 = vmatpush2.msra.mxu0 0.0
        %1832 = vmatprep.subr.mxu0 0.0
        %1833 = vmatpush2.msra.mxu0 0.0
        %1834 = vmatprep.mubr.f32.mxu0 0.0
        %1835 = vmatmul.mubr.f32.gmra.mxu0 %v1768
        %v1836 = vpop.f32.mrf.mxu0
        %v1837 = vadd.f32 0.0, %v1836
        %v1838 = vpop.f32.mrf.mxu0
        %1839 = vdwg.mxu0
        %v1841 = vsel %vm1003, %v1600, 0
        %1843 = vmatprep.subr.mxu0 0.0
        %1844 = vmatpush1.msra.mxu0 0.0
        %1845 = vmatprep.subr.mxu0 0.0
        %1846 = vmatpush1.msra.mxu0 0.0
        %1847 = vmatprep.subr.mxu0 0.0
        %1848 = vmatpush1.msra.mxu0 0.0
        %1849 = vmatprep.subr.mxu0 0.0
        %1850 = vmatpush1.msra.mxu0 0.0
        %1851 = vmatprep.subr.mxu0 0.0
        %1852 = vmatpush1.msra.mxu0 0.0
        %1853 = vmatprep.subr.mxu0 0.0
        %1854 = vmatpush1.msra.mxu0 0.0
        %1855 = vmatprep.subr.mxu0 0.0
        %1856 = vmatpush1.msra.mxu0 0.0
        %1857 = vmatprep.subr.mxu0 0.0
        %1858 = vmatpush1.msra.mxu0 0.0
        %1859 = vmatprep.subr.mxu0 0.0
        %1860 = vmatpush1.msra.mxu0 0.0
        %1861 = vmatprep.subr.mxu0 0.0
        %1862 = vmatpush1.msra.mxu0 0.0
        %1863 = vmatprep.subr.mxu0 0.0
        %1864 = vmatpush1.msra.mxu0 0.0
        %1865 = vmatprep.subr.mxu0 0.0
        %1866 = vmatpush1.msra.mxu0 0.0
        %1867 = vmatprep.subr.mxu0 0.0
        %1868 = vmatpush1.msra.mxu0 0.0
        %1869 = vmatprep.subr.mxu0 0.0
        %1870 = vmatpush1.msra.mxu0 0.0
        %1871 = vmatprep.subr.mxu0 0.0
        %1872 = vmatpush1.msra.mxu0 0.0
        %1873 = vmatprep.subr.mxu0 0.0
        %1874 = vmatpush1.msra.mxu0 %v1250
        %1875 = vmatprep.subr.mxu0 0.0
        %1876 = vmatpush2.msra.mxu0 0.0
        %1877 = vmatprep.subr.mxu0 0.0
        %1878 = vmatpush2.msra.mxu0 0.0
        %1879 = vmatprep.subr.mxu0 0.0
        %1880 = vmatpush2.msra.mxu0 0.0
        %1881 = vmatprep.subr.mxu0 0.0
        %1882 = vmatpush2.msra.mxu0 0.0
        %1883 = vmatprep.subr.mxu0 0.0
        %1884 = vmatpush2.msra.mxu0 0.0
        %1885 = vmatprep.subr.mxu0 0.0
        %1886 = vmatpush2.msra.mxu0 0.0
        %1887 = vmatprep.subr.mxu0 0.0
        %1888 = vmatpush2.msra.mxu0 0.0
        %1889 = vmatprep.subr.mxu0 0.0
        %1890 = vmatpush2.msra.mxu0 0.0
        %1891 = vmatprep.subr.mxu0 0.0
        %1892 = vmatpush2.msra.mxu0 0.0
        %1893 = vmatprep.subr.mxu0 0.0
        %1894 = vmatpush2.msra.mxu0 0.0
        %1895 = vmatprep.subr.mxu0 0.0
        %1896 = vmatpush2.msra.mxu0 0.0
        %1897 = vmatprep.subr.mxu0 0.0
        %1898 = vmatpush2.msra.mxu0 0.0
        %1899 = vmatprep.subr.mxu0 0.0
        %1900 = vmatpush2.msra.mxu0 0.0
        %1901 = vmatprep.subr.mxu0 0.0
        %1902 = vmatpush2.msra.mxu0 0.0
        %1903 = vmatprep.subr.mxu0 0.0
        %1904 = vmatpush2.msra.mxu0 0.0
        %1905 = vmatprep.subr.mxu0 0.0
        %1906 = vmatpush2.msra.mxu0 0.0
        %1907 = vmatprep.mubr.f32.mxu0 0.0
        %1908 = vmatmul.mubr.f32.gmra.mxu0 %v1841
        %v1909 = vpop.f32.mrf.mxu0
        %v1910 = vadd.f32 0.0, %v1909
        %v1911 = vpop.f32.mrf.mxu0
        %1912 = vdwg.mxu0
        %v1913 = vadd.f32 %v1601, %v1691
        %v1914 = vadd.f32 %v1602, %v1764
        %v1915 = vadd.f32 %v1603, %v1837
        %v1916 = vadd.f32 %v1604, %v1910
        %v1917 = vrcp.pop %v1617
        %v1918 = vmul.f32 %v1913, %v1917
        %v1919 = vrcp.pop %v1618
        %v1920 = vmul.f32 %v1914, %v1919
        %v1921 = vrcp.pop %v1619
        %v1922 = vmul.f32 %v1915, %v1921
        %v1923 = vrcp.pop %v1620
        %v1924 = vmul.f32 %v1916, %v1923
        %v1925 = vld [vmem:[%s5] sm:$0xff]
        %s1926 = scalar_lea.vmem %s5, 8
        %v1927 = vld [vmem:[%s1926] sm:$0xff]
        %v1929 = vsel %vm1003, %v1920, 0
        %1931 = vmatprep.subr.mxu0 0.0
        %1932 = vmatpush1.msra.mxu0 0.0
        %1933 = vmatprep.subr.mxu0 0.0
        %1934 = vmatpush1.msra.mxu0 0.0
        %1935 = vmatprep.subr.mxu0 0.0
        %1936 = vmatpush1.msra.mxu0 0.0
        %1937 = vmatprep.subr.mxu0 0.0
        %1938 = vmatpush1.msra.mxu0 0.0
        %1939 = vmatprep.subr.mxu0 0.0
        %1940 = vmatpush1.msra.mxu0 0.0
        %1941 = vmatprep.subr.mxu0 0.0
        %1942 = vmatpush1.msra.mxu0 0.0
        %1943 = vmatprep.subr.mxu0 0.0
        %1944 = vmatpush1.msra.mxu0 0.0
        %1945 = vmatprep.subr.mxu0 0.0
        %1946 = vmatpush1.msra.mxu0 0.0
        %1947 = vmatprep.subr.mxu0 0.0
        %1948 = vmatpush1.msra.mxu0 0.0
        %1949 = vmatprep.subr.mxu0 0.0
        %1950 = vmatpush1.msra.mxu0 0.0
        %1951 = vmatprep.subr.mxu0 0.0
        %1952 = vmatpush1.msra.mxu0 0.0
        %1953 = vmatprep.subr.mxu0 0.0
        %1954 = vmatpush1.msra.mxu0 0.0
        %1955 = vmatprep.subr.mxu0 0.0
        %1956 = vmatpush1.msra.mxu0 0.0
        %1957 = vmatprep.subr.mxu0 0.0
        %1958 = vmatpush1.msra.mxu0 0.0
        %1959 = vmatprep.subr.mxu0 0.0
        %1960 = vmatpush1.msra.mxu0 0.0
        %1961 = vmatprep.subr.mxu0 0.0
        %1962 = vmatpush1.msra.mxu0 %v1927
        %1963 = vmatprep.subr.mxu0 0.0
        %1964 = vmatpush2.msra.mxu0 0.0
        %1965 = vmatprep.subr.mxu0 0.0
        %1966 = vmatpush2.msra.mxu0 0.0
        %1967 = vmatprep.subr.mxu0 0.0
        %1968 = vmatpush2.msra.mxu0 0.0
        %1969 = vmatprep.subr.mxu0 0.0
        %1970 = vmatpush2.msra.mxu0 0.0
        %1971 = vmatprep.subr.mxu0 0.0
        %1972 = vmatpush2.msra.mxu0 0.0
        %1973 = vmatprep.subr.mxu0 0.0
        %1974 = vmatpush2.msra.mxu0 0.0
        %1975 = vmatprep.subr.mxu0 0.0
        %1976 = vmatpush2.msra.mxu0 0.0
        %1977 = vmatprep.subr.mxu0 0.0
        %1978 = vmatpush2.msra.mxu0 0.0
        %1979 = vmatprep.subr.mxu0 0.0
        %1980 = vmatpush2.msra.mxu0 0.0
        %1981 = vmatprep.subr.mxu0 0.0
        %1982 = vmatpush2.msra.mxu0 0.0
        %1983 = vmatprep.subr.mxu0 0.0
        %1984 = vmatpush2.msra.mxu0 0.0
        %1985 = vmatprep.subr.mxu0 0.0
        %1986 = vmatpush2.msra.mxu0 0.0
        %1987 = vmatprep.subr.mxu0 0.0
        %1988 = vmatpush2.msra.mxu0 0.0
        %1989 = vmatprep.subr.mxu0 0.0
        %1990 = vmatpush2.msra.mxu0 0.0
        %1991 = vmatprep.subr.mxu0 0.0
        %1992 = vmatpush2.msra.mxu0 0.0
        %1993 = vmatprep.subr.mxu0 0.0
        %1994 = vmatpush2.msra.mxu0 0.0
        %1995 = vmatprep.mubr.f32.mxu0 0.0
        %1996 = vmatmul.mubr.f32.gmra.mxu0 %v1929
        %v1997 = vpop.f32.mrf.mxu0
        %v1998 = vadd.f32 0.0, %v1997
        %v1999 = vpop.f32.mrf.mxu0
        %2000 = vdwg.mxu0
        %v2002 = vsel %vm1003, %v1918, 0
        %2004 = vmatprep.subr.mxu0 0.0
        %2005 = vmatpush1.msra.mxu0 0.0
        %2006 = vmatprep.subr.mxu0 0.0
        %2007 = vmatpush1.msra.mxu0 0.0
        %2008 = vmatprep.subr.mxu0 0.0
        %2009 = vmatpush1.msra.mxu0 0.0
        %2010 = vmatprep.subr.mxu0 0.0
        %2011 = vmatpush1.msra.mxu0 0.0
        %2012 = vmatprep.subr.mxu0 0.0
        %2013 = vmatpush1.msra.mxu0 0.0
        %2014 = vmatprep.subr.mxu0 0.0
        %2015 = vmatpush1.msra.mxu0 0.0
        %2016 = vmatprep.subr.mxu0 0.0
        %2017 = vmatpush1.msra.mxu0 0.0
        %2018 = vmatprep.subr.mxu0 0.0
        %2019 = vmatpush1.msra.mxu0 0.0
        %2020 = vmatprep.subr.mxu0 0.0
        %2021 = vmatpush1.msra.mxu0 0.0
        %2022 = vmatprep.subr.mxu0 0.0
        %2023 = vmatpush1.msra.mxu0 0.0
        %2024 = vmatprep.subr.mxu0 0.0
        %2025 = vmatpush1.msra.mxu0 0.0
        %2026 = vmatprep.subr.mxu0 0.0
        %2027 = vmatpush1.msra.mxu0 0.0
        %2028 = vmatprep.subr.mxu0 0.0
        %2029 = vmatpush1.msra.mxu0 0.0
        %2030 = vmatprep.subr.mxu0 0.0
        %2031 = vmatpush1.msra.mxu0 0.0
        %2032 = vmatprep.subr.mxu0 0.0
        %2033 = vmatpush1.msra.mxu0 0.0
        %2034 = vmatprep.subr.mxu0 0.0
        %2035 = vmatpush1.msra.mxu0 %v1925
        %2036 = vmatprep.subr.mxu0 0.0
        %2037 = vmatpush2.msra.mxu0 0.0
        %2038 = vmatprep.subr.mxu0 0.0
        %2039 = vmatpush2.msra.mxu0 0.0
        %2040 = vmatprep.subr.mxu0 0.0
        %2041 = vmatpush2.msra.mxu0 0.0
        %2042 = vmatprep.subr.mxu0 0.0
        %2043 = vmatpush2.msra.mxu0 0.0
        %2044 = vmatprep.subr.mxu0 0.0
        %2045 = vmatpush2.msra.mxu0 0.0
        %2046 = vmatprep.subr.mxu0 0.0
        %2047 = vmatpush2.msra.mxu0 0.0
        %2048 = vmatprep.subr.mxu0 0.0
        %2049 = vmatpush2.msra.mxu0 0.0
        %2050 = vmatprep.subr.mxu0 0.0
        %2051 = vmatpush2.msra.mxu0 0.0
        %2052 = vmatprep.subr.mxu0 0.0
        %2053 = vmatpush2.msra.mxu0 0.0
        %2054 = vmatprep.subr.mxu0 0.0
        %2055 = vmatpush2.msra.mxu0 0.0
        %2056 = vmatprep.subr.mxu0 0.0
        %2057 = vmatpush2.msra.mxu0 0.0
        %2058 = vmatprep.subr.mxu0 0.0
        %2059 = vmatpush2.msra.mxu0 0.0
        %2060 = vmatprep.subr.mxu0 0.0
        %2061 = vmatpush2.msra.mxu0 0.0
        %2062 = vmatprep.subr.mxu0 0.0
        %2063 = vmatpush2.msra.mxu0 0.0
        %2064 = vmatprep.subr.mxu0 0.0
        %2065 = vmatpush2.msra.mxu0 0.0
        %2066 = vmatprep.subr.mxu0 0.0
        %2067 = vmatpush2.msra.mxu0 0.0
        %2068 = vmatprep.mubr.f32.mxu0 0.0
        %2069 = vmatmul.mubr.f32.gmra.mxu0 %v2002
        %v2070 = vpop.f32.mrf.mxu0
        %v2071 = vadd.f32 %v1998, %v2070
        %v2072 = vpop.f32.mrf.mxu0
        %2073 = vdwg.mxu0
        %s2074 = scalar_lea.vmem %s5, 16
        %v2075 = vld [vmem:[%s2074] sm:$0xff]
        %v2077 = vsel %vm1003, %v1922, 0
        %2079 = vmatprep.subr.mxu0 0.0
        %2080 = vmatpush1.msra.mxu0 0.0
        %2081 = vmatprep.subr.mxu0 0.0
        %2082 = vmatpush1.msra.mxu0 0.0
        %2083 = vmatprep.subr.mxu0 0.0
        %2084 = vmatpush1.msra.mxu0 0.0
        %2085 = vmatprep.subr.mxu0 0.0
        %2086 = vmatpush1.msra.mxu0 0.0
        %2087 = vmatprep.subr.mxu0 0.0
        %2088 = vmatpush1.msra.mxu0 0.0
        %2089 = vmatprep.subr.mxu0 0.0
        %2090 = vmatpush1.msra.mxu0 0.0
        %2091 = vmatprep.subr.mxu0 0.0
        %2092 = vmatpush1.msra.mxu0 0.0
        %2093 = vmatprep.subr.mxu0 0.0
        %2094 = vmatpush1.msra.mxu0 0.0
        %2095 = vmatprep.subr.mxu0 0.0
        %2096 = vmatpush1.msra.mxu0 0.0
        %2097 = vmatprep.subr.mxu0 0.0
        %2098 = vmatpush1.msra.mxu0 0.0
        %2099 = vmatprep.subr.mxu0 0.0
        %2100 = vmatpush1.msra.mxu0 0.0
        %2101 = vmatprep.subr.mxu0 0.0
        %2102 = vmatpush1.msra.mxu0 0.0
        %2103 = vmatprep.subr.mxu0 0.0
        %2104 = vmatpush1.msra.mxu0 0.0
        %2105 = vmatprep.subr.mxu0 0.0
        %2106 = vmatpush1.msra.mxu0 0.0
        %2107 = vmatprep.subr.mxu0 0.0
        %2108 = vmatpush1.msra.mxu0 0.0
        %2109 = vmatprep.subr.mxu0 0.0
        %2110 = vmatpush1.msra.mxu0 %v2075
        %2111 = vmatprep.subr.mxu0 0.0
        %2112 = vmatpush2.msra.mxu0 0.0
        %2113 = vmatprep.subr.mxu0 0.0
        %2114 = vmatpush2.msra.mxu0 0.0
        %2115 = vmatprep.subr.mxu0 0.0
        %2116 = vmatpush2.msra.mxu0 0.0
        %2117 = vmatprep.subr.mxu0 0.0
        %2118 = vmatpush2.msra.mxu0 0.0
        %2119 = vmatprep.subr.mxu0 0.0
        %2120 = vmatpush2.msra.mxu0 0.0
        %2121 = vmatprep.subr.mxu0 0.0
        %2122 = vmatpush2.msra.mxu0 0.0
        %2123 = vmatprep.subr.mxu0 0.0
        %2124 = vmatpush2.msra.mxu0 0.0
        %2125 = vmatprep.subr.mxu0 0.0
        %2126 = vmatpush2.msra.mxu0 0.0
        %2127 = vmatprep.subr.mxu0 0.0
        %2128 = vmatpush2.msra.mxu0 0.0
        %2129 = vmatprep.subr.mxu0 0.0
        %2130 = vmatpush2.msra.mxu0 0.0
        %2131 = vmatprep.subr.mxu0 0.0
        %2132 = vmatpush2.msra.mxu0 0.0
        %2133 = vmatprep.subr.mxu0 0.0
        %2134 = vmatpush2.msra.mxu0 0.0
        %2135 = vmatprep.subr.mxu0 0.0
        %2136 = vmatpush2.msra.mxu0 0.0
        %2137 = vmatprep.subr.mxu0 0.0
        %2138 = vmatpush2.msra.mxu0 0.0
        %2139 = vmatprep.subr.mxu0 0.0
        %2140 = vmatpush2.msra.mxu0 0.0
        %2141 = vmatprep.subr.mxu0 0.0
        %2142 = vmatpush2.msra.mxu0 0.0
        %2143 = vmatprep.mubr.f32.mxu0 0.0
        %2144 = vmatmul.mubr.f32.gmra.mxu0 %v2077
        %v2145 = vpop.f32.mrf.mxu0
        %v2146 = vadd.f32 0.0, %v2145
        %v2147 = vpop.f32.mrf.mxu0
        %2148 = vdwg.mxu0
        %v2149 = vadd.f32 %v2071, %v2146
        %s2150 = scalar_lea.vmem %s5, 24
        %v2151 = vld [vmem:[%s2150] sm:$0xff]
        %v2153 = vsel %vm1003, %v1924, 0
        %2155 = vmatprep.subr.mxu0 0.0
        %2156 = vmatpush1.msra.mxu0 0.0
        %2157 = vmatprep.subr.mxu0 0.0
        %2158 = vmatpush1.msra.mxu0 0.0
        %2159 = vmatprep.subr.mxu0 0.0
        %2160 = vmatpush1.msra.mxu0 0.0
        %2161 = vmatprep.subr.mxu0 0.0
        %2162 = vmatpush1.msra.mxu0 0.0
        %2163 = vmatprep.subr.mxu0 0.0
        %2164 = vmatpush1.msra.mxu0 0.0
        %2165 = vmatprep.subr.mxu0 0.0
        %2166 = vmatpush1.msra.mxu0 0.0
        %2167 = vmatprep.subr.mxu0 0.0
        %2168 = vmatpush1.msra.mxu0 0.0
        %2169 = vmatprep.subr.mxu0 0.0
        %2170 = vmatpush1.msra.mxu0 0.0
        %2171 = vmatprep.subr.mxu0 0.0
        %2172 = vmatpush1.msra.mxu0 0.0
        %2173 = vmatprep.subr.mxu0 0.0
        %2174 = vmatpush1.msra.mxu0 0.0
        %2175 = vmatprep.subr.mxu0 0.0
        %2176 = vmatpush1.msra.mxu0 0.0
        %2177 = vmatprep.subr.mxu0 0.0
        %2178 = vmatpush1.msra.mxu0 0.0
        %2179 = vmatprep.subr.mxu0 0.0
        %2180 = vmatpush1.msra.mxu0 0.0
        %2181 = vmatprep.subr.mxu0 0.0
        %2182 = vmatpush1.msra.mxu0 0.0
        %2183 = vmatprep.subr.mxu0 0.0
        %2184 = vmatpush1.msra.mxu0 0.0
        %2185 = vmatprep.subr.mxu0 0.0
        %2186 = vmatpush1.msra.mxu0 %v2151
        %2187 = vmatprep.subr.mxu0 0.0
        %2188 = vmatpush2.msra.mxu0 0.0
        %2189 = vmatprep.subr.mxu0 0.0
        %2190 = vmatpush2.msra.mxu0 0.0
        %2191 = vmatprep.subr.mxu0 0.0
        %2192 = vmatpush2.msra.mxu0 0.0
        %2193 = vmatprep.subr.mxu0 0.0
        %2194 = vmatpush2.msra.mxu0 0.0
        %2195 = vmatprep.subr.mxu0 0.0
        %2196 = vmatpush2.msra.mxu0 0.0
        %2197 = vmatprep.subr.mxu0 0.0
        %2198 = vmatpush2.msra.mxu0 0.0
        %2199 = vmatprep.subr.mxu0 0.0
        %2200 = vmatpush2.msra.mxu0 0.0
        %2201 = vmatprep.subr.mxu0 0.0
        %2202 = vmatpush2.msra.mxu0 0.0
        %2203 = vmatprep.subr.mxu0 0.0
        %2204 = vmatpush2.msra.mxu0 0.0
        %2205 = vmatprep.subr.mxu0 0.0
        %2206 = vmatpush2.msra.mxu0 0.0
        %2207 = vmatprep.subr.mxu0 0.0
        %2208 = vmatpush2.msra.mxu0 0.0
        %2209 = vmatprep.subr.mxu0 0.0
        %2210 = vmatpush2.msra.mxu0 0.0
        %2211 = vmatprep.subr.mxu0 0.0
        %2212 = vmatpush2.msra.mxu0 0.0
        %2213 = vmatprep.subr.mxu0 0.0
        %2214 = vmatpush2.msra.mxu0 0.0
        %2215 = vmatprep.subr.mxu0 0.0
        %2216 = vmatpush2.msra.mxu0 0.0
        %2217 = vmatprep.subr.mxu0 0.0
        %2218 = vmatpush2.msra.mxu0 0.0
        %2219 = vmatprep.mubr.f32.mxu0 0.0
        %2220 = vmatmul.mubr.f32.gmra.mxu0 %v2153
        %v2221 = vpop.f32.mrf.mxu0
        %v2222 = vadd.f32 0.0, %v2221
        %v2223 = vpop.f32.mrf.mxu0
        %2224 = vdwg.mxu0
        %v2225 = vadd.f32 %v2149, %v2222
        %v2226 = vld [vmem:[%s6] sm:$0x1]
        %v2228 = vlaneseq
        %v2229 = vshrl.u32 %v2228, 7
        %v2230 = vsub.s32 0, %v2229
        %v2231 = vrot.slane %v2226, %v2230
        %v2233 = vadd.f32 %v2225, %v2231
        %2234 = vst.msk [vmem:[%s294] sm:$0xff] %vm929, %v2233
        %s2235 = sand.u32 %s200, 1
        %s2236 = scalar_lea.sflag [#allocation6], %s2235
        %s2237 = sand.u32 %s200, 1
        %s2238 = smul.addr %s2237, 8
        %s2239 = scalar_lea.vmem [#allocation5], %s2238
        // Predicated region
        $region53: #{tpu_custom_call.1} parent=47 // pred_check
          %p2240 = pneg %p210
        $region54: #{tpu_custom_call.1} parent=47 // pred_check_branch
          %2242 = sbr.rel (%p2240) target = $region56
        $region55: #{tpu_custom_call.1} parent=47 // pred_region
          %s2244 = ssub.s32 128, 128
          %2245 = vsyncadd %s2236, %s2244
          %s2246 = sadd.s32 %s26, %s25
          %s2247 = smul.addr %s2246, 128
          %s2248 = scalar_lea.hbm %s7, %s2247
          %s2250 = sshll.u32 %s2239, 4
          %s2251 = int_to_ptr.vmem [resolvable:$true] %s2250
          %2253 = dma.vmem_to_hbm [thread:$0]  %s2251, 128, %s2248, %s2236
        $region56: #{tpu_custom_call.1} parent=47 // pred_fallthru
          _
      $region48: #{tpu_custom_call.1} parent=5 // pred_fallthru
        _
      %p2254 = scmp.le.s32.totalorder 2, %s16
      // Predicated region
      $region57: #{tpu_custom_call.1} parent=5 // pred_check
        %p2255 = pneg %p2254
      $region58: #{tpu_custom_call.1} parent=5 // pred_check_branch
        %2257 = sbr.rel (%p2255) target = $region60
      $region59: #{tpu_custom_call.1} parent=5 // pred_region
        %s2258 = ssub.s32 %s16, 2
        // Predicated region
        $region61: #{tpu_custom_call.1} parent=59 // pred_check
          %p2259 = pneg %p216
        $region62: #{tpu_custom_call.1} parent=59 // pred_check_branch
          %2261 = sbr.rel (%p2259) target = $region64
        $region63: #{tpu_custom_call.1} parent=59 // pred_region
          %s2262 = sand.u32 %s201, 1
          %s2263 = scalar_lea.sflag [#allocation6], %s2262
          %s2264 = sand.u32 %s201, 1
          %s2265 = smul.addr %s2264, 8
          %s2266 = scalar_lea.vmem [#allocation5], %s2265
          %2267 = dma.done %s2263, 128
        $region64: #{tpu_custom_call.1} parent=59 // pred_fallthru
          _
      $region60: #{tpu_custom_call.1} parent=5 // pred_fallthru
        _
    $region6: #{tpu_custom_call.1} parent=1 // loop_footer
      %s20 = sadd.s32 1, %s16
    $region7: #{tpu_custom_call.1} parent=1 // loop_footer_branch
      %15 = sbr.rel target = $region3
    $region8: #{tpu_custom_call.1} parent=1 // loop_exit
      _
    %2268 = vsyncpa [#allocation6], 1
    %s2269 = scalar_lea.sflag [#allocation6], 1
    %2270 = vsyncpa %s2269, 1

</llo_original>
